<compile_context>
chip_gen: v7x
topology: tpu7x:2x2x1
jax: 0.10.0
libtpu: 0.0.40
codegen_flags: <defaults>
</compile_context>

<pallas_src>
import jax
import jax.numpy as jnp
from jax.experimental import pallas as pl
from jax.experimental.pallas import tpu as pltpu

EPS = 1e-5  # nn.InstanceNorm2d default eps


# ----------------------------------------------------------------------------
# Fused conv-as-matmul + InstanceNorm (+ ReLU | + residual) kernels
# ----------------------------------------------------------------------------
def _instance_norm(y, inv_hw):
    # y: (HW, TN) f32 -- per-channel stats over all spatial positions of ONE sample.
    # Single-pass: mean and E[y^2], var = E[y^2] - mean^2 (clamped), scale by 1/HW.
    mean = jnp.sum(y, axis=0, keepdims=True) * inv_hw
    mean_sq = jnp.sum(y * y, axis=0, keepdims=True) * inv_hw
    var = jnp.maximum(mean_sq - mean * mean, 0.0)
    return (y - mean) * jax.lax.rsqrt(var + EPS)


def _conv_in_relu_kernel(x_ref, w_ref, o_ref):
    # x_ref: (1, HW, K) bf16 im2col rows of one sample;  w_ref: (K, TN) bf16
    y = jnp.dot(x_ref[0], w_ref[...], preferred_element_type=jnp.float32)
    y = _instance_norm(y, 1.0 / y.shape[0])
    o_ref[0] = jnp.maximum(y, 0.0).astype(o_ref.dtype)


def _conv_in_res_kernel(x_ref, w_ref, r_ref, o_ref):
    # r_ref: (1, HW, TN) f32 residual (the original block input x)
    y = jnp.dot(x_ref[0], w_ref[...], preferred_element_type=jnp.float32)
    y = _instance_norm(y, 1.0 / y.shape[0])
    o_ref[0] = (y + r_ref[0].astype(jnp.float32)).astype(o_ref.dtype)


# ----------------------------------------------------------------------------
# Glue: reflection pad + im2col, weight reshape, pallas_call wrapper
# ----------------------------------------------------------------------------
def _pick_tn(cout):
    if cout % 256 == 0:
        return 256
    if cout % 128 == 0:
        return 128
    return cout  # full-dim block is always legal


def _im2col_3x3_reflect(x_nhwc, dtype):
    # ReflectionPad2d(1) + 3x3 patch extraction -> (N, H*W, 9*C) in `dtype` (bf16).
    # TODO(synk): for large H*W, replace this HBM-materialized 9x expansion with a
    # tap-axis grid reduction (grid=(N, Cout//tn, 9) + accumulator + pl.when finalize).
    N, H, W, C = x_nhwc.shape
    xp = jnp.pad(x_nhwc, ((0, 0), (1, 1), (1, 1), (0, 0)), mode="reflect")
    xp = xp.astype(dtype)
    patches = jnp.concatenate(
        [xp[:, kh:kh + H, kw:kw + W, :] for kh in range(3) for kw in range(3)],
        axis=-1,
    )  # feature index = (kh*3+kw)*C + c  (matches the weight reshape below)
    return patches.reshape(N, H * W, 9 * C)


def conv3x3_in_fused(x_nhwc, w, *, residual=None, out_dtype=jnp.float32):
    """ReflectionPad(1) + Conv2d(C,C,3) (bias dropped, see header) + InstanceNorm2d,
    fused with a ReLU epilogue (residual is None) or a residual-add epilogue."""
    N, H, W, Cin = x_nhwc.shape
    Cout = w.shape[0]
    HW, K = H * W, 9 * Cin
    tn = _pick_tn(Cout)

    x2d = _im2col_3x3_reflect(x_nhwc, jnp.bfloat16)                         # (N, HW, K)
    w_mat = jnp.transpose(w, (2, 3, 1, 0)).reshape(K, Cout).astype(jnp.bfloat16)

    in_specs = [
        pl.BlockSpec((1, HW, K), lambda n, j: (n, 0, 0)),   # im2col rows of sample n
        pl.BlockSpec((K, tn), lambda n, j: (0, j)),         # weight column tile
    ]
    args = [x2d, w_mat]
    if residual is None:
        kernel = _conv_in_relu_kernel
    else:
        kernel = _conv_in_res_kernel
        in_specs.append(pl.BlockSpec((1, HW, tn), lambda n, j: (n, 0, j)))
        args.append(residual.reshape(N, HW, Cout).astype(jnp.float32))

    out = pl.pallas_call(
        kernel,
        out_shape=jax.ShapeDtypeStruct((N, HW, Cout), out_dtype),
        grid_spec=pltpu.PrefetchScalarGridSpec(
            num_scalar_prefetch=0,
            grid=(N, Cout // tn),
            in_specs=in_specs,
            out_specs=pl.BlockSpec((1, HW, tn), lambda n, j: (n, 0, j)),
        ),
        compiler_params=pltpu.CompilerParams(
            # No reduction axis (IN stats live entirely inside one block):
            # both axes parallel so the batch axis can split across v7x TCs.
            dimension_semantics=("parallel", "parallel"),
            vmem_limit_bytes=48 * 1024 * 1024,
        ),
    )(*args)
    return out.reshape(N, H, W, Cout)


# ----------------------------------------------------------------------------
# Parameters (deterministic, PyTorch Conv2d-default-style init)
# ----------------------------------------------------------------------------
def init_params(key, in_features):
    # Conv biases are intentionally NOT created: InstanceNorm2d right after each
    # conv cancels any per-channel constant, so the bias has zero effect on the
    # output (exact forward-pass equivalence, less DMA + VPU work).
    fan_in = in_features * 9
    bound = 1.0 / float(fan_in) ** 0.5
    params = []
    for _ in range(2):
        key, k1 = jax.random.split(key)
        w = jax.random.uniform(
            k1, (in_features, in_features, 3, 3), jnp.float32, -bound, bound
        )
        params.append(w)
    return tuple(params)


# ----------------------------------------------------------------------------
# Full forward pass:  out = x + conv_block(x)
# ----------------------------------------------------------------------------
def residual_block(x_nchw, params):
    w1, w2 = params
    x = jnp.transpose(x_nchw, (0, 2, 3, 1)).astype(jnp.float32)     # NHWC internal
    # Layer-1 output feeds a bf16 matmul next, so store it directly as bf16
    # (bit-identical to f32-store-then-cast); the final result stays f32.
    h = conv3x3_in_fused(x, w1, out_dtype=jnp.bfloat16)             # conv + IN + ReLU
    y = conv3x3_in_fused(h, w2, residual=x, out_dtype=jnp.float32)  # conv + IN + skip
    return jnp.transpose(y, (0, 3, 1, 2))                           # back to NCHW


if __name__ == "__main__":
    key = jax.random.PRNGKey(0)
    kx, kp = jax.random.split(key)
    N, C, H, W = 2, 128, 16, 16     # small shapes; C=128 is a typical in_features
    x = jax.random.normal(kx, (N, C, H, W), jnp.float32)
    params = init_params(kp, C)

    out = jax.jit(residual_block)(x, params)
    out = jax.block_until_ready(out)

    assert out.shape == (N, C, H, W), out.shape
    assert bool(jnp.all(jnp.isfinite(out)))
    print("KERNEL_OK")
</pallas_src>

<mosaic_0001>
module attributes {stable_mosaic.version = 11 : i64} {
  func.func @_conv_in_relu_kernel(%arg0: i32, %arg1: i32, %arg2: memref<1x256x1152xbf16, #tpu.memory_space<vmem>>, %arg3: memref<1152x128xbf16, #tpu.memory_space<vmem>>, %arg4: memref<1x256x128xbf16, #tpu.memory_space<vmem>>) attributes {dimension_semantics = [#tpu.dimension_semantics<parallel>, #tpu.dimension_semantics<parallel>], iteration_bounds = array<i64: 2, 1>, scalar_prefetch = 0 : i64, scratch_operands = 0 : i64, tpu.core_type = #tpu.core_type<tc>, window_params = [{transform_indices = @transform_0, window_bounds = array<i64: 1, 256, 1152>}, {transform_indices = @transform_1, window_bounds = array<i64: 1152, 128>}, {transform_indices = @transform_2, window_bounds = array<i64: 1, 256, 128>}]} {
    %c0 = arith.constant 0 : index
    %c0_0 = arith.constant 0 : index
    %c0_1 = arith.constant 0 : index
    %0 = vector.load %arg2[%c0, %c0_0, %c0_1] : memref<1x256x1152xbf16, #tpu.memory_space<vmem>>, vector<1x256x1152xbf16>
    %1 = vector.shape_cast %0 : vector<1x256x1152xbf16> to vector<256x1152xbf16>
    %c0_2 = arith.constant 0 : index
    %c0_3 = arith.constant 0 : index
    %2 = vector.load %arg3[%c0_2, %c0_3] : memref<1152x128xbf16, #tpu.memory_space<vmem>>, vector<1152x128xbf16>
    %cst = arith.constant dense<0.000000e+00> : vector<256x128xf32>
    %3 = tpu.matmul %1, %2, %cst {dimension_numbers = #tpu.dot_dimension_numbers<[1], [0], [0], [1], [0, 0, 1, 1], [], []>} : vector<256x1152xbf16>, vector<1152x128xbf16>, vector<256x128xf32> -> vector<256x128xf32>
    %cst_4 = arith.constant dense<0.000000e+00> : vector<128xf32>
    %4 = vector.multi_reduction <add>, %3, %cst_4 [0] : vector<256x128xf32> to vector<128xf32>
    %5 = vector.shape_cast %4 : vector<128xf32> to vector<1x128xf32>
    %cst_5 = arith.constant 3.906250e-03 : f32
    %6 = vector.broadcast %cst_5 : f32 to vector<1x128xf32>
    %7 = arith.mulf %5, %6 : vector<1x128xf32>
    %8 = arith.mulf %3, %3 : vector<256x128xf32>
    %cst_6 = arith.constant dense<0.000000e+00> : vector<128xf32>
    %9 = vector.multi_reduction <add>, %8, %cst_6 [0] : vector<256x128xf32> to vector<128xf32>
    %10 = vector.shape_cast %9 : vector<128xf32> to vector<1x128xf32>
    %cst_7 = arith.constant 3.906250e-03 : f32
    %11 = vector.broadcast %cst_7 : f32 to vector<1x128xf32>
    %12 = arith.mulf %10, %11 : vector<1x128xf32>
    %13 = arith.mulf %7, %7 : vector<1x128xf32>
    %14 = arith.subf %12, %13 : vector<1x128xf32>
    %cst_8 = arith.constant 0.000000e+00 : f32
    %15 = vector.broadcast %cst_8 : f32 to vector<1x128xf32>
    %16 = arith.maximumf %14, %15 : vector<1x128xf32>
    %17 = vector.broadcast %7 : vector<1x128xf32> to vector<256x128xf32>
    %18 = arith.subf %3, %17 : vector<256x128xf32>
    %cst_9 = arith.constant 9.99999974E-6 : f32
    %19 = vector.broadcast %cst_9 : f32 to vector<1x128xf32>
    %20 = arith.addf %16, %19 : vector<1x128xf32>
    %21 = math.rsqrt %20 : vector<1x128xf32>
    %22 = vector.broadcast %21 : vector<1x128xf32> to vector<256x128xf32>
    %23 = arith.mulf %18, %22 : vector<256x128xf32>
    %cst_10 = arith.constant 0.000000e+00 : f32
    %24 = vector.broadcast %cst_10 : f32 to vector<256x128xf32>
    %25 = arith.maximumf %23, %24 : vector<256x128xf32>
    %26 = arith.truncf %25 : vector<256x128xf32> to vector<256x128xbf16>
    %c0_11 = arith.constant 0 : index
    %c0_12 = arith.constant 0 : index
    %c0_13 = arith.constant 0 : index
    %27 = vector.load %arg4[%c0_11, %c0_12, %c0_13] : memref<1x256x128xbf16, #tpu.memory_space<vmem>>, vector<1x256x128xbf16>
    %28 = vector.shape_cast %27 : vector<1x256x128xbf16> to vector<256x128xbf16>
    %29 = vector.shape_cast %26 : vector<256x128xbf16> to vector<1x256x128xbf16>
    tpu.vector_store %arg4[%c0_11, %c0_12, %c0_13], %29 {strides = array<i32>} : memref<1x256x128xbf16, #tpu.memory_space<vmem>>, vector<1x256x128xbf16>,
    return
  }
  func.func @transform_0(%arg0: i32, %arg1: i32) -> (i32, i32, i32) {
    %c0_i32 = arith.constant 0 : i32
    %c0_i32_0 = arith.constant 0 : i32
    %c0_i32_1 = arith.constant 0 : i32
    return %arg0, %c0_i32, %c0_i32_0 : i32, i32, i32
  }
  func.func @transform_1(%arg0: i32, %arg1: i32) -> (i32, i32) {
    %c0_i32 = arith.constant 0 : i32
    %c0_i32_0 = arith.constant 0 : i32
    return %c0_i32, %arg1 : i32, i32
  }
  func.func @transform_2(%arg0: i32, %arg1: i32) -> (i32, i32, i32) {
    %c0_i32 = arith.constant 0 : i32
    %c0_i32_0 = arith.constant 0 : i32
    return %arg0, %c0_i32, %arg1 : i32, i32, i32
  }
}

module attributes {stable_mosaic.version = 11 : i64} {
  func.func @_conv_in_res_kernel(%arg0: i32, %arg1: i32, %arg2: memref<1x256x1152xbf16, #tpu.memory_space<vmem>>, %arg3: memref<1152x128xbf16, #tpu.memory_space<vmem>>, %arg4: memref<1x256x128xf32, #tpu.memory_space<vmem>>, %arg5: memref<1x256x128xf32, #tpu.memory_space<vmem>>) attributes {dimension_semantics = [#tpu.dimension_semantics<parallel>, #tpu.dimension_semantics<parallel>], iteration_bounds = array<i64: 2, 1>, scalar_prefetch = 0 : i64, scratch_operands = 0 : i64, tpu.core_type = #tpu.core_type<tc>, window_params = [{transform_indices = @transform_0, window_bounds = array<i64: 1, 256, 1152>}, {transform_indices = @transform_1, window_bounds = array<i64: 1152, 128>}, {transform_indices = @transform_2, window_bounds = array<i64: 1, 256, 128>}, {transform_indices = @transform_3, window_bounds = array<i64: 1, 256, 128>}]} {
    %c0 = arith.constant 0 : index
    %c0_0 = arith.constant 0 : index
    %c0_1 = arith.constant 0 : index
    %0 = vector.load %arg2[%c0, %c0_0, %c0_1] : memref<1x256x1152xbf16, #tpu.memory_space<vmem>>, vector<1x256x1152xbf16>
    %1 = vector.shape_cast %0 : vector<1x256x1152xbf16> to vector<256x1152xbf16>
    %c0_2 = arith.constant 0 : index
    %c0_3 = arith.constant 0 : index
    %2 = vector.load %arg3[%c0_2, %c0_3] : memref<1152x128xbf16, #tpu.memory_space<vmem>>, vector<1152x128xbf16>
    %cst = arith.constant dense<0.000000e+00> : vector<256x128xf32>
    %3 = tpu.matmul %1, %2, %cst {dimension_numbers = #tpu.dot_dimension_numbers<[1], [0], [0], [1], [0, 0, 1, 1], [], []>} : vector<256x1152xbf16>, vector<1152x128xbf16>, vector<256x128xf32> -> vector<256x128xf32>
    %cst_4 = arith.constant dense<0.000000e+00> : vector<128xf32>
    %4 = vector.multi_reduction <add>, %3, %cst_4 [0] : vector<256x128xf32> to vector<128xf32>
    %5 = vector.shape_cast %4 : vector<128xf32> to vector<1x128xf32>
    %cst_5 = arith.constant 3.906250e-03 : f32
    %6 = vector.broadcast %cst_5 : f32 to vector<1x128xf32>
    %7 = arith.mulf %5, %6 : vector<1x128xf32>
    %8 = arith.mulf %3, %3 : vector<256x128xf32>
    %cst_6 = arith.constant dense<0.000000e+00> : vector<128xf32>
    %9 = vector.multi_reduction <add>, %8, %cst_6 [0] : vector<256x128xf32> to vector<128xf32>
    %10 = vector.shape_cast %9 : vector<128xf32> to vector<1x128xf32>
    %cst_7 = arith.constant 3.906250e-03 : f32
    %11 = vector.broadcast %cst_7 : f32 to vector<1x128xf32>
    %12 = arith.mulf %10, %11 : vector<1x128xf32>
    %13 = arith.mulf %7, %7 : vector<1x128xf32>
    %14 = arith.subf %12, %13 : vector<1x128xf32>
    %cst_8 = arith.constant 0.000000e+00 : f32
    %15 = vector.broadcast %cst_8 : f32 to vector<1x128xf32>
    %16 = arith.maximumf %14, %15 : vector<1x128xf32>
    %17 = vector.broadcast %7 : vector<1x128xf32> to vector<256x128xf32>
    %18 = arith.subf %3, %17 : vector<256x128xf32>
    %cst_9 = arith.constant 9.99999974E-6 : f32
    %19 = vector.broadcast %cst_9 : f32 to vector<1x128xf32>
    %20 = arith.addf %16, %19 : vector<1x128xf32>
    %21 = math.rsqrt %20 : vector<1x128xf32>
    %22 = vector.broadcast %21 : vector<1x128xf32> to vector<256x128xf32>
    %23 = arith.mulf %18, %22 : vector<256x128xf32>
    %c0_10 = arith.constant 0 : index
    %c0_11 = arith.constant 0 : index
    %c0_12 = arith.constant 0 : index
    %24 = vector.load %arg4[%c0_10, %c0_11, %c0_12] : memref<1x256x128xf32, #tpu.memory_space<vmem>>, vector<1x256x128xf32>
    %25 = vector.shape_cast %24 : vector<1x256x128xf32> to vector<256x128xf32>
    %26 = arith.addf %23, %25 : vector<256x128xf32>
    %c0_13 = arith.constant 0 : index
    %c0_14 = arith.constant 0 : index
    %c0_15 = arith.constant 0 : index
    %27 = vector.load %arg5[%c0_13, %c0_14, %c0_15] : memref<1x256x128xf32, #tpu.memory_space<vmem>>, vector<1x256x128xf32>
    %28 = vector.shape_cast %27 : vector<1x256x128xf32> to vector<256x128xf32>
    %29 = vector.shape_cast %26 : vector<256x128xf32> to vector<1x256x128xf32>
    tpu.vector_store %arg5[%c0_13, %c0_14, %c0_15], %29 {strides = array<i32>} : memref<1x256x128xf32, #tpu.memory_space<vmem>>, vector<1x256x128xf32>,
    return
  }
  func.func @transform_0(%arg0: i32, %arg1: i32) -> (i32, i32, i32) {
    %c0_i32 = arith.constant 0 : i32
    %c0_i32_0 = arith.constant 0 : i32
    %c0_i32_1 = arith.constant 0 : i32
    return %arg0, %c0_i32, %c0_i32_0 : i32, i32, i32
  }
  func.func @transform_1(%arg0: i32, %arg1: i32) -> (i32, i32) {
    %c0_i32 = arith.constant 0 : i32
    %c0_i32_0 = arith.constant 0 : i32
    return %c0_i32, %arg1 : i32, i32
  }
  func.func @transform_2(%arg0: i32, %arg1: i32) -> (i32, i32, i32) {
    %c0_i32 = arith.constant 0 : i32
    %c0_i32_0 = arith.constant 0 : i32
    return %arg0, %c0_i32, %arg1 : i32, i32, i32
  }
  func.func @transform_3(%arg0: i32, %arg1: i32) -> (i32, i32, i32) {
    %c0_i32 = arith.constant 0 : i32
    %c0_i32_0 = arith.constant 0 : i32
    return %arg0, %c0_i32, %arg1 : i32, i32, i32
  }
}

</mosaic_0001>

<llo_original>
// kernel: residual_block.2
$region0: #{residual_block.2}
  #allocation0 [shape = 'u32[]', space=smem, size = 0x4, offset = 0x4, fixed_abs, tag = 'smem constant byte address 0x4 - core index']
  #allocation1 [shape = 'u32[144,128]{1,0:T(1,128)}', space=vmem, size = 0x12000, scoped, tag = 'internal scratch']
  %s0 = inlined_call_operand.vmem [shape: bf16[2,256,1152], index: 0, kind: input, shape index: {}]
  %s1 = inlined_call_operand.vmem [shape: bf16[1152,128], index: 1, kind: input, shape index: {}]
  %s2 = inlined_call_operand.vmem [shape: bf16[2,256,128], index: 2, kind: output, shape index: {}]
  %s3 = sld [smem:[#allocation0]]
  $region41: #{residual_block.2} parent=0
    _
  %s5 = ssub.s32 1, %s3
  %s6 = scalar_select 0, %s5, %s3
  loop: start=0, step=1, limit=4
  $region2: #{residual_block.2} parent=0 // loop_pre_header
    _
  $region3: #{residual_block.2} parent=0 // loop_header
    %s8 = sphi 0, %s12
    %p9 = scmp.ge.s32.totalorder %s8, 4
    %s15 = sphi 0, %s27
    %s16 = sphi 0, %s23
    %s17 = sphi 0, %s15
    %s18 = sphi 0, %s16
    %s19 = sphi 0, %s17
    %s20 = sphi 0, %s18
    %s30 = sphi 0, %s32
    %s33 = sphi 0, %s30
    %s34 = sphi 0, %s33
    %s50 = sphi 0, %s34
    %s56 = sphi 0, %s58
    %s59 = sphi 0, %s56
    %s60 = sphi 0, %s59
    %s76 = sphi 0, %s60
    %s84 = sphi 0, %s86
    %s87 = sphi 0, %s84
    %s88 = sphi 0, %s87
    %s104 = sphi 0, %s88
  $region4: #{residual_block.2} parent=0 // loop_header_branch
    %11 = sbr.rel (%p9) target = $region8
  $region5: #{residual_block.2} parent=0 // loop_body
    %s13 = ssub.s32 %s8, 1
    %s14 = ssub.s32 %s8, 2
    %s21 = sadd.s32 1, %s16
    %p22 = scmp.ge.s32.totalorder %s21, 1
    %s23 = scalar_select %p22, 0, %s21
    %s24 = sadd.s32 1, %s15
    %s25 = scalar_select %p22, %s24, %s15
    %p26 = scmp.ge.s32.totalorder %s25, 2
    %s27 = scalar_select %p26, 0, %s25
    %s28 = ssub.s32 %s15, %s27
    %p29 = scmp.eq.s32.totalorder %s28, 0
    %s31 = sadd.s32 %s30, 1
    %s32 = scalar_select %p29, %s30, %s31
    %p35 = pneg %p29
    %p36 = scmp.eq.s32.totalorder %s8, 1
    %p37 = por %p35, %p36
    %p38 = scmp.ne.s32.totalorder %s30, %s33
    %p39 = scmp.eq.s32.totalorder %s8, 0
    %p40 = por %p38, %p39
    %p41 = scmp.ne.s32.totalorder %s30, %s33
    %p42 = scmp.eq.s32.totalorder %s13, 1
    %p43 = por %p41, %p42
    %p44 = scmp.ne.s32.totalorder %s33, %s34
    %p45 = scmp.eq.s32.totalorder %s13, 0
    %p46 = por %p44, %p45
    %p47 = scmp.ne.s32.totalorder %s33, %s34
    %p48 = scmp.eq.s32.totalorder %s14, 1
    %p49 = por %p47, %p48
    %p51 = scmp.ne.s32.totalorder %s34, %s50
    %p52 = scmp.eq.s32.totalorder %s14, 0
    %p53 = por %p51, %p52
    %s54 = ssub.s32 %s16, %s23
    %p55 = scmp.eq.s32.totalorder %s54, 0
    %s57 = sadd.s32 %s56, 1
    %s58 = scalar_select %p55, %s56, %s57
    %p61 = pneg %p55
    %p62 = scmp.eq.s32.totalorder %s8, 1
    %p63 = por %p61, %p62
    %p64 = scmp.ne.s32.totalorder %s56, %s59
    %p65 = scmp.eq.s32.totalorder %s8, 0
    %p66 = por %p64, %p65
    %p67 = scmp.ne.s32.totalorder %s56, %s59
    %p68 = scmp.eq.s32.totalorder %s13, 1
    %p69 = por %p67, %p68
    %p70 = scmp.ne.s32.totalorder %s59, %s60
    %p71 = scmp.eq.s32.totalorder %s13, 0
    %p72 = por %p70, %p71
    %p73 = scmp.ne.s32.totalorder %s59, %s60
    %p74 = scmp.eq.s32.totalorder %s14, 1
    %p75 = por %p73, %p74
    %p77 = scmp.ne.s32.totalorder %s60, %s76
    %p78 = scmp.eq.s32.totalorder %s14, 0
    %p79 = por %p77, %p78
    %s80 = ssub.s32 %s15, %s27
    %s81 = ssub.s32 %s16, %s23
    %s82 = sor.u32 %s80, %s81
    %p83 = scmp.eq.s32.totalorder %s82, 0
    %s85 = sadd.s32 %s84, 1
    %s86 = scalar_select %p83, %s84, %s85
    %p89 = pneg %p83
    %p90 = scmp.eq.s32.totalorder %s8, 1
    %p91 = por %p89, %p90
    %p92 = scmp.ne.s32.totalorder %s84, %s87
    %p93 = scmp.eq.s32.totalorder %s8, 0
    %p94 = por %p92, %p93
    %p95 = scmp.ne.s32.totalorder %s84, %s87
    %p96 = scmp.eq.s32.totalorder %s13, 1
    %p97 = por %p95, %p96
    %p98 = scmp.ne.s32.totalorder %s87, %s88
    %p99 = scmp.eq.s32.totalorder %s13, 0
    %p100 = por %p98, %p99
    %p101 = scmp.ne.s32.totalorder %s87, %s88
    %p102 = scmp.eq.s32.totalorder %s14, 1
    %p103 = por %p101, %p102
    %p105 = scmp.ne.s32.totalorder %s88, %s104
    %p106 = scmp.eq.s32.totalorder %s14, 0
    %p107 = por %p105, %p106
    %p108 = scmp.le.s32.totalorder 1, %s8
    %p109 = scmp.lt.s32.totalorder %s8, 3
    %p110 = pnand %p108, %p109
    %p111 = pneg %p110
    // Predicated region
    $region9: #{residual_block.2} parent=5 // pred_check
      _
    $region10: #{residual_block.2} parent=5 // pred_check_branch
      %113 = sbr.rel (%p110) target = $region12
    $region11: #{residual_block.2} parent=5 // pred_region
      %s114 = ssub.s32 %s8, 1
      // Predicated region
      $region13: #{residual_block.2} parent=11 // pred_check
        %p115 = pneg %p72
      $region14: #{residual_block.2} parent=11 // pred_check_branch
        %117 = sbr.rel (%p115) target = $region16
      $region15: #{residual_block.2} parent=11 // pred_region
        %p118 = scmp.lt.s32.totalorder %s18, 0
        %s119 = scalar_select %p118, %s18, 0
        %s120 = smul.addr %s119, 4
        %s121 = scalar_lea.vmem %s1, %s120
      $region16: #{residual_block.2} parent=11 // pred_fallthru
        _
    $region12: #{residual_block.2} parent=5 // pred_fallthru
      _
    %p122 = scmp.lt.s32.totalorder %s8, 2
    // Predicated region
    $region17: #{residual_block.2} parent=5 // pred_check
      %p123 = pneg %p122
    $region18: #{residual_block.2} parent=5 // pred_check_branch
      %125 = sbr.rel (%p123) target = $region20
    $region19: #{residual_block.2} parent=5 // pred_region
      // Predicated region
      $region21: #{residual_block.2} parent=19 // pred_check
        %p126 = pneg %p40
      $region22: #{residual_block.2} parent=19 // pred_check_branch
        %128 = sbr.rel (%p126) target = $region24
      $region23: #{residual_block.2} parent=19 // pred_region
        %p129 = scmp.lt.s32.totalorder %s15, 1
        %s130 = scalar_select %p129, %s15, 1
        %s131 = smul.addr %s130, 288
        %s132 = smul.addr %s131, 4
        %s133 = scalar_lea.vmem %s0, %s132
      $region24: #{residual_block.2} parent=19 // pred_fallthru
        _
    $region20: #{residual_block.2} parent=5 // pred_fallthru
      _
    %p134 = scmp.le.s32.totalorder 1, %s8
    %p135 = scmp.lt.s32.totalorder %s8, 3
    %p136 = pnand %p134, %p135
    %p137 = pneg %p136
    // Predicated region
    $region25: #{residual_block.2} parent=5 // pred_check
      _
    $region26: #{residual_block.2} parent=5 // pred_check_branch
      %139 = sbr.rel (%p136) target = $region28
    $region27: #{residual_block.2} parent=5 // pred_region
      %s140 = ssub.s32 %s8, 1
      %p141 = scmp.lt.s32.totalorder %s17, 1
      %s142 = scalar_select %p141, %s17, 1
      %s143 = smul.addr %s142, 288
      %s144 = smul.addr %s143, 4
      %s145 = scalar_lea.vmem %s0, %s144
      %p146 = pneg %p46
      %p147 = pneg %p43
      %p148 = scmp.lt.s32.totalorder %s18, 0
      %s149 = scalar_select %p148, %s18, 0
      %s150 = smul.addr %s149, 4
      %s151 = scalar_lea.vmem %s1, %s150
      %p152 = pneg %p72
      %p153 = pneg %p69
      %p154 = pneg %p100
      %p155 = pneg %p97
      %p156 = scmp.lt.s32.totalorder %s17, 1
      %s157 = scalar_select %p156, %s17, 1
      %p158 = scmp.lt.s32.totalorder %s18, 0
      %s159 = scalar_select %p158, %s18, 0
      %s160 = smul.addr %s157, 32
      %s161 = sadd.s32 %s159, %s160
      %s162 = smul.addr %s161, 4
      %s163 = scalar_lea.vmem %s2, %s162
      %p164 = scmp.lt.s32.totalorder %s17, 1
      %s165 = scalar_select %p164, %s17, 1
      %s166 = smul.addr %s165, 288
      %s167 = smul.addr %s166, 4
      %s168 = scalar_lea.vmem %s0, %s167
      %p169 = scmp.lt.s32.totalorder %s18, 0
      %s170 = scalar_select %p169, %s18, 0
      %s171 = smul.addr %s170, 4
      %s172 = scalar_lea.vmem %s1, %s171
      %p173 = scmp.lt.s32.totalorder %s17, 1
      %s174 = scalar_select %p173, %s17, 1
      %p175 = scmp.lt.s32.totalorder %s18, 0
      %s176 = scalar_select %p175, %s18, 0
      %s177 = smul.addr %s174, 32
      %s178 = sadd.s32 %s176, %s177
      %s179 = smul.addr %s178, 4
      %s180 = scalar_lea.vmem %s2, %s179
      %v182 = vld [vmem:[%s168] sm:$0xff]
      %v183 = vld [vmem:[%s168 + $0x8] sm:$0xff]
      %v184 = vld [vmem:[%s168 + $0x10] sm:$0xff]
      %v185 = vld [vmem:[%s168 + $0x18] sm:$0xff]
      %v186 = vld [vmem:[%s168 + $0x20] sm:$0xf]
      %v187 = vld [vmem:[%s168 + $0x24] sm:$0xff]
      %v188 = vld [vmem:[%s168 + $0x2c] sm:$0xff]
      %v189 = vld [vmem:[%s168 + $0x34] sm:$0xff]
      %v190 = vld [vmem:[%s168 + $0x3c] sm:$0xff]
      %v191 = vld [vmem:[%s168 + $0x44] sm:$0xf]
      %v192 = vld [vmem:[%s168 + $0x48] sm:$0xff]
      %v193 = vld [vmem:[%s168 + $0x50] sm:$0xff]
      %v194 = vld [vmem:[%s168 + $0x58] sm:$0xff]
      %v195 = vld [vmem:[%s168 + $0x60] sm:$0xff]
      %v196 = vld [vmem:[%s168 + $0x68] sm:$0xf]
      %v197 = vld [vmem:[%s168 + $0x6c] sm:$0xff]
      %v198 = vld [vmem:[%s168 + $0x74] sm:$0xff]
      %v199 = vld [vmem:[%s168 + $0x7c] sm:$0xff]
      %v200 = vld [vmem:[%s168 + $0x84] sm:$0xff]
      %v201 = vld [vmem:[%s168 + $0x8c] sm:$0xf]
      %v202 = vld [vmem:[%s168 + $0x90] sm:$0xff]
      %v203 = vld [vmem:[%s168 + $0x98] sm:$0xff]
      %v204 = vld [vmem:[%s168 + $0xa0] sm:$0xff]
      %v205 = vld [vmem:[%s168 + $0xa8] sm:$0xff]
      %v206 = vld [vmem:[%s168 + $0xb0] sm:$0xf]
      %v207 = vld [vmem:[%s168 + $0xb4] sm:$0xff]
      %v208 = vld [vmem:[%s168 + $0xbc] sm:$0xff]
      %v209 = vld [vmem:[%s168 + $0xc4] sm:$0xff]
      %v210 = vld [vmem:[%s168 + $0xcc] sm:$0xff]
      %v211 = vld [vmem:[%s168 + $0xd4] sm:$0xf]
      %v212 = vld [vmem:[%s168 + $0xd8] sm:$0xff]
      %v213 = vld [vmem:[%s168 + $0xe0] sm:$0xff]
      %v214 = vld [vmem:[%s168 + $0xe8] sm:$0xff]
      %v215 = vld [vmem:[%s168 + $0xf0] sm:$0xff]
      %v216 = vld [vmem:[%s168 + $0xf8] sm:$0xf]
      %v217 = vld [vmem:[%s168 + $0xfc] sm:$0xff]
      %v218 = vld [vmem:[%s168 + $0x104] sm:$0xff]
      %v219 = vld [vmem:[%s168 + $0x10c] sm:$0xff]
      %v220 = vld [vmem:[%s168 + $0x114] sm:$0xff]
      %v221 = vld [vmem:[%s168 + $0x11c] sm:$0xf]
      %v222 = vld [vmem:[%s168 + $0x120] sm:$0xff]
      %v223 = vld [vmem:[%s168 + $0x128] sm:$0xff]
      %v224 = vld [vmem:[%s168 + $0x130] sm:$0xff]
      %v225 = vld [vmem:[%s168 + $0x138] sm:$0xff]
      %v226 = vld [vmem:[%s168 + $0x140] sm:$0xf]
      %v227 = vld [vmem:[%s168 + $0x144] sm:$0xff]
      %v228 = vld [vmem:[%s168 + $0x14c] sm:$0xff]
      %v229 = vld [vmem:[%s168 + $0x154] sm:$0xff]
      %v230 = vld [vmem:[%s168 + $0x15c] sm:$0xff]
      %v231 = vld [vmem:[%s168 + $0x164] sm:$0xf]
      %v232 = vld [vmem:[%s168 + $0x168] sm:$0xff]
      %v233 = vld [vmem:[%s168 + $0x170] sm:$0xff]
      %v234 = vld [vmem:[%s168 + $0x178] sm:$0xff]
      %v235 = vld [vmem:[%s168 + $0x180] sm:$0xff]
      %v236 = vld [vmem:[%s168 + $0x188] sm:$0xf]
      %v237 = vld [vmem:[%s168 + $0x18c] sm:$0xff]
      %v238 = vld [vmem:[%s168 + $0x194] sm:$0xff]
      %v239 = vld [vmem:[%s168 + $0x19c] sm:$0xff]
      %v240 = vld [vmem:[%s168 + $0x1a4] sm:$0xff]
      %v241 = vld [vmem:[%s168 + $0x1ac] sm:$0xf]
      %v242 = vld [vmem:[%s168 + $0x1b0] sm:$0xff]
      %v243 = vld [vmem:[%s168 + $0x1b8] sm:$0xff]
      %v244 = vld [vmem:[%s168 + $0x1c0] sm:$0xff]
      %v245 = vld [vmem:[%s168 + $0x1c8] sm:$0xff]
      %v246 = vld [vmem:[%s168 + $0x1d0] sm:$0xf]
      %v247 = vld [vmem:[%s168 + $0x1d4] sm:$0xff]
      %v248 = vld [vmem:[%s168 + $0x1dc] sm:$0xff]
      %v249 = vld [vmem:[%s168 + $0x1e4] sm:$0xff]
      %v250 = vld [vmem:[%s168 + $0x1ec] sm:$0xff]
      %v251 = vld [vmem:[%s168 + $0x1f4] sm:$0xf]
      %v252 = vld [vmem:[%s168 + $0x1f8] sm:$0xff]
      %v253 = vld [vmem:[%s168 + $0x200] sm:$0xff]
      %v254 = vld [vmem:[%s168 + $0x208] sm:$0xff]
      %v255 = vld [vmem:[%s168 + $0x210] sm:$0xff]
      %v256 = vld [vmem:[%s168 + $0x218] sm:$0xf]
      %v257 = vld [vmem:[%s168 + $0x21c] sm:$0xff]
      %v258 = vld [vmem:[%s168 + $0x224] sm:$0xff]
      %v259 = vld [vmem:[%s168 + $0x22c] sm:$0xff]
      %v260 = vld [vmem:[%s168 + $0x234] sm:$0xff]
      %v261 = vld [vmem:[%s168 + $0x23c] sm:$0xf]
      %v262 = vld [vmem:[%s168 + $0x240] sm:$0xff]
      %v263 = vld [vmem:[%s168 + $0x248] sm:$0xff]
      %v264 = vld [vmem:[%s168 + $0x250] sm:$0xff]
      %v265 = vld [vmem:[%s168 + $0x258] sm:$0xff]
      %v266 = vld [vmem:[%s168 + $0x260] sm:$0xf]
      %v267 = vld [vmem:[%s168 + $0x264] sm:$0xff]
      %v268 = vld [vmem:[%s168 + $0x26c] sm:$0xff]
      %v269 = vld [vmem:[%s168 + $0x274] sm:$0xff]
      %v270 = vld [vmem:[%s168 + $0x27c] sm:$0xff]
      %v271 = vld [vmem:[%s168 + $0x284] sm:$0xf]
      %v272 = vld [vmem:[%s168 + $0x288] sm:$0xff]
      %v273 = vld [vmem:[%s168 + $0x290] sm:$0xff]
      %v274 = vld [vmem:[%s168 + $0x298] sm:$0xff]
      %v275 = vld [vmem:[%s168 + $0x2a0] sm:$0xff]
      %v276 = vld [vmem:[%s168 + $0x2a8] sm:$0xf]
      %v277 = vld [vmem:[%s168 + $0x2ac] sm:$0xff]
      %v278 = vld [vmem:[%s168 + $0x2b4] sm:$0xff]
      %v279 = vld [vmem:[%s168 + $0x2bc] sm:$0xff]
      %v280 = vld [vmem:[%s168 + $0x2c4] sm:$0xff]
      %v281 = vld [vmem:[%s168 + $0x2cc] sm:$0xf]
      %v282 = vld [vmem:[%s168 + $0x2d0] sm:$0xff]
      %v283 = vld [vmem:[%s168 + $0x2d8] sm:$0xff]
      %v284 = vld [vmem:[%s168 + $0x2e0] sm:$0xff]
      %v285 = vld [vmem:[%s168 + $0x2e8] sm:$0xff]
      %v286 = vld [vmem:[%s168 + $0x2f0] sm:$0xf]
      %v287 = vld [vmem:[%s168 + $0x2f4] sm:$0xff]
      %v288 = vld [vmem:[%s168 + $0x2fc] sm:$0xff]
      %v289 = vld [vmem:[%s168 + $0x304] sm:$0xff]
      %v290 = vld [vmem:[%s168 + $0x30c] sm:$0xff]
      %v291 = vld [vmem:[%s168 + $0x314] sm:$0xf]
      %v292 = vld [vmem:[%s168 + $0x318] sm:$0xff]
      %v293 = vld [vmem:[%s168 + $0x320] sm:$0xff]
      %v294 = vld [vmem:[%s168 + $0x328] sm:$0xff]
      %v295 = vld [vmem:[%s168 + $0x330] sm:$0xff]
      %v296 = vld [vmem:[%s168 + $0x338] sm:$0xf]
      %v297 = vld [vmem:[%s168 + $0x33c] sm:$0xff]
      %v298 = vld [vmem:[%s168 + $0x344] sm:$0xff]
      %v299 = vld [vmem:[%s168 + $0x34c] sm:$0xff]
      %v300 = vld [vmem:[%s168 + $0x354] sm:$0xff]
      %v301 = vld [vmem:[%s168 + $0x35c] sm:$0xf]
      %v302 = vld [vmem:[%s168 + $0x360] sm:$0xff]
      %v303 = vld [vmem:[%s168 + $0x368] sm:$0xff]
      %v304 = vld [vmem:[%s168 + $0x370] sm:$0xff]
      %v305 = vld [vmem:[%s168 + $0x378] sm:$0xff]
      %v306 = vld [vmem:[%s168 + $0x380] sm:$0xf]
      %v307 = vld [vmem:[%s168 + $0x384] sm:$0xff]
      %v308 = vld [vmem:[%s168 + $0x38c] sm:$0xff]
      %v309 = vld [vmem:[%s168 + $0x394] sm:$0xff]
      %v310 = vld [vmem:[%s168 + $0x39c] sm:$0xff]
      %v311 = vld [vmem:[%s168 + $0x3a4] sm:$0xf]
      %v312 = vld [vmem:[%s168 + $0x3a8] sm:$0xff]
      %v313 = vld [vmem:[%s168 + $0x3b0] sm:$0xff]
      %v314 = vld [vmem:[%s168 + $0x3b8] sm:$0xff]
      %v315 = vld [vmem:[%s168 + $0x3c0] sm:$0xff]
      %v316 = vld [vmem:[%s168 + $0x3c8] sm:$0xf]
      %v317 = vld [vmem:[%s168 + $0x3cc] sm:$0xff]
      %v318 = vld [vmem:[%s168 + $0x3d4] sm:$0xff]
      %v319 = vld [vmem:[%s168 + $0x3dc] sm:$0xff]
      %v320 = vld [vmem:[%s168 + $0x3e4] sm:$0xff]
      %v321 = vld [vmem:[%s168 + $0x3ec] sm:$0xf]
      %v322 = vld [vmem:[%s168 + $0x3f0] sm:$0xff]
      %v323 = vld [vmem:[%s168 + $0x3f8] sm:$0xff]
      %v324 = vld [vmem:[%s168 + $0x400] sm:$0xff]
      %v325 = vld [vmem:[%s168 + $0x408] sm:$0xff]
      %v326 = vld [vmem:[%s168 + $0x410] sm:$0xf]
      %v327 = vld [vmem:[%s168 + $0x414] sm:$0xff]
      %v328 = vld [vmem:[%s168 + $0x41c] sm:$0xff]
      %v329 = vld [vmem:[%s168 + $0x424] sm:$0xff]
      %v330 = vld [vmem:[%s168 + $0x42c] sm:$0xff]
      %v331 = vld [vmem:[%s168 + $0x434] sm:$0xf]
      %v332 = vld [vmem:[%s168 + $0x438] sm:$0xff]
      %v333 = vld [vmem:[%s168 + $0x440] sm:$0xff]
      %v334 = vld [vmem:[%s168 + $0x448] sm:$0xff]
      %v335 = vld [vmem:[%s168 + $0x450] sm:$0xff]
      %v336 = vld [vmem:[%s168 + $0x458] sm:$0xf]
      %v337 = vld [vmem:[%s168 + $0x45c] sm:$0xff]
      %v338 = vld [vmem:[%s168 + $0x464] sm:$0xff]
      %v339 = vld [vmem:[%s168 + $0x46c] sm:$0xff]
      %v340 = vld [vmem:[%s168 + $0x474] sm:$0xff]
      %v341 = vld [vmem:[%s168 + $0x47c] sm:$0xf]
      %v342 = vld [vmem:[%s172] sm:$0xf]
      %v343 = vld [vmem:[%s172 + $0x4] sm:$0xf]
      %v344 = vld [vmem:[%s172 + $0x8] sm:$0xf]
      %v345 = vld [vmem:[%s172 + $0xc] sm:$0xf]
      %v346 = vld [vmem:[%s172 + $0x10] sm:$0xf]
      %v347 = vld [vmem:[%s172 + $0x14] sm:$0xf]
      %v348 = vld [vmem:[%s172 + $0x18] sm:$0xf]
      %v349 = vld [vmem:[%s172 + $0x1c] sm:$0xf]
      %v350 = vld [vmem:[%s172 + $0x20] sm:$0xf]
      %v351 = vld [vmem:[%s172 + $0x24] sm:$0xf]
      %v352 = vld [vmem:[%s172 + $0x28] sm:$0xf]
      %v353 = vld [vmem:[%s172 + $0x2c] sm:$0xf]
      %v354 = vld [vmem:[%s172 + $0x30] sm:$0xf]
      %v355 = vld [vmem:[%s172 + $0x34] sm:$0xf]
      %v356 = vld [vmem:[%s172 + $0x38] sm:$0xf]
      %v357 = vld [vmem:[%s172 + $0x3c] sm:$0xf]
      %v358 = vld [vmem:[%s172 + $0x40] sm:$0xf]
      %v359 = vld [vmem:[%s172 + $0x44] sm:$0xf]
      %v360 = vld [vmem:[%s172 + $0x48] sm:$0xf]
      %v361 = vld [vmem:[%s172 + $0x4c] sm:$0xf]
      %v362 = vld [vmem:[%s172 + $0x50] sm:$0xf]
      %v363 = vld [vmem:[%s172 + $0x54] sm:$0xf]
      %v364 = vld [vmem:[%s172 + $0x58] sm:$0xf]
      %v365 = vld [vmem:[%s172 + $0x5c] sm:$0xf]
      %v366 = vld [vmem:[%s172 + $0x60] sm:$0xf]
      %v367 = vld [vmem:[%s172 + $0x64] sm:$0xf]
      %v368 = vld [vmem:[%s172 + $0x68] sm:$0xf]
      %v369 = vld [vmem:[%s172 + $0x6c] sm:$0xf]
      %v370 = vld [vmem:[%s172 + $0x70] sm:$0xf]
      %v371 = vld [vmem:[%s172 + $0x74] sm:$0xf]
      %v372 = vld [vmem:[%s172 + $0x78] sm:$0xf]
      %v373 = vld [vmem:[%s172 + $0x7c] sm:$0xf]
      %v374 = vld [vmem:[%s172 + $0x80] sm:$0xf]
      %v375 = vld [vmem:[%s172 + $0x84] sm:$0xf]
      %v376 = vld [vmem:[%s172 + $0x88] sm:$0xf]
      %v377 = vld [vmem:[%s172 + $0x8c] sm:$0xf]
      %v378 = vld [vmem:[%s172 + $0x90] sm:$0xf]
      %v379 = vld [vmem:[%s172 + $0x94] sm:$0xf]
      %v380 = vld [vmem:[%s172 + $0x98] sm:$0xf]
      %v381 = vld [vmem:[%s172 + $0x9c] sm:$0xf]
      %v382 = vld [vmem:[%s172 + $0xa0] sm:$0xf]
      %v383 = vld [vmem:[%s172 + $0xa4] sm:$0xf]
      %v384 = vld [vmem:[%s172 + $0xa8] sm:$0xf]
      %v385 = vld [vmem:[%s172 + $0xac] sm:$0xf]
      %v386 = vld [vmem:[%s172 + $0xb0] sm:$0xf]
      %v387 = vld [vmem:[%s172 + $0xb4] sm:$0xf]
      %v388 = vld [vmem:[%s172 + $0xb8] sm:$0xf]
      %v389 = vld [vmem:[%s172 + $0xbc] sm:$0xf]
      %v390 = vld [vmem:[%s172 + $0xc0] sm:$0xf]
      %v391 = vld [vmem:[%s172 + $0xc4] sm:$0xf]
      %v392 = vld [vmem:[%s172 + $0xc8] sm:$0xf]
      %v393 = vld [vmem:[%s172 + $0xcc] sm:$0xf]
      %v394 = vld [vmem:[%s172 + $0xd0] sm:$0xf]
      %v395 = vld [vmem:[%s172 + $0xd4] sm:$0xf]
      %v396 = vld [vmem:[%s172 + $0xd8] sm:$0xf]
      %v397 = vld [vmem:[%s172 + $0xdc] sm:$0xf]
      %v398 = vld [vmem:[%s172 + $0xe0] sm:$0xf]
      %v399 = vld [vmem:[%s172 + $0xe4] sm:$0xf]
      %v400 = vld [vmem:[%s172 + $0xe8] sm:$0xf]
      %v401 = vld [vmem:[%s172 + $0xec] sm:$0xf]
      %v402 = vld [vmem:[%s172 + $0xf0] sm:$0xf]
      %v403 = vld [vmem:[%s172 + $0xf4] sm:$0xf]
      %v404 = vld [vmem:[%s172 + $0xf8] sm:$0xf]
      %v405 = vld [vmem:[%s172 + $0xfc] sm:$0xf]
      %v406 = vld [vmem:[%s172 + $0x100] sm:$0xf]
      %v407 = vld [vmem:[%s172 + $0x104] sm:$0xf]
      %v408 = vld [vmem:[%s172 + $0x108] sm:$0xf]
      %v409 = vld [vmem:[%s172 + $0x10c] sm:$0xf]
      %v410 = vld [vmem:[%s172 + $0x110] sm:$0xf]
      %v411 = vld [vmem:[%s172 + $0x114] sm:$0xf]
      %v412 = vld [vmem:[%s172 + $0x118] sm:$0xf]
      %v413 = vld [vmem:[%s172 + $0x11c] sm:$0xf]
      %v414 = vld [vmem:[%s172 + $0x120] sm:$0xf]
      %v415 = vld [vmem:[%s172 + $0x124] sm:$0xf]
      %v416 = vld [vmem:[%s172 + $0x128] sm:$0xf]
      %v417 = vld [vmem:[%s172 + $0x12c] sm:$0xf]
      %v418 = vld [vmem:[%s172 + $0x130] sm:$0xf]
      %v419 = vld [vmem:[%s172 + $0x134] sm:$0xf]
      %v420 = vld [vmem:[%s172 + $0x138] sm:$0xf]
      %v421 = vld [vmem:[%s172 + $0x13c] sm:$0xf]
      %v422 = vld [vmem:[%s172 + $0x140] sm:$0xf]
      %v423 = vld [vmem:[%s172 + $0x144] sm:$0xf]
      %v424 = vld [vmem:[%s172 + $0x148] sm:$0xf]
      %v425 = vld [vmem:[%s172 + $0x14c] sm:$0xf]
      %v426 = vld [vmem:[%s172 + $0x150] sm:$0xf]
      %v427 = vld [vmem:[%s172 + $0x154] sm:$0xf]
      %v428 = vld [vmem:[%s172 + $0x158] sm:$0xf]
      %v429 = vld [vmem:[%s172 + $0x15c] sm:$0xf]
      %v430 = vld [vmem:[%s172 + $0x160] sm:$0xf]
      %v431 = vld [vmem:[%s172 + $0x164] sm:$0xf]
      %v432 = vld [vmem:[%s172 + $0x168] sm:$0xf]
      %v433 = vld [vmem:[%s172 + $0x16c] sm:$0xf]
      %v434 = vld [vmem:[%s172 + $0x170] sm:$0xf]
      %v435 = vld [vmem:[%s172 + $0x174] sm:$0xf]
      %v436 = vld [vmem:[%s172 + $0x178] sm:$0xf]
      %v437 = vld [vmem:[%s172 + $0x17c] sm:$0xf]
      %v438 = vld [vmem:[%s172 + $0x180] sm:$0xf]
      %v439 = vld [vmem:[%s172 + $0x184] sm:$0xf]
      %v440 = vld [vmem:[%s172 + $0x188] sm:$0xf]
      %v441 = vld [vmem:[%s172 + $0x18c] sm:$0xf]
      %v442 = vld [vmem:[%s172 + $0x190] sm:$0xf]
      %v443 = vld [vmem:[%s172 + $0x194] sm:$0xf]
      %v444 = vld [vmem:[%s172 + $0x198] sm:$0xf]
      %v445 = vld [vmem:[%s172 + $0x19c] sm:$0xf]
      %v446 = vld [vmem:[%s172 + $0x1a0] sm:$0xf]
      %v447 = vld [vmem:[%s172 + $0x1a4] sm:$0xf]
      %v448 = vld [vmem:[%s172 + $0x1a8] sm:$0xf]
      %v449 = vld [vmem:[%s172 + $0x1ac] sm:$0xf]
      %v450 = vld [vmem:[%s172 + $0x1b0] sm:$0xf]
      %v451 = vld [vmem:[%s172 + $0x1b4] sm:$0xf]
      %v452 = vld [vmem:[%s172 + $0x1b8] sm:$0xf]
      %v453 = vld [vmem:[%s172 + $0x1bc] sm:$0xf]
      %v454 = vld [vmem:[%s172 + $0x1c0] sm:$0xf]
      %v455 = vld [vmem:[%s172 + $0x1c4] sm:$0xf]
      %v456 = vld [vmem:[%s172 + $0x1c8] sm:$0xf]
      %v457 = vld [vmem:[%s172 + $0x1cc] sm:$0xf]
      %v458 = vld [vmem:[%s172 + $0x1d0] sm:$0xf]
      %v459 = vld [vmem:[%s172 + $0x1d4] sm:$0xf]
      %v460 = vld [vmem:[%s172 + $0x1d8] sm:$0xf]
      %v461 = vld [vmem:[%s172 + $0x1dc] sm:$0xf]
      %v462 = vld [vmem:[%s172 + $0x1e0] sm:$0xf]
      %v463 = vld [vmem:[%s172 + $0x1e4] sm:$0xf]
      %v464 = vld [vmem:[%s172 + $0x1e8] sm:$0xf]
      %v465 = vld [vmem:[%s172 + $0x1ec] sm:$0xf]
      %v466 = vld [vmem:[%s172 + $0x1f0] sm:$0xf]
      %v467 = vld [vmem:[%s172 + $0x1f4] sm:$0xf]
      %v468 = vld [vmem:[%s172 + $0x1f8] sm:$0xf]
      %v469 = vld [vmem:[%s172 + $0x1fc] sm:$0xf]
      %v470 = vld [vmem:[%s172 + $0x200] sm:$0xf]
      %v471 = vld [vmem:[%s172 + $0x204] sm:$0xf]
      %v472 = vld [vmem:[%s172 + $0x208] sm:$0xf]
      %v473 = vld [vmem:[%s172 + $0x20c] sm:$0xf]
      %v474 = vld [vmem:[%s172 + $0x210] sm:$0xf]
      %v475 = vld [vmem:[%s172 + $0x214] sm:$0xf]
      %v476 = vld [vmem:[%s172 + $0x218] sm:$0xf]
      %v477 = vld [vmem:[%s172 + $0x21c] sm:$0xf]
      %v478 = vld [vmem:[%s172 + $0x220] sm:$0xf]
      %v479 = vld [vmem:[%s172 + $0x224] sm:$0xf]
      %v480 = vld [vmem:[%s172 + $0x228] sm:$0xf]
      %v481 = vld [vmem:[%s172 + $0x22c] sm:$0xf]
      %v482 = vld [vmem:[%s172 + $0x230] sm:$0xf]
      %v483 = vld [vmem:[%s172 + $0x234] sm:$0xf]
      %v484 = vld [vmem:[%s172 + $0x238] sm:$0xf]
      %v485 = vld [vmem:[%s172 + $0x23c] sm:$0xf]
      %v646 = vunpack.c.l.b16 %v182
      %v647 = vunpack.c.h.b16 %v182
      %v648 = vunpack.c.l.b16 %v183
      %v649 = vunpack.c.h.b16 %v183
      %v650 = vunpack.c.l.b16 %v184
      %v651 = vunpack.c.h.b16 %v184
      %v652 = vunpack.c.l.b16 %v185
      %v653 = vunpack.c.h.b16 %v185
      %v654 = vunpack.c.l.b16 %v186
      %v655 = vunpack.c.l.b16 %v187
      %v656 = vunpack.c.h.b16 %v187
      %v657 = vunpack.c.l.b16 %v188
      %v658 = vunpack.c.h.b16 %v188
      %v659 = vunpack.c.l.b16 %v189
      %v660 = vunpack.c.h.b16 %v189
      %v661 = vunpack.c.l.b16 %v190
      %v662 = vunpack.c.h.b16 %v190
      %v663 = vunpack.c.l.b16 %v191
      %v664 = vunpack.c.l.b16 %v192
      %v665 = vunpack.c.h.b16 %v192
      %v666 = vunpack.c.l.b16 %v193
      %v667 = vunpack.c.h.b16 %v193
      %v668 = vunpack.c.l.b16 %v194
      %v669 = vunpack.c.h.b16 %v194
      %v670 = vunpack.c.l.b16 %v195
      %v671 = vunpack.c.h.b16 %v195
      %v672 = vunpack.c.l.b16 %v196
      %v673 = vunpack.c.l.b16 %v197
      %v674 = vunpack.c.h.b16 %v197
      %v675 = vunpack.c.l.b16 %v198
      %v676 = vunpack.c.h.b16 %v198
      %v677 = vunpack.c.l.b16 %v199
      %v678 = vunpack.c.h.b16 %v199
      %v679 = vunpack.c.l.b16 %v200
      %v680 = vunpack.c.h.b16 %v200
      %v681 = vunpack.c.l.b16 %v201
      %v682 = vunpack.c.l.b16 %v202
      %v683 = vunpack.c.h.b16 %v202
      %v684 = vunpack.c.l.b16 %v203
      %v685 = vunpack.c.h.b16 %v203
      %v686 = vunpack.c.l.b16 %v204
      %v687 = vunpack.c.h.b16 %v204
      %v688 = vunpack.c.l.b16 %v205
      %v689 = vunpack.c.h.b16 %v205
      %v690 = vunpack.c.l.b16 %v206
      %v691 = vunpack.c.l.b16 %v207
      %v692 = vunpack.c.h.b16 %v207
      %v693 = vunpack.c.l.b16 %v208
      %v694 = vunpack.c.h.b16 %v208
      %v695 = vunpack.c.l.b16 %v209
      %v696 = vunpack.c.h.b16 %v209
      %v697 = vunpack.c.l.b16 %v210
      %v698 = vunpack.c.h.b16 %v210
      %v699 = vunpack.c.l.b16 %v211
      %v700 = vunpack.c.l.b16 %v212
      %v701 = vunpack.c.h.b16 %v212
      %v702 = vunpack.c.l.b16 %v213
      %v703 = vunpack.c.h.b16 %v213
      %v704 = vunpack.c.l.b16 %v214
      %v705 = vunpack.c.h.b16 %v214
      %v706 = vunpack.c.l.b16 %v215
      %v707 = vunpack.c.h.b16 %v215
      %v708 = vunpack.c.l.b16 %v216
      %v709 = vunpack.c.l.b16 %v217
      %v710 = vunpack.c.h.b16 %v217
      %v711 = vunpack.c.l.b16 %v218
      %v712 = vunpack.c.h.b16 %v218
      %v713 = vunpack.c.l.b16 %v219
      %v714 = vunpack.c.h.b16 %v219
      %v715 = vunpack.c.l.b16 %v220
      %v716 = vunpack.c.h.b16 %v220
      %v717 = vunpack.c.l.b16 %v221
      %v718 = vunpack.c.l.b16 %v222
      %v719 = vunpack.c.h.b16 %v222
      %v720 = vunpack.c.l.b16 %v223
      %v721 = vunpack.c.h.b16 %v223
      %v722 = vunpack.c.l.b16 %v224
      %v723 = vunpack.c.h.b16 %v224
      %v724 = vunpack.c.l.b16 %v225
      %v725 = vunpack.c.h.b16 %v225
      %v726 = vunpack.c.l.b16 %v226
      %v727 = vunpack.c.l.b16 %v227
      %v728 = vunpack.c.h.b16 %v227
      %v729 = vunpack.c.l.b16 %v228
      %v730 = vunpack.c.h.b16 %v228
      %v731 = vunpack.c.l.b16 %v229
      %v732 = vunpack.c.h.b16 %v229
      %v733 = vunpack.c.l.b16 %v230
      %v734 = vunpack.c.h.b16 %v230
      %v735 = vunpack.c.l.b16 %v231
      %v736 = vunpack.c.l.b16 %v232
      %v737 = vunpack.c.h.b16 %v232
      %v738 = vunpack.c.l.b16 %v233
      %v739 = vunpack.c.h.b16 %v233
      %v740 = vunpack.c.l.b16 %v234
      %v741 = vunpack.c.h.b16 %v234
      %v742 = vunpack.c.l.b16 %v235
      %v743 = vunpack.c.h.b16 %v235
      %v744 = vunpack.c.l.b16 %v236
      %v745 = vunpack.c.l.b16 %v237
      %v746 = vunpack.c.h.b16 %v237
      %v747 = vunpack.c.l.b16 %v238
      %v748 = vunpack.c.h.b16 %v238
      %v749 = vunpack.c.l.b16 %v239
      %v750 = vunpack.c.h.b16 %v239
      %v751 = vunpack.c.l.b16 %v240
      %v752 = vunpack.c.h.b16 %v240
      %v753 = vunpack.c.l.b16 %v241
      %v754 = vunpack.c.l.b16 %v242
      %v755 = vunpack.c.h.b16 %v242
      %v756 = vunpack.c.l.b16 %v243
      %v757 = vunpack.c.h.b16 %v243
      %v758 = vunpack.c.l.b16 %v244
      %v759 = vunpack.c.h.b16 %v244
      %v760 = vunpack.c.l.b16 %v245
      %v761 = vunpack.c.h.b16 %v245
      %v762 = vunpack.c.l.b16 %v246
      %v763 = vunpack.c.l.b16 %v247
      %v764 = vunpack.c.h.b16 %v247
      %v765 = vunpack.c.l.b16 %v248
      %v766 = vunpack.c.h.b16 %v248
      %v767 = vunpack.c.l.b16 %v249
      %v768 = vunpack.c.h.b16 %v249
      %v769 = vunpack.c.l.b16 %v250
      %v770 = vunpack.c.h.b16 %v250
      %v771 = vunpack.c.l.b16 %v251
      %v772 = vunpack.c.l.b16 %v252
      %v773 = vunpack.c.h.b16 %v252
      %v774 = vunpack.c.l.b16 %v253
      %v775 = vunpack.c.h.b16 %v253
      %v776 = vunpack.c.l.b16 %v254
      %v777 = vunpack.c.h.b16 %v254
      %v778 = vunpack.c.l.b16 %v255
      %v779 = vunpack.c.h.b16 %v255
      %v780 = vunpack.c.l.b16 %v256
      %v781 = vunpack.c.l.b16 %v257
      %v782 = vunpack.c.h.b16 %v257
      %v783 = vunpack.c.l.b16 %v258
      %v784 = vunpack.c.h.b16 %v258
      %v785 = vunpack.c.l.b16 %v259
      %v786 = vunpack.c.h.b16 %v259
      %v787 = vunpack.c.l.b16 %v260
      %v788 = vunpack.c.h.b16 %v260
      %v789 = vunpack.c.l.b16 %v261
      %v790 = vunpack.c.l.b16 %v262
      %v791 = vunpack.c.h.b16 %v262
      %v792 = vunpack.c.l.b16 %v263
      %v793 = vunpack.c.h.b16 %v263
      %v794 = vunpack.c.l.b16 %v264
      %v795 = vunpack.c.h.b16 %v264
      %v796 = vunpack.c.l.b16 %v265
      %v797 = vunpack.c.h.b16 %v265
      %v798 = vunpack.c.l.b16 %v266
      %v799 = vunpack.c.l.b16 %v267
      %v800 = vunpack.c.h.b16 %v267
      %v801 = vunpack.c.l.b16 %v268
      %v802 = vunpack.c.h.b16 %v268
      %v803 = vunpack.c.l.b16 %v269
      %v804 = vunpack.c.h.b16 %v269
      %v805 = vunpack.c.l.b16 %v270
      %v806 = vunpack.c.h.b16 %v270
      %v807 = vunpack.c.l.b16 %v271
      %v808 = vunpack.c.l.b16 %v272
      %v809 = vunpack.c.h.b16 %v272
      %v810 = vunpack.c.l.b16 %v273
      %v811 = vunpack.c.h.b16 %v273
      %v812 = vunpack.c.l.b16 %v274
      %v813 = vunpack.c.h.b16 %v274
      %v814 = vunpack.c.l.b16 %v275
      %v815 = vunpack.c.h.b16 %v275
      %v816 = vunpack.c.l.b16 %v276
      %v817 = vunpack.c.l.b16 %v277
      %v818 = vunpack.c.h.b16 %v277
      %v819 = vunpack.c.l.b16 %v278
      %v820 = vunpack.c.h.b16 %v278
      %v821 = vunpack.c.l.b16 %v279
      %v822 = vunpack.c.h.b16 %v279
      %v823 = vunpack.c.l.b16 %v280
      %v824 = vunpack.c.h.b16 %v280
      %v825 = vunpack.c.l.b16 %v281
      %v826 = vunpack.c.l.b16 %v282
      %v827 = vunpack.c.h.b16 %v282
      %v828 = vunpack.c.l.b16 %v283
      %v829 = vunpack.c.h.b16 %v283
      %v830 = vunpack.c.l.b16 %v284
      %v831 = vunpack.c.h.b16 %v284
      %v832 = vunpack.c.l.b16 %v285
      %v833 = vunpack.c.h.b16 %v285
      %v834 = vunpack.c.l.b16 %v286
      %v835 = vunpack.c.l.b16 %v287
      %v836 = vunpack.c.h.b16 %v287
      %v837 = vunpack.c.l.b16 %v288
      %v838 = vunpack.c.h.b16 %v288
      %v839 = vunpack.c.l.b16 %v289
      %v840 = vunpack.c.h.b16 %v289
      %v841 = vunpack.c.l.b16 %v290
      %v842 = vunpack.c.h.b16 %v290
      %v843 = vunpack.c.l.b16 %v291
      %v844 = vunpack.c.l.b16 %v292
      %v845 = vunpack.c.h.b16 %v292
      %v846 = vunpack.c.l.b16 %v293
      %v847 = vunpack.c.h.b16 %v293
      %v848 = vunpack.c.l.b16 %v294
      %v849 = vunpack.c.h.b16 %v294
      %v850 = vunpack.c.l.b16 %v295
      %v851 = vunpack.c.h.b16 %v295
      %v852 = vunpack.c.l.b16 %v296
      %v853 = vunpack.c.l.b16 %v297
      %v854 = vunpack.c.h.b16 %v297
      %v855 = vunpack.c.l.b16 %v298
      %v856 = vunpack.c.h.b16 %v298
      %v857 = vunpack.c.l.b16 %v299
      %v858 = vunpack.c.h.b16 %v299
      %v859 = vunpack.c.l.b16 %v300
      %v860 = vunpack.c.h.b16 %v300
      %v861 = vunpack.c.l.b16 %v301
      %v862 = vunpack.c.l.b16 %v302
      %v863 = vunpack.c.h.b16 %v302
      %v864 = vunpack.c.l.b16 %v303
      %v865 = vunpack.c.h.b16 %v303
      %v866 = vunpack.c.l.b16 %v304
      %v867 = vunpack.c.h.b16 %v304
      %v868 = vunpack.c.l.b16 %v305
      %v869 = vunpack.c.h.b16 %v305
      %v870 = vunpack.c.l.b16 %v306
      %v871 = vunpack.c.l.b16 %v307
      %v872 = vunpack.c.h.b16 %v307
      %v873 = vunpack.c.l.b16 %v308
      %v874 = vunpack.c.h.b16 %v308
      %v875 = vunpack.c.l.b16 %v309
      %v876 = vunpack.c.h.b16 %v309
      %v877 = vunpack.c.l.b16 %v310
      %v878 = vunpack.c.h.b16 %v310
      %v879 = vunpack.c.l.b16 %v311
      %v880 = vunpack.c.l.b16 %v312
      %v881 = vunpack.c.h.b16 %v312
      %v882 = vunpack.c.l.b16 %v313
      %v883 = vunpack.c.h.b16 %v313
      %v884 = vunpack.c.l.b16 %v314
      %v885 = vunpack.c.h.b16 %v314
      %v886 = vunpack.c.l.b16 %v315
      %v887 = vunpack.c.h.b16 %v315
      %v888 = vunpack.c.l.b16 %v316
      %v889 = vunpack.c.l.b16 %v317
      %v890 = vunpack.c.h.b16 %v317
      %v891 = vunpack.c.l.b16 %v318
      %v892 = vunpack.c.h.b16 %v318
      %v893 = vunpack.c.l.b16 %v319
      %v894 = vunpack.c.h.b16 %v319
      %v895 = vunpack.c.l.b16 %v320
      %v896 = vunpack.c.h.b16 %v320
      %v897 = vunpack.c.l.b16 %v321
      %v898 = vunpack.c.l.b16 %v322
      %v899 = vunpack.c.h.b16 %v322
      %v900 = vunpack.c.l.b16 %v323
      %v901 = vunpack.c.h.b16 %v323
      %v902 = vunpack.c.l.b16 %v324
      %v903 = vunpack.c.h.b16 %v324
      %v904 = vunpack.c.l.b16 %v325
      %v905 = vunpack.c.h.b16 %v325
      %v906 = vunpack.c.l.b16 %v326
      %v907 = vunpack.c.l.b16 %v327
      %v908 = vunpack.c.h.b16 %v327
      %v909 = vunpack.c.l.b16 %v328
      %v910 = vunpack.c.h.b16 %v328
      %v911 = vunpack.c.l.b16 %v329
      %v912 = vunpack.c.h.b16 %v329
      %v913 = vunpack.c.l.b16 %v330
      %v914 = vunpack.c.h.b16 %v330
      %v915 = vunpack.c.l.b16 %v331
      %v916 = vunpack.c.l.b16 %v332
      %v917 = vunpack.c.h.b16 %v332
      %v918 = vunpack.c.l.b16 %v333
      %v919 = vunpack.c.h.b16 %v333
      %v920 = vunpack.c.l.b16 %v334
      %v921 = vunpack.c.h.b16 %v334
      %v922 = vunpack.c.l.b16 %v335
      %v923 = vunpack.c.h.b16 %v335
      %v924 = vunpack.c.l.b16 %v336
      %v925 = vunpack.c.l.b16 %v337
      %v926 = vunpack.c.h.b16 %v337
      %v927 = vunpack.c.l.b16 %v338
      %v928 = vunpack.c.h.b16 %v338
      %v929 = vunpack.c.l.b16 %v339
      %v930 = vunpack.c.h.b16 %v339
      %v931 = vunpack.c.l.b16 %v340
      %v932 = vunpack.c.h.b16 %v340
      %v933 = vunpack.c.l.b16 %v341
      %v934 = vpack.c.b16 %v655, %v646
      %v935 = vpack.c.b16 %v656, %v647
      %v936 = vpack.c.b16 %v657, %v648
      %v937 = vpack.c.b16 %v658, %v649
      %v938 = vpack.c.b16 %v659, %v650
      %v939 = vpack.c.b16 %v660, %v651
      %v940 = vpack.c.b16 %v661, %v652
      %v941 = vpack.c.b16 %v662, %v653
      %v942 = vpack.c.b16 %v663, %v654
      %v943 = vpack.c.b16 %v673, %v664
      %v944 = vpack.c.b16 %v674, %v665
      %v945 = vpack.c.b16 %v675, %v666
      %v946 = vpack.c.b16 %v676, %v667
      %v947 = vpack.c.b16 %v677, %v668
      %v948 = vpack.c.b16 %v678, %v669
      %v949 = vpack.c.b16 %v679, %v670
      %v950 = vpack.c.b16 %v680, %v671
      %v951 = vpack.c.b16 %v681, %v672
      %v952 = vpack.c.b16 %v691, %v682
      %v953 = vpack.c.b16 %v692, %v683
      %v954 = vpack.c.b16 %v693, %v684
      %v955 = vpack.c.b16 %v694, %v685
      %v956 = vpack.c.b16 %v695, %v686
      %v957 = vpack.c.b16 %v696, %v687
      %v958 = vpack.c.b16 %v697, %v688
      %v959 = vpack.c.b16 %v698, %v689
      %v960 = vpack.c.b16 %v699, %v690
      %v961 = vpack.c.b16 %v709, %v700
      %v962 = vpack.c.b16 %v710, %v701
      %v963 = vpack.c.b16 %v711, %v702
      %v964 = vpack.c.b16 %v712, %v703
      %v965 = vpack.c.b16 %v713, %v704
      %v966 = vpack.c.b16 %v714, %v705
      %v967 = vpack.c.b16 %v715, %v706
      %v968 = vpack.c.b16 %v716, %v707
      %v969 = vpack.c.b16 %v717, %v708
      %v970 = vpack.c.b16 %v727, %v718
      %v971 = vpack.c.b16 %v728, %v719
      %v972 = vpack.c.b16 %v729, %v720
      %v973 = vpack.c.b16 %v730, %v721
      %v974 = vpack.c.b16 %v731, %v722
      %v975 = vpack.c.b16 %v732, %v723
      %v976 = vpack.c.b16 %v733, %v724
      %v977 = vpack.c.b16 %v734, %v725
      %v978 = vpack.c.b16 %v735, %v726
      %v979 = vpack.c.b16 %v745, %v736
      %v980 = vpack.c.b16 %v746, %v737
      %v981 = vpack.c.b16 %v747, %v738
      %v982 = vpack.c.b16 %v748, %v739
      %v983 = vpack.c.b16 %v749, %v740
      %v984 = vpack.c.b16 %v750, %v741
      %v985 = vpack.c.b16 %v751, %v742
      %v986 = vpack.c.b16 %v752, %v743
      %v987 = vpack.c.b16 %v753, %v744
      %v988 = vpack.c.b16 %v763, %v754
      %v989 = vpack.c.b16 %v764, %v755
      %v990 = vpack.c.b16 %v765, %v756
      %v991 = vpack.c.b16 %v766, %v757
      %v992 = vpack.c.b16 %v767, %v758
      %v993 = vpack.c.b16 %v768, %v759
      %v994 = vpack.c.b16 %v769, %v760
      %v995 = vpack.c.b16 %v770, %v761
      %v996 = vpack.c.b16 %v771, %v762
      %v997 = vpack.c.b16 %v781, %v772
      %v998 = vpack.c.b16 %v782, %v773
      %v999 = vpack.c.b16 %v783, %v774
      %v1000 = vpack.c.b16 %v784, %v775
      %v1001 = vpack.c.b16 %v785, %v776
      %v1002 = vpack.c.b16 %v786, %v777
      %v1003 = vpack.c.b16 %v787, %v778
      %v1004 = vpack.c.b16 %v788, %v779
      %v1005 = vpack.c.b16 %v789, %v780
      %v1006 = vpack.c.b16 %v799, %v790
      %v1007 = vpack.c.b16 %v800, %v791
      %v1008 = vpack.c.b16 %v801, %v792
      %v1009 = vpack.c.b16 %v802, %v793
      %v1010 = vpack.c.b16 %v803, %v794
      %v1011 = vpack.c.b16 %v804, %v795
      %v1012 = vpack.c.b16 %v805, %v796
      %v1013 = vpack.c.b16 %v806, %v797
      %v1014 = vpack.c.b16 %v807, %v798
      %v1015 = vpack.c.b16 %v817, %v808
      %v1016 = vpack.c.b16 %v818, %v809
      %v1017 = vpack.c.b16 %v819, %v810
      %v1018 = vpack.c.b16 %v820, %v811
      %v1019 = vpack.c.b16 %v821, %v812
      %v1020 = vpack.c.b16 %v822, %v813
      %v1021 = vpack.c.b16 %v823, %v814
      %v1022 = vpack.c.b16 %v824, %v815
      %v1023 = vpack.c.b16 %v825, %v816
      %v1024 = vpack.c.b16 %v835, %v826
      %v1025 = vpack.c.b16 %v836, %v827
      %v1026 = vpack.c.b16 %v837, %v828
      %v1027 = vpack.c.b16 %v838, %v829
      %v1028 = vpack.c.b16 %v839, %v830
      %v1029 = vpack.c.b16 %v840, %v831
      %v1030 = vpack.c.b16 %v841, %v832
      %v1031 = vpack.c.b16 %v842, %v833
      %v1032 = vpack.c.b16 %v843, %v834
      %v1033 = vpack.c.b16 %v853, %v844
      %v1034 = vpack.c.b16 %v854, %v845
      %v1035 = vpack.c.b16 %v855, %v846
      %v1036 = vpack.c.b16 %v856, %v847
      %v1037 = vpack.c.b16 %v857, %v848
      %v1038 = vpack.c.b16 %v858, %v849
      %v1039 = vpack.c.b16 %v859, %v850
      %v1040 = vpack.c.b16 %v860, %v851
      %v1041 = vpack.c.b16 %v861, %v852
      %v1042 = vpack.c.b16 %v871, %v862
      %v1043 = vpack.c.b16 %v872, %v863
      %v1044 = vpack.c.b16 %v873, %v864
      %v1045 = vpack.c.b16 %v874, %v865
      %v1046 = vpack.c.b16 %v875, %v866
      %v1047 = vpack.c.b16 %v876, %v867
      %v1048 = vpack.c.b16 %v877, %v868
      %v1049 = vpack.c.b16 %v878, %v869
      %v1050 = vpack.c.b16 %v879, %v870
      %v1051 = vpack.c.b16 %v889, %v880
      %v1052 = vpack.c.b16 %v890, %v881
      %v1053 = vpack.c.b16 %v891, %v882
      %v1054 = vpack.c.b16 %v892, %v883
      %v1055 = vpack.c.b16 %v893, %v884
      %v1056 = vpack.c.b16 %v894, %v885
      %v1057 = vpack.c.b16 %v895, %v886
      %v1058 = vpack.c.b16 %v896, %v887
      %v1059 = vpack.c.b16 %v897, %v888
      %v1060 = vpack.c.b16 %v907, %v898
      %v1061 = vpack.c.b16 %v908, %v899
      %v1062 = vpack.c.b16 %v909, %v900
      %v1063 = vpack.c.b16 %v910, %v901
      %v1064 = vpack.c.b16 %v911, %v902
      %v1065 = vpack.c.b16 %v912, %v903
      %v1066 = vpack.c.b16 %v913, %v904
      %v1067 = vpack.c.b16 %v914, %v905
      %v1068 = vpack.c.b16 %v915, %v906
      %v1069 = vpack.c.b16 %v925, %v916
      %v1070 = vpack.c.b16 %v926, %v917
      %v1071 = vpack.c.b16 %v927, %v918
      %v1072 = vpack.c.b16 %v928, %v919
      %v1073 = vpack.c.b16 %v929, %v920
      %v1074 = vpack.c.b16 %v930, %v921
      %v1075 = vpack.c.b16 %v931, %v922
      %v1076 = vpack.c.b16 %v932, %v923
      %v1077 = vpack.c.b16 %v933, %v924
      %v1366 = vunpack.c.l.b16 %v342
      %v1367 = vunpack.c.l.b16 %v343
      %v1368 = vunpack.c.l.b16 %v344
      %v1369 = vunpack.c.l.b16 %v345
      %v1370 = vunpack.c.l.b16 %v346
      %v1371 = vunpack.c.l.b16 %v347
      %v1372 = vunpack.c.l.b16 %v348
      %v1373 = vunpack.c.l.b16 %v349
      %v1374 = vunpack.c.l.b16 %v350
      %v1375 = vunpack.c.l.b16 %v351
      %v1376 = vunpack.c.l.b16 %v352
      %v1377 = vunpack.c.l.b16 %v353
      %v1378 = vunpack.c.l.b16 %v354
      %v1379 = vunpack.c.l.b16 %v355
      %v1380 = vunpack.c.l.b16 %v356
      %v1381 = vunpack.c.l.b16 %v357
      %v1382 = vunpack.c.l.b16 %v358
      %v1383 = vunpack.c.l.b16 %v359
      %v1384 = vunpack.c.l.b16 %v360
      %v1385 = vunpack.c.l.b16 %v361
      %v1386 = vunpack.c.l.b16 %v362
      %v1387 = vunpack.c.l.b16 %v363
      %v1388 = vunpack.c.l.b16 %v364
      %v1389 = vunpack.c.l.b16 %v365
      %v1390 = vunpack.c.l.b16 %v366
      %v1391 = vunpack.c.l.b16 %v367
      %v1392 = vunpack.c.l.b16 %v368
      %v1393 = vunpack.c.l.b16 %v369
      %v1394 = vunpack.c.l.b16 %v370
      %v1395 = vunpack.c.l.b16 %v371
      %v1396 = vunpack.c.l.b16 %v372
      %v1397 = vunpack.c.l.b16 %v373
      %v1398 = vunpack.c.l.b16 %v374
      %v1399 = vunpack.c.l.b16 %v375
      %v1400 = vunpack.c.l.b16 %v376
      %v1401 = vunpack.c.l.b16 %v377
      %v1402 = vunpack.c.l.b16 %v378
      %v1403 = vunpack.c.l.b16 %v379
      %v1404 = vunpack.c.l.b16 %v380
      %v1405 = vunpack.c.l.b16 %v381
      %v1406 = vunpack.c.l.b16 %v382
      %v1407 = vunpack.c.l.b16 %v383
      %v1408 = vunpack.c.l.b16 %v384
      %v1409 = vunpack.c.l.b16 %v385
      %v1410 = vunpack.c.l.b16 %v386
      %v1411 = vunpack.c.l.b16 %v387
      %v1412 = vunpack.c.l.b16 %v388
      %v1413 = vunpack.c.l.b16 %v389
      %v1414 = vunpack.c.l.b16 %v390
      %v1415 = vunpack.c.l.b16 %v391
      %v1416 = vunpack.c.l.b16 %v392
      %v1417 = vunpack.c.l.b16 %v393
      %v1418 = vunpack.c.l.b16 %v394
      %v1419 = vunpack.c.l.b16 %v395
      %v1420 = vunpack.c.l.b16 %v396
      %v1421 = vunpack.c.l.b16 %v397
      %v1422 = vunpack.c.l.b16 %v398
      %v1423 = vunpack.c.l.b16 %v399
      %v1424 = vunpack.c.l.b16 %v400
      %v1425 = vunpack.c.l.b16 %v401
      %v1426 = vunpack.c.l.b16 %v402
      %v1427 = vunpack.c.l.b16 %v403
      %v1428 = vunpack.c.l.b16 %v404
      %v1429 = vunpack.c.l.b16 %v405
      %v1430 = vunpack.c.l.b16 %v406
      %v1431 = vunpack.c.l.b16 %v407
      %v1432 = vunpack.c.l.b16 %v408
      %v1433 = vunpack.c.l.b16 %v409
      %v1434 = vunpack.c.l.b16 %v410
      %v1435 = vunpack.c.l.b16 %v411
      %v1436 = vunpack.c.l.b16 %v412
      %v1437 = vunpack.c.l.b16 %v413
      %v1438 = vunpack.c.l.b16 %v414
      %v1439 = vunpack.c.l.b16 %v415
      %v1440 = vunpack.c.l.b16 %v416
      %v1441 = vunpack.c.l.b16 %v417
      %v1442 = vunpack.c.l.b16 %v418
      %v1443 = vunpack.c.l.b16 %v419
      %v1444 = vunpack.c.l.b16 %v420
      %v1445 = vunpack.c.l.b16 %v421
      %v1446 = vunpack.c.l.b16 %v422
      %v1447 = vunpack.c.l.b16 %v423
      %v1448 = vunpack.c.l.b16 %v424
      %v1449 = vunpack.c.l.b16 %v425
      %v1450 = vunpack.c.l.b16 %v426
      %v1451 = vunpack.c.l.b16 %v427
      %v1452 = vunpack.c.l.b16 %v428
      %v1453 = vunpack.c.l.b16 %v429
      %v1454 = vunpack.c.l.b16 %v430
      %v1455 = vunpack.c.l.b16 %v431
      %v1456 = vunpack.c.l.b16 %v432
      %v1457 = vunpack.c.l.b16 %v433
      %v1458 = vunpack.c.l.b16 %v434
      %v1459 = vunpack.c.l.b16 %v435
      %v1460 = vunpack.c.l.b16 %v436
      %v1461 = vunpack.c.l.b16 %v437
      %v1462 = vunpack.c.l.b16 %v438
      %v1463 = vunpack.c.l.b16 %v439
      %v1464 = vunpack.c.l.b16 %v440
      %v1465 = vunpack.c.l.b16 %v441
      %v1466 = vunpack.c.l.b16 %v442
      %v1467 = vunpack.c.l.b16 %v443
      %v1468 = vunpack.c.l.b16 %v444
      %v1469 = vunpack.c.l.b16 %v445
      %v1470 = vunpack.c.l.b16 %v446
      %v1471 = vunpack.c.l.b16 %v447
      %v1472 = vunpack.c.l.b16 %v448
      %v1473 = vunpack.c.l.b16 %v449
      %v1474 = vunpack.c.l.b16 %v450
      %v1475 = vunpack.c.l.b16 %v451
      %v1476 = vunpack.c.l.b16 %v452
      %v1477 = vunpack.c.l.b16 %v453
      %v1478 = vunpack.c.l.b16 %v454
      %v1479 = vunpack.c.l.b16 %v455
      %v1480 = vunpack.c.l.b16 %v456
      %v1481 = vunpack.c.l.b16 %v457
      %v1482 = vunpack.c.l.b16 %v458
      %v1483 = vunpack.c.l.b16 %v459
      %v1484 = vunpack.c.l.b16 %v460
      %v1485 = vunpack.c.l.b16 %v461
      %v1486 = vunpack.c.l.b16 %v462
      %v1487 = vunpack.c.l.b16 %v463
      %v1488 = vunpack.c.l.b16 %v464
      %v1489 = vunpack.c.l.b16 %v465
      %v1490 = vunpack.c.l.b16 %v466
      %v1491 = vunpack.c.l.b16 %v467
      %v1492 = vunpack.c.l.b16 %v468
      %v1493 = vunpack.c.l.b16 %v469
      %v1494 = vunpack.c.l.b16 %v470
      %v1495 = vunpack.c.l.b16 %v471
      %v1496 = vunpack.c.l.b16 %v472
      %v1497 = vunpack.c.l.b16 %v473
      %v1498 = vunpack.c.l.b16 %v474
      %v1499 = vunpack.c.l.b16 %v475
      %v1500 = vunpack.c.l.b16 %v476
      %v1501 = vunpack.c.l.b16 %v477
      %v1502 = vunpack.c.l.b16 %v478
      %v1503 = vunpack.c.l.b16 %v479
      %v1504 = vunpack.c.l.b16 %v480
      %v1505 = vunpack.c.l.b16 %v481
      %v1506 = vunpack.c.l.b16 %v482
      %v1507 = vunpack.c.l.b16 %v483
      %v1508 = vunpack.c.l.b16 %v484
      %v1509 = vunpack.c.l.b16 %v485
      %v1510 = vpack.c.b16 %v1367, %v1366
      %v1511 = vpack.c.b16 %v1369, %v1368
      %v1512 = vpack.c.b16 %v1371, %v1370
      %v1513 = vpack.c.b16 %v1373, %v1372
      %v1514 = vpack.c.b16 %v1375, %v1374
      %v1515 = vpack.c.b16 %v1377, %v1376
      %v1516 = vpack.c.b16 %v1379, %v1378
      %v1517 = vpack.c.b16 %v1381, %v1380
      %v1518 = vpack.c.b16 %v1383, %v1382
      %v1519 = vpack.c.b16 %v1385, %v1384
      %v1520 = vpack.c.b16 %v1387, %v1386
      %v1521 = vpack.c.b16 %v1389, %v1388
      %v1522 = vpack.c.b16 %v1391, %v1390
      %v1523 = vpack.c.b16 %v1393, %v1392
      %v1524 = vpack.c.b16 %v1395, %v1394
      %v1525 = vpack.c.b16 %v1397, %v1396
      %v1526 = vpack.c.b16 %v1399, %v1398
      %v1527 = vpack.c.b16 %v1401, %v1400
      %v1528 = vpack.c.b16 %v1403, %v1402
      %v1529 = vpack.c.b16 %v1405, %v1404
      %v1530 = vpack.c.b16 %v1407, %v1406
      %v1531 = vpack.c.b16 %v1409, %v1408
      %v1532 = vpack.c.b16 %v1411, %v1410
      %v1533 = vpack.c.b16 %v1413, %v1412
      %v1534 = vpack.c.b16 %v1415, %v1414
      %v1535 = vpack.c.b16 %v1417, %v1416
      %v1536 = vpack.c.b16 %v1419, %v1418
      %v1537 = vpack.c.b16 %v1421, %v1420
      %v1538 = vpack.c.b16 %v1423, %v1422
      %v1539 = vpack.c.b16 %v1425, %v1424
      %v1540 = vpack.c.b16 %v1427, %v1426
      %v1541 = vpack.c.b16 %v1429, %v1428
      %v1542 = vpack.c.b16 %v1431, %v1430
      %v1543 = vpack.c.b16 %v1433, %v1432
      %v1544 = vpack.c.b16 %v1435, %v1434
      %v1545 = vpack.c.b16 %v1437, %v1436
      %v1546 = vpack.c.b16 %v1439, %v1438
      %v1547 = vpack.c.b16 %v1441, %v1440
      %v1548 = vpack.c.b16 %v1443, %v1442
      %v1549 = vpack.c.b16 %v1445, %v1444
      %v1550 = vpack.c.b16 %v1447, %v1446
      %v1551 = vpack.c.b16 %v1449, %v1448
      %v1552 = vpack.c.b16 %v1451, %v1450
      %v1553 = vpack.c.b16 %v1453, %v1452
      %v1554 = vpack.c.b16 %v1455, %v1454
      %v1555 = vpack.c.b16 %v1457, %v1456
      %v1556 = vpack.c.b16 %v1459, %v1458
      %v1557 = vpack.c.b16 %v1461, %v1460
      %v1558 = vpack.c.b16 %v1463, %v1462
      %v1559 = vpack.c.b16 %v1465, %v1464
      %v1560 = vpack.c.b16 %v1467, %v1466
      %v1561 = vpack.c.b16 %v1469, %v1468
      %v1562 = vpack.c.b16 %v1471, %v1470
      %v1563 = vpack.c.b16 %v1473, %v1472
      %v1564 = vpack.c.b16 %v1475, %v1474
      %v1565 = vpack.c.b16 %v1477, %v1476
      %v1566 = vpack.c.b16 %v1479, %v1478
      %v1567 = vpack.c.b16 %v1481, %v1480
      %v1568 = vpack.c.b16 %v1483, %v1482
      %v1569 = vpack.c.b16 %v1485, %v1484
      %v1570 = vpack.c.b16 %v1487, %v1486
      %v1571 = vpack.c.b16 %v1489, %v1488
      %v1572 = vpack.c.b16 %v1491, %v1490
      %v1573 = vpack.c.b16 %v1493, %v1492
      %v1574 = vpack.c.b16 %v1495, %v1494
      %v1575 = vpack.c.b16 %v1497, %v1496
      %v1576 = vpack.c.b16 %v1499, %v1498
      %v1577 = vpack.c.b16 %v1501, %v1500
      %v1578 = vpack.c.b16 %v1503, %v1502
      %v1579 = vpack.c.b16 %v1505, %v1504
      %v1580 = vpack.c.b16 %v1507, %v1506
      %v1581 = vpack.c.b16 %v1509, %v1508
      %1654 = vmatprep.subr.bf16.mxu0 0
      %1655 = vmatpush1.bf16.msra.mxu0 %v1510
      %1656 = vmatprep.subr.bf16.mxu0 0
      %1657 = vmatpush1.bf16.msra.mxu0 %v1511
      %1658 = vmatprep.subr.bf16.mxu0 0
      %1659 = vmatpush1.bf16.msra.mxu0 %v1512
      %1660 = vmatprep.subr.bf16.mxu0 0
      %1661 = vmatpush1.bf16.msra.mxu0 %v1513
      %1662 = vmatprep.subr.bf16.mxu0 0
      %1663 = vmatpush1.bf16.msra.mxu0 %v1514
      %1664 = vmatprep.subr.bf16.mxu0 0
      %1665 = vmatpush1.bf16.msra.mxu0 %v1515
      %1666 = vmatprep.subr.bf16.mxu0 0
      %1667 = vmatpush1.bf16.msra.mxu0 %v1516
      %1668 = vmatprep.subr.bf16.mxu0 0
      %1669 = vmatpush1.bf16.msra.mxu0 %v1517
      %1670 = vmatprep.subr.bf16.mxu0 0
      %1671 = vmatpush1.bf16.msra.mxu0 %v1518
      %1672 = vmatprep.subr.bf16.mxu0 0
      %1673 = vmatpush1.bf16.msra.mxu0 %v1519
      %1674 = vmatprep.subr.bf16.mxu0 0
      %1675 = vmatpush1.bf16.msra.mxu0 %v1520
      %1676 = vmatprep.subr.bf16.mxu0 0
      %1677 = vmatpush1.bf16.msra.mxu0 %v1521
      %1678 = vmatprep.subr.bf16.mxu0 0
      %1679 = vmatpush1.bf16.msra.mxu0 %v1522
      %1680 = vmatprep.subr.bf16.mxu0 0
      %1681 = vmatpush1.bf16.msra.mxu0 %v1523
      %1682 = vmatprep.subr.bf16.mxu0 0
      %1683 = vmatpush1.bf16.msra.mxu0 %v1524
      %1684 = vmatprep.subr.bf16.mxu0 0
      %1685 = vmatpush1.bf16.msra.mxu0 %v1525
      %1686 = vmatprep.mubr.bf16.mxu0 %v935
      %1687 = vmatmul.mubr.bf16.gmra.mrb[0].mxu0 %v934
      %v1688 = vpop.f32.mrb[0].mxu0
      %v1689 = vadd.f32 0.0, %v1688
      %v1690 = vpop.f32.mrb[0].mxu0
      %v1691 = vpop.f32.mrb[0].mxu0
      %v1692 = vadd.f32 0.0, %v1691
      %v1693 = vpop.f32.mrb[0].mxu0
      %1694 = vmatprep.mubr.bf16.mxu0 %v944
      %1695 = vmatmul.mubr.bf16.gmra.mrb[0].mxu0 %v943
      %v1696 = vpop.f32.mrb[0].mxu0
      %v1697 = vadd.f32 0.0, %v1696
      %v1698 = vpop.f32.mrb[0].mxu0
      %v1699 = vpop.f32.mrb[0].mxu0
      %v1700 = vadd.f32 0.0, %v1699
      %v1701 = vpop.f32.mrb[0].mxu0
      %1702 = vmatprep.mubr.bf16.mxu0 %v953
      %1703 = vmatmul.mubr.bf16.gmra.mrb[0].mxu0 %v952
      %v1704 = vpop.f32.mrb[0].mxu0
      %v1705 = vadd.f32 0.0, %v1704
      %v1706 = vpop.f32.mrb[0].mxu0
      %v1707 = vpop.f32.mrb[0].mxu0
      %v1708 = vadd.f32 0.0, %v1707
      %v1709 = vpop.f32.mrb[0].mxu0
      %1710 = vmatprep.mubr.bf16.mxu0 %v962
      %1711 = vmatmul.mubr.bf16.gmra.mrb[0].mxu0 %v961
      %v1712 = vpop.f32.mrb[0].mxu0
      %v1713 = vadd.f32 0.0, %v1712
      %v1714 = vpop.f32.mrb[0].mxu0
      %v1715 = vpop.f32.mrb[0].mxu0
      %v1716 = vadd.f32 0.0, %v1715
      %v1717 = vpop.f32.mrb[0].mxu0
      %1718 = vmatprep.mubr.bf16.mxu0 %v971
      %1719 = vmatmul.mubr.bf16.gmra.mrb[0].mxu0 %v970
      %v1720 = vpop.f32.mrb[0].mxu0
      %v1721 = vadd.f32 0.0, %v1720
      %v1722 = vpop.f32.mrb[0].mxu0
      %v1723 = vpop.f32.mrb[0].mxu0
      %v1724 = vadd.f32 0.0, %v1723
      %v1725 = vpop.f32.mrb[0].mxu0
      %1726 = vmatprep.mubr.bf16.mxu0 %v980
      %1727 = vmatmul.mubr.bf16.gmra.mrb[0].mxu0 %v979
      %v1728 = vpop.f32.mrb[0].mxu0
      %v1729 = vadd.f32 0.0, %v1728
      %v1730 = vpop.f32.mrb[0].mxu0
      %v1731 = vpop.f32.mrb[0].mxu0
      %v1732 = vadd.f32 0.0, %v1731
      %v1733 = vpop.f32.mrb[0].mxu0
      %1734 = vmatprep.mubr.bf16.mxu0 %v989
      %1735 = vmatmul.mubr.bf16.gmra.mrb[0].mxu0 %v988
      %v1736 = vpop.f32.mrb[0].mxu0
      %v1737 = vadd.f32 0.0, %v1736
      %v1738 = vpop.f32.mrb[0].mxu0
      %v1739 = vpop.f32.mrb[0].mxu0
      %v1740 = vadd.f32 0.0, %v1739
      %v1741 = vpop.f32.mrb[0].mxu0
      %1742 = vmatprep.mubr.bf16.mxu0 %v998
      %1743 = vmatmul.mubr.bf16.gmra.mrb[0].mxu0 %v997
      %v1744 = vpop.f32.mrb[0].mxu0
      %v1745 = vadd.f32 0.0, %v1744
      %v1746 = vpop.f32.mrb[0].mxu0
      %v1747 = vpop.f32.mrb[0].mxu0
      %v1748 = vadd.f32 0.0, %v1747
      %v1749 = vpop.f32.mrb[0].mxu0
      %1750 = vmatprep.mubr.bf16.mxu0 %v1007
      %1751 = vmatmul.mubr.bf16.gmra.mrb[0].mxu0 %v1006
      %v1752 = vpop.f32.mrb[0].mxu0
      %v1753 = vadd.f32 0.0, %v1752
      %v1754 = vpop.f32.mrb[0].mxu0
      %v1755 = vpop.f32.mrb[0].mxu0
      %v1756 = vadd.f32 0.0, %v1755
      %v1757 = vpop.f32.mrb[0].mxu0
      %1758 = vmatprep.mubr.bf16.mxu0 %v1016
      %1759 = vmatmul.mubr.bf16.gmra.mrb[0].mxu0 %v1015
      %v1760 = vpop.f32.mrb[0].mxu0
      %v1761 = vadd.f32 0.0, %v1760
      %v1762 = vpop.f32.mrb[0].mxu0
      %v1763 = vpop.f32.mrb[0].mxu0
      %v1764 = vadd.f32 0.0, %v1763
      %v1765 = vpop.f32.mrb[0].mxu0
      %1766 = vmatprep.mubr.bf16.mxu0 %v1025
      %1767 = vmatmul.mubr.bf16.gmra.mrb[0].mxu0 %v1024
      %v1768 = vpop.f32.mrb[0].mxu0
      %v1769 = vadd.f32 0.0, %v1768
      %v1770 = vpop.f32.mrb[0].mxu0
      %v1771 = vpop.f32.mrb[0].mxu0
      %v1772 = vadd.f32 0.0, %v1771
      %v1773 = vpop.f32.mrb[0].mxu0
      %1774 = vmatprep.mubr.bf16.mxu0 %v1034
      %1775 = vmatmul.mubr.bf16.gmra.mrb[0].mxu0 %v1033
      %v1776 = vpop.f32.mrb[0].mxu0
      %v1777 = vadd.f32 0.0, %v1776
      %v1778 = vpop.f32.mrb[0].mxu0
      %v1779 = vpop.f32.mrb[0].mxu0
      %v1780 = vadd.f32 0.0, %v1779
      %v1781 = vpop.f32.mrb[0].mxu0
      %1782 = vmatprep.mubr.bf16.mxu0 %v1043
      %1783 = vmatmul.mubr.bf16.gmra.mrb[0].mxu0 %v1042
      %v1784 = vpop.f32.mrb[0].mxu0
      %v1785 = vadd.f32 0.0, %v1784
      %v1786 = vpop.f32.mrb[0].mxu0
      %v1787 = vpop.f32.mrb[0].mxu0
      %v1788 = vadd.f32 0.0, %v1787
      %v1789 = vpop.f32.mrb[0].mxu0
      %1790 = vmatprep.mubr.bf16.mxu0 %v1052
      %1791 = vmatmul.mubr.bf16.gmra.mrb[0].mxu0 %v1051
      %v1792 = vpop.f32.mrb[0].mxu0
      %v1793 = vadd.f32 0.0, %v1792
      %v1794 = vpop.f32.mrb[0].mxu0
      %v1795 = vpop.f32.mrb[0].mxu0
      %v1796 = vadd.f32 0.0, %v1795
      %v1797 = vpop.f32.mrb[0].mxu0
      %1798 = vmatprep.mubr.bf16.mxu0 %v1061
      %1799 = vmatmul.mubr.bf16.gmra.mrb[0].mxu0 %v1060
      %v1800 = vpop.f32.mrb[0].mxu0
      %v1801 = vadd.f32 0.0, %v1800
      %v1802 = vpop.f32.mrb[0].mxu0
      %v1803 = vpop.f32.mrb[0].mxu0
      %v1804 = vadd.f32 0.0, %v1803
      %v1805 = vpop.f32.mrb[0].mxu0
      %1806 = vmatprep.mubr.bf16.mxu0 %v1070
      %1807 = vmatmul.mubr.bf16.gmra.mrb[0].mxu0 %v1069
      %v1808 = vpop.f32.mrb[0].mxu0
      %v1809 = vadd.f32 0.0, %v1808
      %v1810 = vpop.f32.mrb[0].mxu0
      %v1811 = vpop.f32.mrb[0].mxu0
      %v1812 = vadd.f32 0.0, %v1811
      %v1813 = vpop.f32.mrb[0].mxu0
      %1814 = vdwg.mxu0
      %1815 = vmatprep.subr.bf16.mxu0 0
      %1816 = vmatpush1.bf16.msra.mxu0 %v1526
      %1817 = vmatprep.subr.bf16.mxu0 0
      %1818 = vmatpush1.bf16.msra.mxu0 %v1527
      %1819 = vmatprep.subr.bf16.mxu0 0
      %1820 = vmatpush1.bf16.msra.mxu0 %v1528
      %1821 = vmatprep.subr.bf16.mxu0 0
      %1822 = vmatpush1.bf16.msra.mxu0 %v1529
      %1823 = vmatprep.subr.bf16.mxu0 0
      %1824 = vmatpush1.bf16.msra.mxu0 %v1530
      %1825 = vmatprep.subr.bf16.mxu0 0
      %1826 = vmatpush1.bf16.msra.mxu0 %v1531
      %1827 = vmatprep.subr.bf16.mxu0 0
      %1828 = vmatpush1.bf16.msra.mxu0 %v1532
      %1829 = vmatprep.subr.bf16.mxu0 0
      %1830 = vmatpush1.bf16.msra.mxu0 %v1533
      %1831 = vmatprep.subr.bf16.mxu0 0
      %1832 = vmatpush1.bf16.msra.mxu0 %v1534
      %1833 = vmatprep.subr.bf16.mxu0 0
      %1834 = vmatpush1.bf16.msra.mxu0 %v1535
      %1835 = vmatprep.subr.bf16.mxu0 0
      %1836 = vmatpush1.bf16.msra.mxu0 %v1536
      %1837 = vmatprep.subr.bf16.mxu0 0
      %1838 = vmatpush1.bf16.msra.mxu0 %v1537
      %1839 = vmatprep.subr.bf16.mxu0 0
      %1840 = vmatpush1.bf16.msra.mxu0 %v1538
      %1841 = vmatprep.subr.bf16.mxu0 0
      %1842 = vmatpush1.bf16.msra.mxu0 %v1539
      %1843 = vmatprep.subr.bf16.mxu0 0
      %1844 = vmatpush1.bf16.msra.mxu0 %v1540
      %1845 = vmatprep.subr.bf16.mxu0 0
      %1846 = vmatpush1.bf16.msra.mxu0 %v1541
      %1847 = vmatprep.mubr.bf16.mxu0 %v937
      %1848 = vmatmul.mubr.bf16.gmra.mrb[0].mxu0 %v936
      %v1849 = vpop.f32.mrb[0].mxu0
      %v1850 = vadd.f32 %v1689, %v1849
      %v1851 = vpop.f32.mrb[0].mxu0
      %v1852 = vpop.f32.mrb[0].mxu0
      %v1853 = vadd.f32 %v1692, %v1852
      %v1854 = vpop.f32.mrb[0].mxu0
      %1855 = vmatprep.mubr.bf16.mxu0 %v946
      %1856 = vmatmul.mubr.bf16.gmra.mrb[0].mxu0 %v945
      %v1857 = vpop.f32.mrb[0].mxu0
      %v1858 = vadd.f32 %v1697, %v1857
      %v1859 = vpop.f32.mrb[0].mxu0
      %v1860 = vpop.f32.mrb[0].mxu0
      %v1861 = vadd.f32 %v1700, %v1860
      %v1862 = vpop.f32.mrb[0].mxu0
      %1863 = vmatprep.mubr.bf16.mxu0 %v955
      %1864 = vmatmul.mubr.bf16.gmra.mrb[0].mxu0 %v954
      %v1865 = vpop.f32.mrb[0].mxu0
      %v1866 = vadd.f32 %v1705, %v1865
      %v1867 = vpop.f32.mrb[0].mxu0
      %v1868 = vpop.f32.mrb[0].mxu0
      %v1869 = vadd.f32 %v1708, %v1868
      %v1870 = vpop.f32.mrb[0].mxu0
      %1871 = vmatprep.mubr.bf16.mxu0 %v964
      %1872 = vmatmul.mubr.bf16.gmra.mrb[0].mxu0 %v963
      %v1873 = vpop.f32.mrb[0].mxu0
      %v1874 = vadd.f32 %v1713, %v1873
      %v1875 = vpop.f32.mrb[0].mxu0
      %v1876 = vpop.f32.mrb[0].mxu0
      %v1877 = vadd.f32 %v1716, %v1876
      %v1878 = vpop.f32.mrb[0].mxu0
      %1879 = vmatprep.mubr.bf16.mxu0 %v973
      %1880 = vmatmul.mubr.bf16.gmra.mrb[0].mxu0 %v972
      %v1881 = vpop.f32.mrb[0].mxu0
      %v1882 = vadd.f32 %v1721, %v1881
      %v1883 = vpop.f32.mrb[0].mxu0
      %v1884 = vpop.f32.mrb[0].mxu0
      %v1885 = vadd.f32 %v1724, %v1884
      %v1886 = vpop.f32.mrb[0].mxu0
      %1887 = vmatprep.mubr.bf16.mxu0 %v982
      %1888 = vmatmul.mubr.bf16.gmra.mrb[0].mxu0 %v981
      %v1889 = vpop.f32.mrb[0].mxu0
      %v1890 = vadd.f32 %v1729, %v1889
      %v1891 = vpop.f32.mrb[0].mxu0
      %v1892 = vpop.f32.mrb[0].mxu0
      %v1893 = vadd.f32 %v1732, %v1892
      %v1894 = vpop.f32.mrb[0].mxu0
      %1895 = vmatprep.mubr.bf16.mxu0 %v991
      %1896 = vmatmul.mubr.bf16.gmra.mrb[0].mxu0 %v990
      %v1897 = vpop.f32.mrb[0].mxu0
      %v1898 = vadd.f32 %v1737, %v1897
      %v1899 = vpop.f32.mrb[0].mxu0
      %v1900 = vpop.f32.mrb[0].mxu0
      %v1901 = vadd.f32 %v1740, %v1900
      %v1902 = vpop.f32.mrb[0].mxu0
      %1903 = vmatprep.mubr.bf16.mxu0 %v1000
      %1904 = vmatmul.mubr.bf16.gmra.mrb[0].mxu0 %v999
      %v1905 = vpop.f32.mrb[0].mxu0
      %v1906 = vadd.f32 %v1745, %v1905
      %v1907 = vpop.f32.mrb[0].mxu0
      %v1908 = vpop.f32.mrb[0].mxu0
      %v1909 = vadd.f32 %v1748, %v1908
      %v1910 = vpop.f32.mrb[0].mxu0
      %1911 = vmatprep.mubr.bf16.mxu0 %v1009
      %1912 = vmatmul.mubr.bf16.gmra.mrb[0].mxu0 %v1008
      %v1913 = vpop.f32.mrb[0].mxu0
      %v1914 = vadd.f32 %v1753, %v1913
      %v1915 = vpop.f32.mrb[0].mxu0
      %v1916 = vpop.f32.mrb[0].mxu0
      %v1917 = vadd.f32 %v1756, %v1916
      %v1918 = vpop.f32.mrb[0].mxu0
      %1919 = vmatprep.mubr.bf16.mxu0 %v1018
      %1920 = vmatmul.mubr.bf16.gmra.mrb[0].mxu0 %v1017
      %v1921 = vpop.f32.mrb[0].mxu0
      %v1922 = vadd.f32 %v1761, %v1921
      %v1923 = vpop.f32.mrb[0].mxu0
      %v1924 = vpop.f32.mrb[0].mxu0
      %v1925 = vadd.f32 %v1764, %v1924
      %v1926 = vpop.f32.mrb[0].mxu0
      %1927 = vmatprep.mubr.bf16.mxu0 %v1027
      %1928 = vmatmul.mubr.bf16.gmra.mrb[0].mxu0 %v1026
      %v1929 = vpop.f32.mrb[0].mxu0
      %v1930 = vadd.f32 %v1769, %v1929
      %v1931 = vpop.f32.mrb[0].mxu0
      %v1932 = vpop.f32.mrb[0].mxu0
      %v1933 = vadd.f32 %v1772, %v1932
      %v1934 = vpop.f32.mrb[0].mxu0
      %1935 = vmatprep.mubr.bf16.mxu0 %v1036
      %1936 = vmatmul.mubr.bf16.gmra.mrb[0].mxu0 %v1035
      %v1937 = vpop.f32.mrb[0].mxu0
      %v1938 = vadd.f32 %v1777, %v1937
      %v1939 = vpop.f32.mrb[0].mxu0
      %v1940 = vpop.f32.mrb[0].mxu0
      %v1941 = vadd.f32 %v1780, %v1940
      %v1942 = vpop.f32.mrb[0].mxu0
      %1943 = vmatprep.mubr.bf16.mxu0 %v1045
      %1944 = vmatmul.mubr.bf16.gmra.mrb[0].mxu0 %v1044
      %v1945 = vpop.f32.mrb[0].mxu0
      %v1946 = vadd.f32 %v1785, %v1945
      %v1947 = vpop.f32.mrb[0].mxu0
      %v1948 = vpop.f32.mrb[0].mxu0
      %v1949 = vadd.f32 %v1788, %v1948
      %v1950 = vpop.f32.mrb[0].mxu0
      %1951 = vmatprep.mubr.bf16.mxu0 %v1054
      %1952 = vmatmul.mubr.bf16.gmra.mrb[0].mxu0 %v1053
      %v1953 = vpop.f32.mrb[0].mxu0
      %v1954 = vadd.f32 %v1793, %v1953
      %v1955 = vpop.f32.mrb[0].mxu0
      %v1956 = vpop.f32.mrb[0].mxu0
      %v1957 = vadd.f32 %v1796, %v1956
      %v1958 = vpop.f32.mrb[0].mxu0
      %1959 = vmatprep.mubr.bf16.mxu0 %v1063
      %1960 = vmatmul.mubr.bf16.gmra.mrb[0].mxu0 %v1062
      %v1961 = vpop.f32.mrb[0].mxu0
      %v1962 = vadd.f32 %v1801, %v1961
      %v1963 = vpop.f32.mrb[0].mxu0
      %v1964 = vpop.f32.mrb[0].mxu0
      %v1965 = vadd.f32 %v1804, %v1964
      %v1966 = vpop.f32.mrb[0].mxu0
      %1967 = vmatprep.mubr.bf16.mxu0 %v1072
      %1968 = vmatmul.mubr.bf16.gmra.mrb[0].mxu0 %v1071
      %v1969 = vpop.f32.mrb[0].mxu0
      %v1970 = vadd.f32 %v1809, %v1969
      %v1971 = vpop.f32.mrb[0].mxu0
      %v1972 = vpop.f32.mrb[0].mxu0
      %v1973 = vadd.f32 %v1812, %v1972
      %v1974 = vpop.f32.mrb[0].mxu0
      %1975 = vdwg.mxu0
      %1976 = vmatprep.subr.bf16.mxu0 0
      %1977 = vmatpush1.bf16.msra.mxu0 %v1542
      %1978 = vmatprep.subr.bf16.mxu0 0
      %1979 = vmatpush1.bf16.msra.mxu0 %v1543
      %1980 = vmatprep.subr.bf16.mxu0 0
      %1981 = vmatpush1.bf16.msra.mxu0 %v1544
      %1982 = vmatprep.subr.bf16.mxu0 0
      %1983 = vmatpush1.bf16.msra.mxu0 %v1545
      %1984 = vmatprep.subr.bf16.mxu0 0
      %1985 = vmatpush1.bf16.msra.mxu0 %v1546
      %1986 = vmatprep.subr.bf16.mxu0 0
      %1987 = vmatpush1.bf16.msra.mxu0 %v1547
      %1988 = vmatprep.subr.bf16.mxu0 0
      %1989 = vmatpush1.bf16.msra.mxu0 %v1548
      %1990 = vmatprep.subr.bf16.mxu0 0
      %1991 = vmatpush1.bf16.msra.mxu0 %v1549
      %1992 = vmatprep.subr.bf16.mxu0 0
      %1993 = vmatpush1.bf16.msra.mxu0 %v1550
      %1994 = vmatprep.subr.bf16.mxu0 0
      %1995 = vmatpush1.bf16.msra.mxu0 %v1551
      %1996 = vmatprep.subr.bf16.mxu0 0
      %1997 = vmatpush1.bf16.msra.mxu0 %v1552
      %1998 = vmatprep.subr.bf16.mxu0 0
      %1999 = vmatpush1.bf16.msra.mxu0 %v1553
      %2000 = vmatprep.subr.bf16.mxu0 0
      %2001 = vmatpush1.bf16.msra.mxu0 %v1554
      %2002 = vmatprep.subr.bf16.mxu0 0
      %2003 = vmatpush1.bf16.msra.mxu0 %v1555
      %2004 = vmatprep.subr.bf16.mxu0 0
      %2005 = vmatpush1.bf16.msra.mxu0 %v1556
      %2006 = vmatprep.subr.bf16.mxu0 0
      %2007 = vmatpush1.bf16.msra.mxu0 %v1557
      %2008 = vmatprep.mubr.bf16.mxu0 %v939
      %2009 = vmatmul.mubr.bf16.gmra.mrb[0].mxu0 %v938
      %v2010 = vpop.f32.mrb[0].mxu0
      %v2011 = vadd.f32 %v1850, %v2010
      %v2012 = vpop.f32.mrb[0].mxu0
      %v2013 = vpop.f32.mrb[0].mxu0
      %v2014 = vadd.f32 %v1853, %v2013
      %v2015 = vpop.f32.mrb[0].mxu0
      %2016 = vmatprep.mubr.bf16.mxu0 %v948
      %2017 = vmatmul.mubr.bf16.gmra.mrb[0].mxu0 %v947
      %v2018 = vpop.f32.mrb[0].mxu0
      %v2019 = vadd.f32 %v1858, %v2018
      %v2020 = vpop.f32.mrb[0].mxu0
      %v2021 = vpop.f32.mrb[0].mxu0
      %v2022 = vadd.f32 %v1861, %v2021
      %v2023 = vpop.f32.mrb[0].mxu0
      %2024 = vmatprep.mubr.bf16.mxu0 %v957
      %2025 = vmatmul.mubr.bf16.gmra.mrb[0].mxu0 %v956
      %v2026 = vpop.f32.mrb[0].mxu0
      %v2027 = vadd.f32 %v1866, %v2026
      %v2028 = vpop.f32.mrb[0].mxu0
      %v2029 = vpop.f32.mrb[0].mxu0
      %v2030 = vadd.f32 %v1869, %v2029
      %v2031 = vpop.f32.mrb[0].mxu0
      %2032 = vmatprep.mubr.bf16.mxu0 %v966
      %2033 = vmatmul.mubr.bf16.gmra.mrb[0].mxu0 %v965
      %v2034 = vpop.f32.mrb[0].mxu0
      %v2035 = vadd.f32 %v1874, %v2034
      %v2036 = vpop.f32.mrb[0].mxu0
      %v2037 = vpop.f32.mrb[0].mxu0
      %v2038 = vadd.f32 %v1877, %v2037
      %v2039 = vpop.f32.mrb[0].mxu0
      %2040 = vmatprep.mubr.bf16.mxu0 %v975
      %2041 = vmatmul.mubr.bf16.gmra.mrb[0].mxu0 %v974
      %v2042 = vpop.f32.mrb[0].mxu0
      %v2043 = vadd.f32 %v1882, %v2042
      %v2044 = vpop.f32.mrb[0].mxu0
      %v2045 = vpop.f32.mrb[0].mxu0
      %v2046 = vadd.f32 %v1885, %v2045
      %v2047 = vpop.f32.mrb[0].mxu0
      %2048 = vmatprep.mubr.bf16.mxu0 %v984
      %2049 = vmatmul.mubr.bf16.gmra.mrb[0].mxu0 %v983
      %v2050 = vpop.f32.mrb[0].mxu0
      %v2051 = vadd.f32 %v1890, %v2050
      %v2052 = vpop.f32.mrb[0].mxu0
      %v2053 = vpop.f32.mrb[0].mxu0
      %v2054 = vadd.f32 %v1893, %v2053
      %v2055 = vpop.f32.mrb[0].mxu0
      %2056 = vmatprep.mubr.bf16.mxu0 %v993
      %2057 = vmatmul.mubr.bf16.gmra.mrb[0].mxu0 %v992
      %v2058 = vpop.f32.mrb[0].mxu0
      %v2059 = vadd.f32 %v1898, %v2058
      %v2060 = vpop.f32.mrb[0].mxu0
      %v2061 = vpop.f32.mrb[0].mxu0
      %v2062 = vadd.f32 %v1901, %v2061
      %v2063 = vpop.f32.mrb[0].mxu0
      %2064 = vmatprep.mubr.bf16.mxu0 %v1002
      %2065 = vmatmul.mubr.bf16.gmra.mrb[0].mxu0 %v1001
      %v2066 = vpop.f32.mrb[0].mxu0
      %v2067 = vadd.f32 %v1906, %v2066
      %v2068 = vpop.f32.mrb[0].mxu0
      %v2069 = vpop.f32.mrb[0].mxu0
      %v2070 = vadd.f32 %v1909, %v2069
      %v2071 = vpop.f32.mrb[0].mxu0
      %2072 = vmatprep.mubr.bf16.mxu0 %v1011
      %2073 = vmatmul.mubr.bf16.gmra.mrb[0].mxu0 %v1010
      %v2074 = vpop.f32.mrb[0].mxu0
      %v2075 = vadd.f32 %v1914, %v2074
      %v2076 = vpop.f32.mrb[0].mxu0
      %v2077 = vpop.f32.mrb[0].mxu0
      %v2078 = vadd.f32 %v1917, %v2077
      %v2079 = vpop.f32.mrb[0].mxu0
      %2080 = vmatprep.mubr.bf16.mxu0 %v1020
      %2081 = vmatmul.mubr.bf16.gmra.mrb[0].mxu0 %v1019
      %v2082 = vpop.f32.mrb[0].mxu0
      %v2083 = vadd.f32 %v1922, %v2082
      %v2084 = vpop.f32.mrb[0].mxu0
      %v2085 = vpop.f32.mrb[0].mxu0
      %v2086 = vadd.f32 %v1925, %v2085
      %v2087 = vpop.f32.mrb[0].mxu0
      %2088 = vmatprep.mubr.bf16.mxu0 %v1029
      %2089 = vmatmul.mubr.bf16.gmra.mrb[0].mxu0 %v1028
      %v2090 = vpop.f32.mrb[0].mxu0
      %v2091 = vadd.f32 %v1930, %v2090
      %v2092 = vpop.f32.mrb[0].mxu0
      %v2093 = vpop.f32.mrb[0].mxu0
      %v2094 = vadd.f32 %v1933, %v2093
      %v2095 = vpop.f32.mrb[0].mxu0
      %2096 = vmatprep.mubr.bf16.mxu0 %v1038
      %2097 = vmatmul.mubr.bf16.gmra.mrb[0].mxu0 %v1037
      %v2098 = vpop.f32.mrb[0].mxu0
      %v2099 = vadd.f32 %v1938, %v2098
      %v2100 = vpop.f32.mrb[0].mxu0
      %v2101 = vpop.f32.mrb[0].mxu0
      %v2102 = vadd.f32 %v1941, %v2101
      %v2103 = vpop.f32.mrb[0].mxu0
      %2104 = vmatprep.mubr.bf16.mxu0 %v1047
      %2105 = vmatmul.mubr.bf16.gmra.mrb[0].mxu0 %v1046
      %v2106 = vpop.f32.mrb[0].mxu0
      %v2107 = vadd.f32 %v1946, %v2106
      %v2108 = vpop.f32.mrb[0].mxu0
      %v2109 = vpop.f32.mrb[0].mxu0
      %v2110 = vadd.f32 %v1949, %v2109
      %v2111 = vpop.f32.mrb[0].mxu0
      %2112 = vmatprep.mubr.bf16.mxu0 %v1056
      %2113 = vmatmul.mubr.bf16.gmra.mrb[0].mxu0 %v1055
      %v2114 = vpop.f32.mrb[0].mxu0
      %v2115 = vadd.f32 %v1954, %v2114
      %v2116 = vpop.f32.mrb[0].mxu0
      %v2117 = vpop.f32.mrb[0].mxu0
      %v2118 = vadd.f32 %v1957, %v2117
      %v2119 = vpop.f32.mrb[0].mxu0
      %2120 = vmatprep.mubr.bf16.mxu0 %v1065
      %2121 = vmatmul.mubr.bf16.gmra.mrb[0].mxu0 %v1064
      %v2122 = vpop.f32.mrb[0].mxu0
      %v2123 = vadd.f32 %v1962, %v2122
      %v2124 = vpop.f32.mrb[0].mxu0
      %v2125 = vpop.f32.mrb[0].mxu0
      %v2126 = vadd.f32 %v1965, %v2125
      %v2127 = vpop.f32.mrb[0].mxu0
      %2128 = vmatprep.mubr.bf16.mxu0 %v1074
      %2129 = vmatmul.mubr.bf16.gmra.mrb[0].mxu0 %v1073
      %v2130 = vpop.f32.mrb[0].mxu0
      %v2131 = vadd.f32 %v1970, %v2130
      %v2132 = vpop.f32.mrb[0].mxu0
      %v2133 = vpop.f32.mrb[0].mxu0
      %v2134 = vadd.f32 %v1973, %v2133
      %v2135 = vpop.f32.mrb[0].mxu0
      %2136 = vdwg.mxu0
      %2137 = vmatprep.subr.bf16.mxu0 0
      %2138 = vmatpush1.bf16.msra.mxu0 %v1558
      %2139 = vmatprep.subr.bf16.mxu0 0
      %2140 = vmatpush1.bf16.msra.mxu0 %v1559
      %2141 = vmatprep.subr.bf16.mxu0 0
      %2142 = vmatpush1.bf16.msra.mxu0 %v1560
      %2143 = vmatprep.subr.bf16.mxu0 0
      %2144 = vmatpush1.bf16.msra.mxu0 %v1561
      %2145 = vmatprep.subr.bf16.mxu0 0
      %2146 = vmatpush1.bf16.msra.mxu0 %v1562
      %2147 = vmatprep.subr.bf16.mxu0 0
      %2148 = vmatpush1.bf16.msra.mxu0 %v1563
      %2149 = vmatprep.subr.bf16.mxu0 0
      %2150 = vmatpush1.bf16.msra.mxu0 %v1564
      %2151 = vmatprep.subr.bf16.mxu0 0
      %2152 = vmatpush1.bf16.msra.mxu0 %v1565
      %2153 = vmatprep.subr.bf16.mxu0 0
      %2154 = vmatpush1.bf16.msra.mxu0 %v1566
      %2155 = vmatprep.subr.bf16.mxu0 0
      %2156 = vmatpush1.bf16.msra.mxu0 %v1567
      %2157 = vmatprep.subr.bf16.mxu0 0
      %2158 = vmatpush1.bf16.msra.mxu0 %v1568
      %2159 = vmatprep.subr.bf16.mxu0 0
      %2160 = vmatpush1.bf16.msra.mxu0 %v1569
      %2161 = vmatprep.subr.bf16.mxu0 0
      %2162 = vmatpush1.bf16.msra.mxu0 %v1570
      %2163 = vmatprep.subr.bf16.mxu0 0
      %2164 = vmatpush1.bf16.msra.mxu0 %v1571
      %2165 = vmatprep.subr.bf16.mxu0 0
      %2166 = vmatpush1.bf16.msra.mxu0 %v1572
      %2167 = vmatprep.subr.bf16.mxu0 0
      %2168 = vmatpush1.bf16.msra.mxu0 %v1573
      %2169 = vmatprep.mubr.bf16.mxu0 %v941
      %2170 = vmatmul.mubr.bf16.gmra.mrb[0].mxu0 %v940
      %v2171 = vpop.f32.mrb[0].mxu0
      %v2172 = vadd.f32 %v2011, %v2171
      %v2173 = vpop.f32.mrb[0].mxu0
      %v2174 = vpop.f32.mrb[0].mxu0
      %v2175 = vadd.f32 %v2014, %v2174
      %v2176 = vpop.f32.mrb[0].mxu0
      %2177 = vmatprep.mubr.bf16.mxu0 %v950
      %2178 = vmatmul.mubr.bf16.gmra.mrb[0].mxu0 %v949
      %v2179 = vpop.f32.mrb[0].mxu0
      %v2180 = vadd.f32 %v2019, %v2179
      %v2181 = vpop.f32.mrb[0].mxu0
      %v2182 = vpop.f32.mrb[0].mxu0
      %v2183 = vadd.f32 %v2022, %v2182
      %v2184 = vpop.f32.mrb[0].mxu0
      %2185 = vmatprep.mubr.bf16.mxu0 %v959
      %2186 = vmatmul.mubr.bf16.gmra.mrb[0].mxu0 %v958
      %v2187 = vpop.f32.mrb[0].mxu0
      %v2188 = vadd.f32 %v2027, %v2187
      %v2189 = vpop.f32.mrb[0].mxu0
      %v2190 = vpop.f32.mrb[0].mxu0
      %v2191 = vadd.f32 %v2030, %v2190
      %v2192 = vpop.f32.mrb[0].mxu0
      %2193 = vmatprep.mubr.bf16.mxu0 %v968
      %2194 = vmatmul.mubr.bf16.gmra.mrb[0].mxu0 %v967
      %v2195 = vpop.f32.mrb[0].mxu0
      %v2196 = vadd.f32 %v2035, %v2195
      %v2197 = vpop.f32.mrb[0].mxu0
      %v2198 = vpop.f32.mrb[0].mxu0
      %v2199 = vadd.f32 %v2038, %v2198
      %v2200 = vpop.f32.mrb[0].mxu0
      %2201 = vmatprep.mubr.bf16.mxu0 %v977
      %2202 = vmatmul.mubr.bf16.gmra.mrb[0].mxu0 %v976
      %v2203 = vpop.f32.mrb[0].mxu0
      %v2204 = vadd.f32 %v2043, %v2203
      %v2205 = vpop.f32.mrb[0].mxu0
      %v2206 = vpop.f32.mrb[0].mxu0
      %v2207 = vadd.f32 %v2046, %v2206
      %v2208 = vpop.f32.mrb[0].mxu0
      %2209 = vmatprep.mubr.bf16.mxu0 %v986
      %2210 = vmatmul.mubr.bf16.gmra.mrb[0].mxu0 %v985
      %v2211 = vpop.f32.mrb[0].mxu0
      %v2212 = vadd.f32 %v2051, %v2211
      %v2213 = vpop.f32.mrb[0].mxu0
      %v2214 = vpop.f32.mrb[0].mxu0
      %v2215 = vadd.f32 %v2054, %v2214
      %v2216 = vpop.f32.mrb[0].mxu0
      %2217 = vmatprep.mubr.bf16.mxu0 %v995
      %2218 = vmatmul.mubr.bf16.gmra.mrb[0].mxu0 %v994
      %v2219 = vpop.f32.mrb[0].mxu0
      %v2220 = vadd.f32 %v2059, %v2219
      %v2221 = vpop.f32.mrb[0].mxu0
      %v2222 = vpop.f32.mrb[0].mxu0
      %v2223 = vadd.f32 %v2062, %v2222
      %v2224 = vpop.f32.mrb[0].mxu0
      %2225 = vmatprep.mubr.bf16.mxu0 %v1004
      %2226 = vmatmul.mubr.bf16.gmra.mrb[0].mxu0 %v1003
      %v2227 = vpop.f32.mrb[0].mxu0
      %v2228 = vadd.f32 %v2067, %v2227
      %v2229 = vpop.f32.mrb[0].mxu0
      %v2230 = vpop.f32.mrb[0].mxu0
      %v2231 = vadd.f32 %v2070, %v2230
      %v2232 = vpop.f32.mrb[0].mxu0
      %2233 = vmatprep.mubr.bf16.mxu0 %v1013
      %2234 = vmatmul.mubr.bf16.gmra.mrb[0].mxu0 %v1012
      %v2235 = vpop.f32.mrb[0].mxu0
      %v2236 = vadd.f32 %v2075, %v2235
      %v2237 = vpop.f32.mrb[0].mxu0
      %v2238 = vpop.f32.mrb[0].mxu0
      %v2239 = vadd.f32 %v2078, %v2238
      %v2240 = vpop.f32.mrb[0].mxu0
      %2241 = vmatprep.mubr.bf16.mxu0 %v1022
      %2242 = vmatmul.mubr.bf16.gmra.mrb[0].mxu0 %v1021
      %v2243 = vpop.f32.mrb[0].mxu0
      %v2244 = vadd.f32 %v2083, %v2243
      %v2245 = vpop.f32.mrb[0].mxu0
      %v2246 = vpop.f32.mrb[0].mxu0
      %v2247 = vadd.f32 %v2086, %v2246
      %v2248 = vpop.f32.mrb[0].mxu0
      %2249 = vmatprep.mubr.bf16.mxu0 %v1031
      %2250 = vmatmul.mubr.bf16.gmra.mrb[0].mxu0 %v1030
      %v2251 = vpop.f32.mrb[0].mxu0
      %v2252 = vadd.f32 %v2091, %v2251
      %v2253 = vpop.f32.mrb[0].mxu0
      %v2254 = vpop.f32.mrb[0].mxu0
      %v2255 = vadd.f32 %v2094, %v2254
      %v2256 = vpop.f32.mrb[0].mxu0
      %2257 = vmatprep.mubr.bf16.mxu0 %v1040
      %2258 = vmatmul.mubr.bf16.gmra.mrb[0].mxu0 %v1039
      %v2259 = vpop.f32.mrb[0].mxu0
      %v2260 = vadd.f32 %v2099, %v2259
      %v2261 = vpop.f32.mrb[0].mxu0
      %v2262 = vpop.f32.mrb[0].mxu0
      %v2263 = vadd.f32 %v2102, %v2262
      %v2264 = vpop.f32.mrb[0].mxu0
      %2265 = vmatprep.mubr.bf16.mxu0 %v1049
      %2266 = vmatmul.mubr.bf16.gmra.mrb[0].mxu0 %v1048
      %v2267 = vpop.f32.mrb[0].mxu0
      %v2268 = vadd.f32 %v2107, %v2267
      %v2269 = vpop.f32.mrb[0].mxu0
      %v2270 = vpop.f32.mrb[0].mxu0
      %v2271 = vadd.f32 %v2110, %v2270
      %v2272 = vpop.f32.mrb[0].mxu0
      %2273 = vmatprep.mubr.bf16.mxu0 %v1058
      %2274 = vmatmul.mubr.bf16.gmra.mrb[0].mxu0 %v1057
      %v2275 = vpop.f32.mrb[0].mxu0
      %v2276 = vadd.f32 %v2115, %v2275
      %v2277 = vpop.f32.mrb[0].mxu0
      %v2278 = vpop.f32.mrb[0].mxu0
      %v2279 = vadd.f32 %v2118, %v2278
      %v2280 = vpop.f32.mrb[0].mxu0
      %2281 = vmatprep.mubr.bf16.mxu0 %v1067
      %2282 = vmatmul.mubr.bf16.gmra.mrb[0].mxu0 %v1066
      %v2283 = vpop.f32.mrb[0].mxu0
      %v2284 = vadd.f32 %v2123, %v2283
      %v2285 = vpop.f32.mrb[0].mxu0
      %v2286 = vpop.f32.mrb[0].mxu0
      %v2287 = vadd.f32 %v2126, %v2286
      %v2288 = vpop.f32.mrb[0].mxu0
      %2289 = vmatprep.mubr.bf16.mxu0 %v1076
      %2290 = vmatmul.mubr.bf16.gmra.mrb[0].mxu0 %v1075
      %v2291 = vpop.f32.mrb[0].mxu0
      %v2292 = vadd.f32 %v2131, %v2291
      %v2293 = vpop.f32.mrb[0].mxu0
      %v2294 = vpop.f32.mrb[0].mxu0
      %v2295 = vadd.f32 %v2134, %v2294
      %v2296 = vpop.f32.mrb[0].mxu0
      %2297 = vdwg.mxu0
      %2298 = vmatprep.subr.bf16.mxu0 0
      %2299 = vmatpush1.bf16.msra.mxu0 %v1574
      %2300 = vmatprep.subr.bf16.mxu0 0
      %2301 = vmatpush1.bf16.msra.mxu0 %v1575
      %2302 = vmatprep.subr.bf16.mxu0 0
      %2303 = vmatpush1.bf16.msra.mxu0 %v1576
      %2304 = vmatprep.subr.bf16.mxu0 0
      %2305 = vmatpush1.bf16.msra.mxu0 %v1577
      %2306 = vmatprep.subr.bf16.mxu0 0
      %2307 = vmatpush1.bf16.msra.mxu0 %v1578
      %2308 = vmatprep.subr.bf16.mxu0 0
      %2309 = vmatpush1.bf16.msra.mxu0 %v1579
      %2310 = vmatprep.subr.bf16.mxu0 0
      %2311 = vmatpush1.bf16.msra.mxu0 %v1580
      %2312 = vmatprep.subr.bf16.mxu0 0
      %2313 = vmatpush1.bf16.msra.mxu0 %v1581
      %2314 = vmatprep.subr.bf16.mxu0 0
      %2315 = vmatpush1.bf16.msra.mxu0 0
      %2316 = vmatprep.subr.bf16.mxu0 0
      %2317 = vmatpush1.bf16.msra.mxu0 0
      %2318 = vmatprep.subr.bf16.mxu0 0
      %2319 = vmatpush1.bf16.msra.mxu0 0
      %2320 = vmatprep.subr.bf16.mxu0 0
      %2321 = vmatpush1.bf16.msra.mxu0 0
      %2322 = vmatprep.subr.bf16.mxu0 0
      %2323 = vmatpush1.bf16.msra.mxu0 0
      %2324 = vmatprep.subr.bf16.mxu0 0
      %2325 = vmatpush1.bf16.msra.mxu0 0
      %2326 = vmatprep.subr.bf16.mxu0 0
      %2327 = vmatpush1.bf16.msra.mxu0 0
      %2328 = vmatprep.subr.bf16.mxu0 0
      %2329 = vmatpush1.bf16.msra.mxu0 0
      %2330 = vmatprep.mubr.bf16.mxu0 0
      %2331 = vmatmul.mubr.bf16.gmra.mrb[0].mxu0 %v942
      %v2332 = vpop.f32.mrb[0].mxu0
      %v2333 = vadd.f32 %v2172, %v2332
      %v2334 = vpop.f32.mrb[0].mxu0
      %v2335 = vpop.f32.mrb[0].mxu0
      %v2336 = vadd.f32 %v2175, %v2335
      %v2337 = vpop.f32.mrb[0].mxu0
      %2338 = vmatprep.mubr.bf16.mxu0 0
      %2339 = vmatmul.mubr.bf16.gmra.mrb[0].mxu0 %v951
      %v2340 = vpop.f32.mrb[0].mxu0
      %v2341 = vadd.f32 %v2180, %v2340
      %v2342 = vpop.f32.mrb[0].mxu0
      %v2343 = vpop.f32.mrb[0].mxu0
      %v2344 = vadd.f32 %v2183, %v2343
      %v2345 = vpop.f32.mrb[0].mxu0
      %2346 = vmatprep.mubr.bf16.mxu0 0
      %2347 = vmatmul.mubr.bf16.gmra.mrb[0].mxu0 %v960
      %v2348 = vpop.f32.mrb[0].mxu0
      %v2349 = vadd.f32 %v2188, %v2348
      %v2350 = vpop.f32.mrb[0].mxu0
      %v2351 = vpop.f32.mrb[0].mxu0
      %v2352 = vadd.f32 %v2191, %v2351
      %v2353 = vpop.f32.mrb[0].mxu0
      %2354 = vmatprep.mubr.bf16.mxu0 0
      %2355 = vmatmul.mubr.bf16.gmra.mrb[0].mxu0 %v969
      %v2356 = vpop.f32.mrb[0].mxu0
      %v2357 = vadd.f32 %v2196, %v2356
      %v2358 = vpop.f32.mrb[0].mxu0
      %v2359 = vpop.f32.mrb[0].mxu0
      %v2360 = vadd.f32 %v2199, %v2359
      %v2361 = vpop.f32.mrb[0].mxu0
      %2362 = vmatprep.mubr.bf16.mxu0 0
      %2363 = vmatmul.mubr.bf16.gmra.mrb[0].mxu0 %v978
      %v2364 = vpop.f32.mrb[0].mxu0
      %v2365 = vadd.f32 %v2204, %v2364
      %v2366 = vpop.f32.mrb[0].mxu0
      %v2367 = vpop.f32.mrb[0].mxu0
      %v2368 = vadd.f32 %v2207, %v2367
      %v2369 = vpop.f32.mrb[0].mxu0
      %2370 = vmatprep.mubr.bf16.mxu0 0
      %2371 = vmatmul.mubr.bf16.gmra.mrb[0].mxu0 %v987
      %v2372 = vpop.f32.mrb[0].mxu0
      %v2373 = vadd.f32 %v2212, %v2372
      %v2374 = vpop.f32.mrb[0].mxu0
      %v2375 = vpop.f32.mrb[0].mxu0
      %v2376 = vadd.f32 %v2215, %v2375
      %v2377 = vpop.f32.mrb[0].mxu0
      %2378 = vmatprep.mubr.bf16.mxu0 0
      %2379 = vmatmul.mubr.bf16.gmra.mrb[0].mxu0 %v996
      %v2380 = vpop.f32.mrb[0].mxu0
      %v2381 = vadd.f32 %v2220, %v2380
      %v2382 = vpop.f32.mrb[0].mxu0
      %v2383 = vpop.f32.mrb[0].mxu0
      %v2384 = vadd.f32 %v2223, %v2383
      %v2385 = vpop.f32.mrb[0].mxu0
      %2386 = vmatprep.mubr.bf16.mxu0 0
      %2387 = vmatmul.mubr.bf16.gmra.mrb[0].mxu0 %v1005
      %v2388 = vpop.f32.mrb[0].mxu0
      %v2389 = vadd.f32 %v2228, %v2388
      %v2390 = vpop.f32.mrb[0].mxu0
      %v2391 = vpop.f32.mrb[0].mxu0
      %v2392 = vadd.f32 %v2231, %v2391
      %v2393 = vpop.f32.mrb[0].mxu0
      %2394 = vmatprep.mubr.bf16.mxu0 0
      %2395 = vmatmul.mubr.bf16.gmra.mrb[0].mxu0 %v1014
      %v2396 = vpop.f32.mrb[0].mxu0
      %v2397 = vadd.f32 %v2236, %v2396
      %v2398 = vpop.f32.mrb[0].mxu0
      %v2399 = vpop.f32.mrb[0].mxu0
      %v2400 = vadd.f32 %v2239, %v2399
      %v2401 = vpop.f32.mrb[0].mxu0
      %2402 = vmatprep.mubr.bf16.mxu0 0
      %2403 = vmatmul.mubr.bf16.gmra.mrb[0].mxu0 %v1023
      %v2404 = vpop.f32.mrb[0].mxu0
      %v2405 = vadd.f32 %v2244, %v2404
      %v2406 = vpop.f32.mrb[0].mxu0
      %v2407 = vpop.f32.mrb[0].mxu0
      %v2408 = vadd.f32 %v2247, %v2407
      %v2409 = vpop.f32.mrb[0].mxu0
      %2410 = vmatprep.mubr.bf16.mxu0 0
      %2411 = vmatmul.mubr.bf16.gmra.mrb[0].mxu0 %v1032
      %v2412 = vpop.f32.mrb[0].mxu0
      %v2413 = vadd.f32 %v2252, %v2412
      %v2414 = vpop.f32.mrb[0].mxu0
      %v2415 = vpop.f32.mrb[0].mxu0
      %v2416 = vadd.f32 %v2255, %v2415
      %v2417 = vpop.f32.mrb[0].mxu0
      %2418 = vmatprep.mubr.bf16.mxu0 0
      %2419 = vmatmul.mubr.bf16.gmra.mrb[0].mxu0 %v1041
      %v2420 = vpop.f32.mrb[0].mxu0
      %v2421 = vadd.f32 %v2260, %v2420
      %v2422 = vpop.f32.mrb[0].mxu0
      %v2423 = vpop.f32.mrb[0].mxu0
      %v2424 = vadd.f32 %v2263, %v2423
      %v2425 = vpop.f32.mrb[0].mxu0
      %2426 = vmatprep.mubr.bf16.mxu0 0
      %2427 = vmatmul.mubr.bf16.gmra.mrb[0].mxu0 %v1050
      %v2428 = vpop.f32.mrb[0].mxu0
      %v2429 = vadd.f32 %v2268, %v2428
      %v2430 = vpop.f32.mrb[0].mxu0
      %v2431 = vpop.f32.mrb[0].mxu0
      %v2432 = vadd.f32 %v2271, %v2431
      %v2433 = vpop.f32.mrb[0].mxu0
      %2434 = vmatprep.mubr.bf16.mxu0 0
      %2435 = vmatmul.mubr.bf16.gmra.mrb[0].mxu0 %v1059
      %v2436 = vpop.f32.mrb[0].mxu0
      %v2437 = vadd.f32 %v2276, %v2436
      %v2438 = vpop.f32.mrb[0].mxu0
      %v2439 = vpop.f32.mrb[0].mxu0
      %v2440 = vadd.f32 %v2279, %v2439
      %v2441 = vpop.f32.mrb[0].mxu0
      %2442 = vmatprep.mubr.bf16.mxu0 0
      %2443 = vmatmul.mubr.bf16.gmra.mrb[0].mxu0 %v1068
      %v2444 = vpop.f32.mrb[0].mxu0
      %v2445 = vadd.f32 %v2284, %v2444
      %v2446 = vpop.f32.mrb[0].mxu0
      %v2447 = vpop.f32.mrb[0].mxu0
      %v2448 = vadd.f32 %v2287, %v2447
      %v2449 = vpop.f32.mrb[0].mxu0
      %2450 = vmatprep.mubr.bf16.mxu0 0
      %2451 = vmatmul.mubr.bf16.gmra.mrb[0].mxu0 %v1077
      %v2452 = vpop.f32.mrb[0].mxu0
      %v2453 = vadd.f32 %v2292, %v2452
      %v2454 = vpop.f32.mrb[0].mxu0
      %v2455 = vpop.f32.mrb[0].mxu0
      %v2456 = vadd.f32 %v2295, %v2455
      %v2457 = vpop.f32.mrb[0].mxu0
      %2458 = vdwg.mxu0
      %v2459 = vadd.f32 %v2333, %v2336
      %v2460 = vadd.f32 %v2459, %v2341
      %v2461 = vadd.f32 %v2460, %v2344
      %v2462 = vadd.f32 %v2461, %v2349
      %v2463 = vadd.f32 %v2462, %v2352
      %v2464 = vadd.f32 %v2463, %v2357
      %v2465 = vadd.f32 %v2464, %v2360
      %v2466 = vadd.f32 %v2465, %v2365
      %v2467 = vadd.f32 %v2466, %v2368
      %v2468 = vadd.f32 %v2467, %v2373
      %v2469 = vadd.f32 %v2468, %v2376
      %v2470 = vadd.f32 %v2469, %v2381
      %v2471 = vadd.f32 %v2470, %v2384
      %v2472 = vadd.f32 %v2471, %v2389
      %v2473 = vadd.f32 %v2472, %v2392
      %v2474 = vadd.f32 %v2473, %v2397
      %v2475 = vadd.f32 %v2474, %v2400
      %v2476 = vadd.f32 %v2475, %v2405
      %v2477 = vadd.f32 %v2476, %v2408
      %v2478 = vadd.f32 %v2477, %v2413
      %v2479 = vadd.f32 %v2478, %v2416
      %v2480 = vadd.f32 %v2479, %v2421
      %v2481 = vadd.f32 %v2480, %v2424
      %v2482 = vadd.f32 %v2481, %v2429
      %v2483 = vadd.f32 %v2482, %v2432
      %v2484 = vadd.f32 %v2483, %v2437
      %v2485 = vadd.f32 %v2484, %v2440
      %v2486 = vadd.f32 %v2485, %v2445
      %v2487 = vadd.f32 %v2486, %v2448
      %v2488 = vadd.f32 %v2487, %v2453
      %v2489 = vadd.f32 %v2488, %v2456
      %v2490 = vrot.slane %v2489, 4
      %v2491 = vadd.f32 %v2489, %v2490
      %v2492 = vrot.slane %v2491, 2
      %v2493 = vadd.f32 %v2491, %v2492
      %v2494 = vrot.slane %v2493, 1
      %v2495 = vadd.f32 %v2493, %v2494
      %v2496 = vmul.f32 %v2495, 0.00390625
      %v2497 = vmul.f32 %v2333, %v2333
      %v2498 = vmul.f32 %v2336, %v2336
      %v2499 = vmul.f32 %v2341, %v2341
      %v2500 = vmul.f32 %v2344, %v2344
      %v2501 = vmul.f32 %v2349, %v2349
      %v2502 = vmul.f32 %v2352, %v2352
      %v2503 = vmul.f32 %v2357, %v2357
      %v2504 = vmul.f32 %v2360, %v2360
      %v2505 = vmul.f32 %v2365, %v2365
      %v2506 = vmul.f32 %v2368, %v2368
      %v2507 = vmul.f32 %v2373, %v2373
      %v2508 = vmul.f32 %v2376, %v2376
      %v2509 = vmul.f32 %v2381, %v2381
      %v2510 = vmul.f32 %v2384, %v2384
      %v2511 = vmul.f32 %v2389, %v2389
      %v2512 = vmul.f32 %v2392, %v2392
      %v2513 = vmul.f32 %v2397, %v2397
      %v2514 = vmul.f32 %v2400, %v2400
      %v2515 = vmul.f32 %v2405, %v2405
      %v2516 = vmul.f32 %v2408, %v2408
      %v2517 = vmul.f32 %v2413, %v2413
      %v2518 = vmul.f32 %v2416, %v2416
      %v2519 = vmul.f32 %v2421, %v2421
      %v2520 = vmul.f32 %v2424, %v2424
      %v2521 = vmul.f32 %v2429, %v2429
      %v2522 = vmul.f32 %v2432, %v2432
      %v2523 = vmul.f32 %v2437, %v2437
      %v2524 = vmul.f32 %v2440, %v2440
      %v2525 = vmul.f32 %v2445, %v2445
      %v2526 = vmul.f32 %v2448, %v2448
      %v2527 = vmul.f32 %v2453, %v2453
      %v2528 = vmul.f32 %v2456, %v2456
      %v2529 = vadd.f32 %v2497, %v2498
      %v2530 = vadd.f32 %v2529, %v2499
      %v2531 = vadd.f32 %v2530, %v2500
      %v2532 = vadd.f32 %v2531, %v2501
      %v2533 = vadd.f32 %v2532, %v2502
      %v2534 = vadd.f32 %v2533, %v2503
      %v2535 = vadd.f32 %v2534, %v2504
      %v2536 = vadd.f32 %v2535, %v2505
      %v2537 = vadd.f32 %v2536, %v2506
      %v2538 = vadd.f32 %v2537, %v2507
      %v2539 = vadd.f32 %v2538, %v2508
      %v2540 = vadd.f32 %v2539, %v2509
      %v2541 = vadd.f32 %v2540, %v2510
      %v2542 = vadd.f32 %v2541, %v2511
      %v2543 = vadd.f32 %v2542, %v2512
      %v2544 = vadd.f32 %v2543, %v2513
      %v2545 = vadd.f32 %v2544, %v2514
      %v2546 = vadd.f32 %v2545, %v2515
      %v2547 = vadd.f32 %v2546, %v2516
      %v2548 = vadd.f32 %v2547, %v2517
      %v2549 = vadd.f32 %v2548, %v2518
      %v2550 = vadd.f32 %v2549, %v2519
      %v2551 = vadd.f32 %v2550, %v2520
      %v2552 = vadd.f32 %v2551, %v2521
      %v2553 = vadd.f32 %v2552, %v2522
      %v2554 = vadd.f32 %v2553, %v2523
      %v2555 = vadd.f32 %v2554, %v2524
      %v2556 = vadd.f32 %v2555, %v2525
      %v2557 = vadd.f32 %v2556, %v2526
      %v2558 = vadd.f32 %v2557, %v2527
      %v2559 = vadd.f32 %v2558, %v2528
      %v2560 = vrot.slane %v2559, 4
      %v2561 = vadd.f32 %v2559, %v2560
      %v2562 = vrot.slane %v2561, 2
      %v2563 = vadd.f32 %v2561, %v2562
      %v2564 = vrot.slane %v2563, 1
      %v2565 = vadd.f32 %v2563, %v2564
      %v2566 = vmul.f32 %v2565, 0.00390625
      %v2567 = vmul.f32 %v2496, %v2496
      %v2568 = vsub.f32 %v2566, %v2567
      %v2569 = vmax.f32 %v2568, 0.0
      %v2570 = vsub.f32 %v2333, %v2496
      %v2571 = vsub.f32 %v2336, %v2496
      %v2572 = vsub.f32 %v2341, %v2496
      %v2573 = vsub.f32 %v2344, %v2496
      %v2574 = vsub.f32 %v2349, %v2496
      %v2575 = vsub.f32 %v2352, %v2496
      %v2576 = vsub.f32 %v2357, %v2496
      %v2577 = vsub.f32 %v2360, %v2496
      %v2578 = vsub.f32 %v2365, %v2496
      %v2579 = vsub.f32 %v2368, %v2496
      %v2580 = vsub.f32 %v2373, %v2496
      %v2581 = vsub.f32 %v2376, %v2496
      %v2582 = vsub.f32 %v2381, %v2496
      %v2583 = vsub.f32 %v2384, %v2496
      %v2584 = vsub.f32 %v2389, %v2496
      %v2585 = vsub.f32 %v2392, %v2496
      %v2586 = vsub.f32 %v2397, %v2496
      %v2587 = vsub.f32 %v2400, %v2496
      %v2588 = vsub.f32 %v2405, %v2496
      %v2589 = vsub.f32 %v2408, %v2496
      %v2590 = vsub.f32 %v2413, %v2496
      %v2591 = vsub.f32 %v2416, %v2496
      %v2592 = vsub.f32 %v2421, %v2496
      %v2593 = vsub.f32 %v2424, %v2496
      %v2594 = vsub.f32 %v2429, %v2496
      %v2595 = vsub.f32 %v2432, %v2496
      %v2596 = vsub.f32 %v2437, %v2496
      %v2597 = vsub.f32 %v2440, %v2496
      %v2598 = vsub.f32 %v2445, %v2496
      %v2599 = vsub.f32 %v2448, %v2496
      %v2600 = vsub.f32 %v2453, %v2496
      %v2601 = vsub.f32 %v2456, %v2496
      %v2602 = vadd.f32 %v2569, 1e-05
      %v2603 = vrsqrt.pop %v2602
      %v2604 = vmul.f32 %v2570, %v2603
      %v2605 = vmul.f32 %v2571, %v2603
      %v2606 = vmul.f32 %v2572, %v2603
      %v2607 = vmul.f32 %v2573, %v2603
      %v2608 = vmul.f32 %v2574, %v2603
      %v2609 = vmul.f32 %v2575, %v2603
      %v2610 = vmul.f32 %v2576, %v2603
      %v2611 = vmul.f32 %v2577, %v2603
      %v2612 = vmul.f32 %v2578, %v2603
      %v2613 = vmul.f32 %v2579, %v2603
      %v2614 = vmul.f32 %v2580, %v2603
      %v2615 = vmul.f32 %v2581, %v2603
      %v2616 = vmul.f32 %v2582, %v2603
      %v2617 = vmul.f32 %v2583, %v2603
      %v2618 = vmul.f32 %v2584, %v2603
      %v2619 = vmul.f32 %v2585, %v2603
      %v2620 = vmul.f32 %v2586, %v2603
      %v2621 = vmul.f32 %v2587, %v2603
      %v2622 = vmul.f32 %v2588, %v2603
      %v2623 = vmul.f32 %v2589, %v2603
      %v2624 = vmul.f32 %v2590, %v2603
      %v2625 = vmul.f32 %v2591, %v2603
      %v2626 = vmul.f32 %v2592, %v2603
      %v2627 = vmul.f32 %v2593, %v2603
      %v2628 = vmul.f32 %v2594, %v2603
      %v2629 = vmul.f32 %v2595, %v2603
      %v2630 = vmul.f32 %v2596, %v2603
      %v2631 = vmul.f32 %v2597, %v2603
      %v2632 = vmul.f32 %v2598, %v2603
      %v2633 = vmul.f32 %v2599, %v2603
      %v2634 = vmul.f32 %v2600, %v2603
      %v2635 = vmul.f32 %v2601, %v2603
      %v2636 = vmax.f32 %v2604, 0.0
      %v2637 = vmax.f32 %v2605, 0.0
      %v2638 = vmax.f32 %v2606, 0.0
      %v2639 = vmax.f32 %v2607, 0.0
      %v2640 = vmax.f32 %v2608, 0.0
      %v2641 = vmax.f32 %v2609, 0.0
      %v2642 = vmax.f32 %v2610, 0.0
      %v2643 = vmax.f32 %v2611, 0.0
      %v2644 = vmax.f32 %v2612, 0.0
      %v2645 = vmax.f32 %v2613, 0.0
      %v2646 = vmax.f32 %v2614, 0.0
      %v2647 = vmax.f32 %v2615, 0.0
      %v2648 = vmax.f32 %v2616, 0.0
      %v2649 = vmax.f32 %v2617, 0.0
      %v2650 = vmax.f32 %v2618, 0.0
      %v2651 = vmax.f32 %v2619, 0.0
      %v2652 = vmax.f32 %v2620, 0.0
      %v2653 = vmax.f32 %v2621, 0.0
      %v2654 = vmax.f32 %v2622, 0.0
      %v2655 = vmax.f32 %v2623, 0.0
      %v2656 = vmax.f32 %v2624, 0.0
      %v2657 = vmax.f32 %v2625, 0.0
      %v2658 = vmax.f32 %v2626, 0.0
      %v2659 = vmax.f32 %v2627, 0.0
      %v2660 = vmax.f32 %v2628, 0.0
      %v2661 = vmax.f32 %v2629, 0.0
      %v2662 = vmax.f32 %v2630, 0.0
      %v2663 = vmax.f32 %v2631, 0.0
      %v2664 = vmax.f32 %v2632, 0.0
      %v2665 = vmax.f32 %v2633, 0.0
      %v2666 = vmax.f32 %v2634, 0.0
      %v2667 = vmax.f32 %v2635, 0.0
      %v2668 = vpack.c.bf16 %v2637, %v2636
      %v2669 = vpack.c.bf16 %v2639, %v2638
      %v2670 = vpack.c.bf16 %v2641, %v2640
      %v2671 = vpack.c.bf16 %v2643, %v2642
      %v2672 = vpack.c.bf16 %v2645, %v2644
      %v2673 = vpack.c.bf16 %v2647, %v2646
      %v2674 = vpack.c.bf16 %v2649, %v2648
      %v2675 = vpack.c.bf16 %v2651, %v2650
      %v2676 = vpack.c.bf16 %v2653, %v2652
      %v2677 = vpack.c.bf16 %v2655, %v2654
      %v2678 = vpack.c.bf16 %v2657, %v2656
      %v2679 = vpack.c.bf16 %v2659, %v2658
      %v2680 = vpack.c.bf16 %v2661, %v2660
      %v2681 = vpack.c.bf16 %v2663, %v2662
      %v2682 = vpack.c.bf16 %v2665, %v2664
      %v2683 = vpack.c.bf16 %v2667, %v2666
      %v2700 = vunpack.c.l.b16 %v2668
      %v2701 = vunpack.c.h.b16 %v2668
      %v2702 = vunpack.c.l.b16 %v2669
      %v2703 = vunpack.c.h.b16 %v2669
      %v2704 = vunpack.c.l.b16 %v2670
      %v2705 = vunpack.c.h.b16 %v2670
      %v2706 = vunpack.c.l.b16 %v2671
      %v2707 = vunpack.c.h.b16 %v2671
      %v2708 = vunpack.c.l.b16 %v2672
      %v2709 = vunpack.c.h.b16 %v2672
      %v2710 = vunpack.c.l.b16 %v2673
      %v2711 = vunpack.c.h.b16 %v2673
      %v2712 = vunpack.c.l.b16 %v2674
      %v2713 = vunpack.c.h.b16 %v2674
      %v2714 = vunpack.c.l.b16 %v2675
      %v2715 = vunpack.c.h.b16 %v2675
      %v2716 = vunpack.c.l.b16 %v2676
      %v2717 = vunpack.c.h.b16 %v2676
      %v2718 = vunpack.c.l.b16 %v2677
      %v2719 = vunpack.c.h.b16 %v2677
      %v2720 = vunpack.c.l.b16 %v2678
      %v2721 = vunpack.c.h.b16 %v2678
      %v2722 = vunpack.c.l.b16 %v2679
      %v2723 = vunpack.c.h.b16 %v2679
      %v2724 = vunpack.c.l.b16 %v2680
      %v2725 = vunpack.c.h.b16 %v2680
      %v2726 = vunpack.c.l.b16 %v2681
      %v2727 = vunpack.c.h.b16 %v2681
      %v2728 = vunpack.c.l.b16 %v2682
      %v2729 = vunpack.c.h.b16 %v2682
      %v2730 = vunpack.c.l.b16 %v2683
      %v2731 = vunpack.c.h.b16 %v2683
      %v2732 = vpack.c.b16 %v2700, %v2700
      %v2733 = vpack.c.b16 %v2701, %v2701
      %v2734 = vpack.c.b16 %v2702, %v2702
      %v2735 = vpack.c.b16 %v2703, %v2703
      %v2736 = vpack.c.b16 %v2704, %v2704
      %v2737 = vpack.c.b16 %v2705, %v2705
      %v2738 = vpack.c.b16 %v2706, %v2706
      %v2739 = vpack.c.b16 %v2707, %v2707
      %v2740 = vpack.c.b16 %v2708, %v2708
      %v2741 = vpack.c.b16 %v2709, %v2709
      %v2742 = vpack.c.b16 %v2710, %v2710
      %v2743 = vpack.c.b16 %v2711, %v2711
      %v2744 = vpack.c.b16 %v2712, %v2712
      %v2745 = vpack.c.b16 %v2713, %v2713
      %v2746 = vpack.c.b16 %v2714, %v2714
      %v2747 = vpack.c.b16 %v2715, %v2715
      %v2748 = vpack.c.b16 %v2716, %v2716
      %v2749 = vpack.c.b16 %v2717, %v2717
      %v2750 = vpack.c.b16 %v2718, %v2718
      %v2751 = vpack.c.b16 %v2719, %v2719
      %v2752 = vpack.c.b16 %v2720, %v2720
      %v2753 = vpack.c.b16 %v2721, %v2721
      %v2754 = vpack.c.b16 %v2722, %v2722
      %v2755 = vpack.c.b16 %v2723, %v2723
      %v2756 = vpack.c.b16 %v2724, %v2724
      %v2757 = vpack.c.b16 %v2725, %v2725
      %v2758 = vpack.c.b16 %v2726, %v2726
      %v2759 = vpack.c.b16 %v2727, %v2727
      %v2760 = vpack.c.b16 %v2728, %v2728
      %v2761 = vpack.c.b16 %v2729, %v2729
      %v2762 = vpack.c.b16 %v2730, %v2730
      %v2763 = vpack.c.b16 %v2731, %v2731
      %2796 = vst [vmem:[%s180] sm:$0xf] %v2732
      %2797 = vst [vmem:[%s180 + $0x4] sm:$0xf] %v2733
      %2798 = vst [vmem:[%s180 + $0x8] sm:$0xf] %v2734
      %2799 = vst [vmem:[%s180 + $0xc] sm:$0xf] %v2735
      %2800 = vst [vmem:[%s180 + $0x10] sm:$0xf] %v2736
      %2801 = vst [vmem:[%s180 + $0x14] sm:$0xf] %v2737
      %2802 = vst [vmem:[%s180 + $0x18] sm:$0xf] %v2738
      %2803 = vst [vmem:[%s180 + $0x1c] sm:$0xf] %v2739
      %2804 = vst [vmem:[%s180 + $0x20] sm:$0xf] %v2740
      %2805 = vst [vmem:[%s180 + $0x24] sm:$0xf] %v2741
      %2806 = vst [vmem:[%s180 + $0x28] sm:$0xf] %v2742
      %2807 = vst [vmem:[%s180 + $0x2c] sm:$0xf] %v2743
      %2808 = vst [vmem:[%s180 + $0x30] sm:$0xf] %v2744
      %2809 = vst [vmem:[%s180 + $0x34] sm:$0xf] %v2745
      %2810 = vst [vmem:[%s180 + $0x38] sm:$0xf] %v2746
      %2811 = vst [vmem:[%s180 + $0x3c] sm:$0xf] %v2747
      %2812 = vst [vmem:[%s180 + $0x40] sm:$0xf] %v2748
      %2813 = vst [vmem:[%s180 + $0x44] sm:$0xf] %v2749
      %2814 = vst [vmem:[%s180 + $0x48] sm:$0xf] %v2750
      %2815 = vst [vmem:[%s180 + $0x4c] sm:$0xf] %v2751
      %2816 = vst [vmem:[%s180 + $0x50] sm:$0xf] %v2752
      %2817 = vst [vmem:[%s180 + $0x54] sm:$0xf] %v2753
      %2818 = vst [vmem:[%s180 + $0x58] sm:$0xf] %v2754
      %2819 = vst [vmem:[%s180 + $0x5c] sm:$0xf] %v2755
      %2820 = vst [vmem:[%s180 + $0x60] sm:$0xf] %v2756
      %2821 = vst [vmem:[%s180 + $0x64] sm:$0xf] %v2757
      %2822 = vst [vmem:[%s180 + $0x68] sm:$0xf] %v2758
      %2823 = vst [vmem:[%s180 + $0x6c] sm:$0xf] %v2759
      %2824 = vst [vmem:[%s180 + $0x70] sm:$0xf] %v2760
      %2825 = vst [vmem:[%s180 + $0x74] sm:$0xf] %v2761
      %2826 = vst [vmem:[%s180 + $0x78] sm:$0xf] %v2762
      %2827 = vst [vmem:[%s180 + $0x7c] sm:$0xf] %v2763
      %p2828 = scmp.lt.s32.totalorder %s17, 1
      %s2829 = scalar_select %p2828, %s17, 1
      %p2830 = scmp.lt.s32.totalorder %s18, 0
      %s2831 = scalar_select %p2830, %s18, 0
      %s2832 = smul.addr %s2829, 32
      %s2833 = sadd.s32 %s2831, %s2832
      %s2834 = smul.addr %s2833, 4
      %s2835 = scalar_lea.vmem %s2, %s2834
      // Predicated region
      $region29: #{residual_block.2} parent=27 // pred_check
        %p2836 = pneg %p97
      $region30: #{residual_block.2} parent=27 // pred_check_branch
        %2838 = sbr.rel (%p2836) target = $region32
      $region31: #{residual_block.2} parent=27 // pred_region
        _
      $region32: #{residual_block.2} parent=27 // pred_fallthru
        _
    $region28: #{residual_block.2} parent=5 // pred_fallthru
      _
    %p2839 = scmp.le.s32.totalorder 2, %s8
    // Predicated region
    $region33: #{residual_block.2} parent=5 // pred_check
      %p2840 = pneg %p2839
    $region34: #{residual_block.2} parent=5 // pred_check_branch
      %2842 = sbr.rel (%p2840) target = $region36
    $region35: #{residual_block.2} parent=5 // pred_region
      %s2843 = ssub.s32 %s8, 2
      // Predicated region
      $region37: #{residual_block.2} parent=35 // pred_check
        %p2844 = pneg %p103
      $region38: #{residual_block.2} parent=35 // pred_check_branch
        %2846 = sbr.rel (%p2844) target = $region40
      $region39: #{residual_block.2} parent=35 // pred_region
        %p2847 = scmp.lt.s32.totalorder %s19, 1
        %s2848 = scalar_select %p2847, %s19, 1
        %p2849 = scmp.lt.s32.totalorder %s20, 0
        %s2850 = scalar_select %p2849, %s20, 0
        %s2851 = smul.addr %s2848, 32
        %s2852 = sadd.s32 %s2850, %s2851
        %s2853 = smul.addr %s2852, 4
        %s2854 = scalar_lea.vmem %s2, %s2853
      $region40: #{residual_block.2} parent=35 // pred_fallthru
        _
    $region36: #{residual_block.2} parent=5 // pred_fallthru
      _
  $region6: #{residual_block.2} parent=0 // loop_footer
    %s12 = sadd.s32 1, %s8
  $region7: #{residual_block.2} parent=0 // loop_footer_branch
    %7 = sbr.rel target = $region3
  $region8: #{residual_block.2} parent=0 // loop_exit
    _

// kernel: residual_block.3
$region0: #{residual_block.3}
  #allocation0 [shape = 'u32[]', space=smem, size = 0x4, offset = 0x4, fixed_abs, tag = 'smem constant byte address 0x4 - core index']
  #allocation1 [shape = 'u32[144,128]{1,0:T(1,128)}', space=vmem, size = 0x12000, scoped, tag = 'internal scratch']
  %s0 = inlined_call_operand.vmem [shape: bf16[2,256,1152], index: 0, kind: input, shape index: {}]
  %s1 = inlined_call_operand.vmem [shape: bf16[1152,128], index: 1, kind: input, shape index: {}]
  %s2 = inlined_call_operand.vmem [shape: f32[2,256,128], index: 2, kind: input, shape index: {}]
  %s3 = inlined_call_operand.hbm [shape: f32[2,256,128], index: 3, kind: output, shape index: {}]
  %s4 = sld [smem:[#allocation0]]
  $region45: #{residual_block.3} parent=0
    _
  %s6 = ssub.s32 1, %s4
  %s7 = scalar_select 0, %s6, %s4
  $region1: #{residual_block.3} parent=0
    #allocation2 [shape = 'u8[262144]{0}', space=vmem, size = 0x40000, scoped, tag = 'output window, operand 0']
    #allocation3 [shape = 's32[2]{0}', space=sflag, size = 0x8, scoped, tag = 'scoped memory for residual_block.3']
    %8 = vsyncpa [#allocation3], 0
    %s9 = scalar_lea.sflag [#allocation3], 1
    %10 = vsyncpa %s9, 0
    loop: start=0, step=1, limit=4
    $region2: #{residual_block.3} parent=1 // loop_pre_header
      _
    $region3: #{residual_block.3} parent=1 // loop_header
      %s12 = sphi 0, %s16
      %p13 = scmp.ge.s32.totalorder %s12, 4
      %s19 = sphi 0, %s31
      %s20 = sphi 0, %s27
      %s21 = sphi 0, %s19
      %s22 = sphi 0, %s20
      %s23 = sphi 0, %s21
      %s24 = sphi 0, %s22
      %s34 = sphi 0, %s36
      %s37 = sphi 0, %s34
      %s38 = sphi 0, %s37
      %s54 = sphi 0, %s38
      %s60 = sphi 0, %s62
      %s63 = sphi 0, %s60
      %s64 = sphi 0, %s63
      %s80 = sphi 0, %s64
      %s88 = sphi 0, %s90
      %s91 = sphi 0, %s88
      %s92 = sphi 0, %s91
      %s108 = sphi 0, %s92
      %s116 = sphi 0, %s118
      %s119 = sphi 0, %s116
      %s120 = sphi 0, %s119
      %s136 = sphi 0, %s120
    $region4: #{residual_block.3} parent=1 // loop_header_branch
      %15 = sbr.rel (%p13) target = $region8
    $region5: #{residual_block.3} parent=1 // loop_body
      %s17 = ssub.s32 %s12, 1
      %s18 = ssub.s32 %s12, 2
      %s25 = sadd.s32 1, %s20
      %p26 = scmp.ge.s32.totalorder %s25, 1
      %s27 = scalar_select %p26, 0, %s25
      %s28 = sadd.s32 1, %s19
      %s29 = scalar_select %p26, %s28, %s19
      %p30 = scmp.ge.s32.totalorder %s29, 2
      %s31 = scalar_select %p30, 0, %s29
      %s32 = ssub.s32 %s19, %s31
      %p33 = scmp.eq.s32.totalorder %s32, 0
      %s35 = sadd.s32 %s34, 1
      %s36 = scalar_select %p33, %s34, %s35
      %p39 = pneg %p33
      %p40 = scmp.eq.s32.totalorder %s12, 1
      %p41 = por %p39, %p40
      %p42 = scmp.ne.s32.totalorder %s34, %s37
      %p43 = scmp.eq.s32.totalorder %s12, 0
      %p44 = por %p42, %p43
      %p45 = scmp.ne.s32.totalorder %s34, %s37
      %p46 = scmp.eq.s32.totalorder %s17, 1
      %p47 = por %p45, %p46
      %p48 = scmp.ne.s32.totalorder %s37, %s38
      %p49 = scmp.eq.s32.totalorder %s17, 0
      %p50 = por %p48, %p49
      %p51 = scmp.ne.s32.totalorder %s37, %s38
      %p52 = scmp.eq.s32.totalorder %s18, 1
      %p53 = por %p51, %p52
      %p55 = scmp.ne.s32.totalorder %s38, %s54
      %p56 = scmp.eq.s32.totalorder %s18, 0
      %p57 = por %p55, %p56
      %s58 = ssub.s32 %s20, %s27
      %p59 = scmp.eq.s32.totalorder %s58, 0
      %s61 = sadd.s32 %s60, 1
      %s62 = scalar_select %p59, %s60, %s61
      %p65 = pneg %p59
      %p66 = scmp.eq.s32.totalorder %s12, 1
      %p67 = por %p65, %p66
      %p68 = scmp.ne.s32.totalorder %s60, %s63
      %p69 = scmp.eq.s32.totalorder %s12, 0
      %p70 = por %p68, %p69
      %p71 = scmp.ne.s32.totalorder %s60, %s63
      %p72 = scmp.eq.s32.totalorder %s17, 1
      %p73 = por %p71, %p72
      %p74 = scmp.ne.s32.totalorder %s63, %s64
      %p75 = scmp.eq.s32.totalorder %s17, 0
      %p76 = por %p74, %p75
      %p77 = scmp.ne.s32.totalorder %s63, %s64
      %p78 = scmp.eq.s32.totalorder %s18, 1
      %p79 = por %p77, %p78
      %p81 = scmp.ne.s32.totalorder %s64, %s80
      %p82 = scmp.eq.s32.totalorder %s18, 0
      %p83 = por %p81, %p82
      %s84 = ssub.s32 %s19, %s31
      %s85 = ssub.s32 %s20, %s27
      %s86 = sor.u32 %s84, %s85
      %p87 = scmp.eq.s32.totalorder %s86, 0
      %s89 = sadd.s32 %s88, 1
      %s90 = scalar_select %p87, %s88, %s89
      %p93 = pneg %p87
      %p94 = scmp.eq.s32.totalorder %s12, 1
      %p95 = por %p93, %p94
      %p96 = scmp.ne.s32.totalorder %s88, %s91
      %p97 = scmp.eq.s32.totalorder %s12, 0
      %p98 = por %p96, %p97
      %p99 = scmp.ne.s32.totalorder %s88, %s91
      %p100 = scmp.eq.s32.totalorder %s17, 1
      %p101 = por %p99, %p100
      %p102 = scmp.ne.s32.totalorder %s91, %s92
      %p103 = scmp.eq.s32.totalorder %s17, 0
      %p104 = por %p102, %p103
      %p105 = scmp.ne.s32.totalorder %s91, %s92
      %p106 = scmp.eq.s32.totalorder %s18, 1
      %p107 = por %p105, %p106
      %p109 = scmp.ne.s32.totalorder %s92, %s108
      %p110 = scmp.eq.s32.totalorder %s18, 0
      %p111 = por %p109, %p110
      %s112 = ssub.s32 %s19, %s31
      %s113 = ssub.s32 %s20, %s27
      %s114 = sor.u32 %s112, %s113
      %p115 = scmp.eq.s32.totalorder %s114, 0
      %s117 = sadd.s32 %s116, 1
      %s118 = scalar_select %p115, %s116, %s117
      %p121 = pneg %p115
      %p122 = scmp.eq.s32.totalorder %s12, 1
      %p123 = por %p121, %p122
      %p124 = scmp.ne.s32.totalorder %s116, %s119
      %p125 = scmp.eq.s32.totalorder %s12, 0
      %p126 = por %p124, %p125
      %p127 = scmp.ne.s32.totalorder %s116, %s119
      %p128 = scmp.eq.s32.totalorder %s17, 1
      %p129 = por %p127, %p128
      %p130 = scmp.ne.s32.totalorder %s119, %s120
      %p131 = scmp.eq.s32.totalorder %s17, 0
      %p132 = por %p130, %p131
      %p133 = scmp.ne.s32.totalorder %s119, %s120
      %p134 = scmp.eq.s32.totalorder %s18, 1
      %p135 = por %p133, %p134
      %p137 = scmp.ne.s32.totalorder %s120, %s136
      %p138 = scmp.eq.s32.totalorder %s18, 0
      %p139 = por %p137, %p138
      %p140 = scmp.le.s32.totalorder 1, %s12
      %p141 = scmp.lt.s32.totalorder %s12, 3
      %p142 = pnand %p140, %p141
      %p143 = pneg %p142
      // Predicated region
      $region9: #{residual_block.3} parent=5 // pred_check
        _
      $region10: #{residual_block.3} parent=5 // pred_check_branch
        %145 = sbr.rel (%p142) target = $region12
      $region11: #{residual_block.3} parent=5 // pred_region
        %s146 = ssub.s32 %s12, 1
        // Predicated region
        $region13: #{residual_block.3} parent=11 // pred_check
          %p147 = pneg %p76
        $region14: #{residual_block.3} parent=11 // pred_check_branch
          %149 = sbr.rel (%p147) target = $region16
        $region15: #{residual_block.3} parent=11 // pred_region
          %p150 = scmp.lt.s32.totalorder %s22, 0
          %s151 = scalar_select %p150, %s22, 0
          %s152 = smul.addr %s151, 4
          %s153 = scalar_lea.vmem %s1, %s152
        $region16: #{residual_block.3} parent=11 // pred_fallthru
          _
      $region12: #{residual_block.3} parent=5 // pred_fallthru
        _
      %p154 = scmp.lt.s32.totalorder %s12, 2
      // Predicated region
      $region17: #{residual_block.3} parent=5 // pred_check
        %p155 = pneg %p154
      $region18: #{residual_block.3} parent=5 // pred_check_branch
        %157 = sbr.rel (%p155) target = $region20
      $region19: #{residual_block.3} parent=5 // pred_region
        // Predicated region
        $region21: #{residual_block.3} parent=19 // pred_check
          %p158 = pneg %p44
        $region22: #{residual_block.3} parent=19 // pred_check_branch
          %160 = sbr.rel (%p158) target = $region24
        $region23: #{residual_block.3} parent=19 // pred_region
          %p161 = scmp.lt.s32.totalorder %s19, 1
          %s162 = scalar_select %p161, %s19, 1
          %s163 = smul.addr %s162, 288
          %s164 = smul.addr %s163, 4
          %s165 = scalar_lea.vmem %s0, %s164
        $region24: #{residual_block.3} parent=19 // pred_fallthru
          _
        // Predicated region
        $region25: #{residual_block.3} parent=19 // pred_check
          %p166 = pneg %p98
        $region26: #{residual_block.3} parent=19 // pred_check_branch
          %168 = sbr.rel (%p166) target = $region28
        $region27: #{residual_block.3} parent=19 // pred_region
          %p169 = scmp.lt.s32.totalorder %s19, 1
          %s170 = scalar_select %p169, %s19, 1
          %p171 = scmp.lt.s32.totalorder %s20, 0
          %s172 = scalar_select %p171, %s20, 0
          %s173 = smul.addr %s170, 32
          %s174 = sadd.s32 %s172, %s173
          %s175 = smul.addr %s174, 8
          %s176 = scalar_lea.vmem %s2, %s175
        $region28: #{residual_block.3} parent=19 // pred_fallthru
          _
      $region20: #{residual_block.3} parent=5 // pred_fallthru
        _
      %p177 = scmp.le.s32.totalorder 1, %s12
      %p178 = scmp.lt.s32.totalorder %s12, 3
      %p179 = pnand %p177, %p178
      %p180 = pneg %p179
      // Predicated region
      $region29: #{residual_block.3} parent=5 // pred_check
        _
      $region30: #{residual_block.3} parent=5 // pred_check_branch
        %182 = sbr.rel (%p179) target = $region32
      $region31: #{residual_block.3} parent=5 // pred_region
        %s183 = ssub.s32 %s12, 1
        %p184 = scmp.lt.s32.totalorder %s21, 1
        %s185 = scalar_select %p184, %s21, 1
        %s186 = smul.addr %s185, 288
        %s187 = smul.addr %s186, 4
        %s188 = scalar_lea.vmem %s0, %s187
        %p189 = pneg %p50
        %p190 = pneg %p47
        %p191 = scmp.lt.s32.totalorder %s22, 0
        %s192 = scalar_select %p191, %s22, 0
        %s193 = smul.addr %s192, 4
        %s194 = scalar_lea.vmem %s1, %s193
        %p195 = pneg %p76
        %p196 = pneg %p73
        %p197 = scmp.lt.s32.totalorder %s21, 1
        %s198 = scalar_select %p197, %s21, 1
        %p199 = scmp.lt.s32.totalorder %s22, 0
        %s200 = scalar_select %p199, %s22, 0
        %s201 = smul.addr %s198, 32
        %s202 = sadd.s32 %s200, %s201
        %s203 = smul.addr %s202, 8
        %s204 = scalar_lea.vmem %s2, %s203
        %p205 = pneg %p104
        %p206 = pneg %p101
        %p207 = pneg %p132
        %p208 = pneg %p129
        %s209 = sand.u32 %s119, 1
        %s210 = scalar_lea.sflag [#allocation3], %s209
        %s211 = sand.u32 %s119, 1
        %s212 = smul.addr %s211, 256
        %s213 = scalar_lea.vmem [#allocation2], %s212
        %p214 = scmp.lt.s32.totalorder %s21, 1
        %s215 = scalar_select %p214, %s21, 1
        %s216 = smul.addr %s215, 288
        %s217 = smul.addr %s216, 4
        %s218 = scalar_lea.vmem %s0, %s217
        %p219 = scmp.lt.s32.totalorder %s22, 0
        %s220 = scalar_select %p219, %s22, 0
        %s221 = smul.addr %s220, 4
        %s222 = scalar_lea.vmem %s1, %s221
        %p223 = scmp.lt.s32.totalorder %s21, 1
        %s224 = scalar_select %p223, %s21, 1
        %p225 = scmp.lt.s32.totalorder %s22, 0
        %s226 = scalar_select %p225, %s22, 0
        %s227 = smul.addr %s224, 32
        %s228 = sadd.s32 %s226, %s227
        %s229 = smul.addr %s228, 8
        %s230 = scalar_lea.vmem %s2, %s229
        %v232 = vld [vmem:[%s218] sm:$0xff]
        %v233 = vld [vmem:[%s218 + $0x8] sm:$0xff]
        %v234 = vld [vmem:[%s218 + $0x10] sm:$0xff]
        %v235 = vld [vmem:[%s218 + $0x18] sm:$0xff]
        %v236 = vld [vmem:[%s218 + $0x20] sm:$0xf]
        %v237 = vld [vmem:[%s218 + $0x24] sm:$0xff]
        %v238 = vld [vmem:[%s218 + $0x2c] sm:$0xff]
        %v239 = vld [vmem:[%s218 + $0x34] sm:$0xff]
        %v240 = vld [vmem:[%s218 + $0x3c] sm:$0xff]
        %v241 = vld [vmem:[%s218 + $0x44] sm:$0xf]
        %v242 = vld [vmem:[%s218 + $0x48] sm:$0xff]
        %v243 = vld [vmem:[%s218 + $0x50] sm:$0xff]
        %v244 = vld [vmem:[%s218 + $0x58] sm:$0xff]
        %v245 = vld [vmem:[%s218 + $0x60] sm:$0xff]
        %v246 = vld [vmem:[%s218 + $0x68] sm:$0xf]
        %v247 = vld [vmem:[%s218 + $0x6c] sm:$0xff]
        %v248 = vld [vmem:[%s218 + $0x74] sm:$0xff]
        %v249 = vld [vmem:[%s218 + $0x7c] sm:$0xff]
        %v250 = vld [vmem:[%s218 + $0x84] sm:$0xff]
        %v251 = vld [vmem:[%s218 + $0x8c] sm:$0xf]
        %v252 = vld [vmem:[%s218 + $0x90] sm:$0xff]
        %v253 = vld [vmem:[%s218 + $0x98] sm:$0xff]
        %v254 = vld [vmem:[%s218 + $0xa0] sm:$0xff]
        %v255 = vld [vmem:[%s218 + $0xa8] sm:$0xff]
        %v256 = vld [vmem:[%s218 + $0xb0] sm:$0xf]
        %v257 = vld [vmem:[%s218 + $0xb4] sm:$0xff]
        %v258 = vld [vmem:[%s218 + $0xbc] sm:$0xff]
        %v259 = vld [vmem:[%s218 + $0xc4] sm:$0xff]
        %v260 = vld [vmem:[%s218 + $0xcc] sm:$0xff]
        %v261 = vld [vmem:[%s218 + $0xd4] sm:$0xf]
        %v262 = vld [vmem:[%s218 + $0xd8] sm:$0xff]
        %v263 = vld [vmem:[%s218 + $0xe0] sm:$0xff]
        %v264 = vld [vmem:[%s218 + $0xe8] sm:$0xff]
        %v265 = vld [vmem:[%s218 + $0xf0] sm:$0xff]
        %v266 = vld [vmem:[%s218 + $0xf8] sm:$0xf]
        %v267 = vld [vmem:[%s218 + $0xfc] sm:$0xff]
        %v268 = vld [vmem:[%s218 + $0x104] sm:$0xff]
        %v269 = vld [vmem:[%s218 + $0x10c] sm:$0xff]
        %v270 = vld [vmem:[%s218 + $0x114] sm:$0xff]
        %v271 = vld [vmem:[%s218 + $0x11c] sm:$0xf]
        %v272 = vld [vmem:[%s218 + $0x120] sm:$0xff]
        %v273 = vld [vmem:[%s218 + $0x128] sm:$0xff]
        %v274 = vld [vmem:[%s218 + $0x130] sm:$0xff]
        %v275 = vld [vmem:[%s218 + $0x138] sm:$0xff]
        %v276 = vld [vmem:[%s218 + $0x140] sm:$0xf]
        %v277 = vld [vmem:[%s218 + $0x144] sm:$0xff]
        %v278 = vld [vmem:[%s218 + $0x14c] sm:$0xff]
        %v279 = vld [vmem:[%s218 + $0x154] sm:$0xff]
        %v280 = vld [vmem:[%s218 + $0x15c] sm:$0xff]
        %v281 = vld [vmem:[%s218 + $0x164] sm:$0xf]
        %v282 = vld [vmem:[%s218 + $0x168] sm:$0xff]
        %v283 = vld [vmem:[%s218 + $0x170] sm:$0xff]
        %v284 = vld [vmem:[%s218 + $0x178] sm:$0xff]
        %v285 = vld [vmem:[%s218 + $0x180] sm:$0xff]
        %v286 = vld [vmem:[%s218 + $0x188] sm:$0xf]
        %v287 = vld [vmem:[%s218 + $0x18c] sm:$0xff]
        %v288 = vld [vmem:[%s218 + $0x194] sm:$0xff]
        %v289 = vld [vmem:[%s218 + $0x19c] sm:$0xff]
        %v290 = vld [vmem:[%s218 + $0x1a4] sm:$0xff]
        %v291 = vld [vmem:[%s218 + $0x1ac] sm:$0xf]
        %v292 = vld [vmem:[%s218 + $0x1b0] sm:$0xff]
        %v293 = vld [vmem:[%s218 + $0x1b8] sm:$0xff]
        %v294 = vld [vmem:[%s218 + $0x1c0] sm:$0xff]
        %v295 = vld [vmem:[%s218 + $0x1c8] sm:$0xff]
        %v296 = vld [vmem:[%s218 + $0x1d0] sm:$0xf]
        %v297 = vld [vmem:[%s218 + $0x1d4] sm:$0xff]
        %v298 = vld [vmem:[%s218 + $0x1dc] sm:$0xff]
        %v299 = vld [vmem:[%s218 + $0x1e4] sm:$0xff]
        %v300 = vld [vmem:[%s218 + $0x1ec] sm:$0xff]
        %v301 = vld [vmem:[%s218 + $0x1f4] sm:$0xf]
        %v302 = vld [vmem:[%s218 + $0x1f8] sm:$0xff]
        %v303 = vld [vmem:[%s218 + $0x200] sm:$0xff]
        %v304 = vld [vmem:[%s218 + $0x208] sm:$0xff]
        %v305 = vld [vmem:[%s218 + $0x210] sm:$0xff]
        %v306 = vld [vmem:[%s218 + $0x218] sm:$0xf]
        %v307 = vld [vmem:[%s218 + $0x21c] sm:$0xff]
        %v308 = vld [vmem:[%s218 + $0x224] sm:$0xff]
        %v309 = vld [vmem:[%s218 + $0x22c] sm:$0xff]
        %v310 = vld [vmem:[%s218 + $0x234] sm:$0xff]
        %v311 = vld [vmem:[%s218 + $0x23c] sm:$0xf]
        %v312 = vld [vmem:[%s218 + $0x240] sm:$0xff]
        %v313 = vld [vmem:[%s218 + $0x248] sm:$0xff]
        %v314 = vld [vmem:[%s218 + $0x250] sm:$0xff]
        %v315 = vld [vmem:[%s218 + $0x258] sm:$0xff]
        %v316 = vld [vmem:[%s218 + $0x260] sm:$0xf]
        %v317 = vld [vmem:[%s218 + $0x264] sm:$0xff]
        %v318 = vld [vmem:[%s218 + $0x26c] sm:$0xff]
        %v319 = vld [vmem:[%s218 + $0x274] sm:$0xff]
        %v320 = vld [vmem:[%s218 + $0x27c] sm:$0xff]
        %v321 = vld [vmem:[%s218 + $0x284] sm:$0xf]
        %v322 = vld [vmem:[%s218 + $0x288] sm:$0xff]
        %v323 = vld [vmem:[%s218 + $0x290] sm:$0xff]
        %v324 = vld [vmem:[%s218 + $0x298] sm:$0xff]
        %v325 = vld [vmem:[%s218 + $0x2a0] sm:$0xff]
        %v326 = vld [vmem:[%s218 + $0x2a8] sm:$0xf]
        %v327 = vld [vmem:[%s218 + $0x2ac] sm:$0xff]
        %v328 = vld [vmem:[%s218 + $0x2b4] sm:$0xff]
        %v329 = vld [vmem:[%s218 + $0x2bc] sm:$0xff]
        %v330 = vld [vmem:[%s218 + $0x2c4] sm:$0xff]
        %v331 = vld [vmem:[%s218 + $0x2cc] sm:$0xf]
        %v332 = vld [vmem:[%s218 + $0x2d0] sm:$0xff]
        %v333 = vld [vmem:[%s218 + $0x2d8] sm:$0xff]
        %v334 = vld [vmem:[%s218 + $0x2e0] sm:$0xff]
        %v335 = vld [vmem:[%s218 + $0x2e8] sm:$0xff]
        %v336 = vld [vmem:[%s218 + $0x2f0] sm:$0xf]
        %v337 = vld [vmem:[%s218 + $0x2f4] sm:$0xff]
        %v338 = vld [vmem:[%s218 + $0x2fc] sm:$0xff]
        %v339 = vld [vmem:[%s218 + $0x304] sm:$0xff]
        %v340 = vld [vmem:[%s218 + $0x30c] sm:$0xff]
        %v341 = vld [vmem:[%s218 + $0x314] sm:$0xf]
        %v342 = vld [vmem:[%s218 + $0x318] sm:$0xff]
        %v343 = vld [vmem:[%s218 + $0x320] sm:$0xff]
        %v344 = vld [vmem:[%s218 + $0x328] sm:$0xff]
        %v345 = vld [vmem:[%s218 + $0x330] sm:$0xff]
        %v346 = vld [vmem:[%s218 + $0x338] sm:$0xf]
        %v347 = vld [vmem:[%s218 + $0x33c] sm:$0xff]
        %v348 = vld [vmem:[%s218 + $0x344] sm:$0xff]
        %v349 = vld [vmem:[%s218 + $0x34c] sm:$0xff]
        %v350 = vld [vmem:[%s218 + $0x354] sm:$0xff]
        %v351 = vld [vmem:[%s218 + $0x35c] sm:$0xf]
        %v352 = vld [vmem:[%s218 + $0x360] sm:$0xff]
        %v353 = vld [vmem:[%s218 + $0x368] sm:$0xff]
        %v354 = vld [vmem:[%s218 + $0x370] sm:$0xff]
        %v355 = vld [vmem:[%s218 + $0x378] sm:$0xff]
        %v356 = vld [vmem:[%s218 + $0x380] sm:$0xf]
        %v357 = vld [vmem:[%s218 + $0x384] sm:$0xff]
        %v358 = vld [vmem:[%s218 + $0x38c] sm:$0xff]
        %v359 = vld [vmem:[%s218 + $0x394] sm:$0xff]
        %v360 = vld [vmem:[%s218 + $0x39c] sm:$0xff]
        %v361 = vld [vmem:[%s218 + $0x3a4] sm:$0xf]
        %v362 = vld [vmem:[%s218 + $0x3a8] sm:$0xff]
        %v363 = vld [vmem:[%s218 + $0x3b0] sm:$0xff]
        %v364 = vld [vmem:[%s218 + $0x3b8] sm:$0xff]
        %v365 = vld [vmem:[%s218 + $0x3c0] sm:$0xff]
        %v366 = vld [vmem:[%s218 + $0x3c8] sm:$0xf]
        %v367 = vld [vmem:[%s218 + $0x3cc] sm:$0xff]
        %v368 = vld [vmem:[%s218 + $0x3d4] sm:$0xff]
        %v369 = vld [vmem:[%s218 + $0x3dc] sm:$0xff]
        %v370 = vld [vmem:[%s218 + $0x3e4] sm:$0xff]
        %v371 = vld [vmem:[%s218 + $0x3ec] sm:$0xf]
        %v372 = vld [vmem:[%s218 + $0x3f0] sm:$0xff]
        %v373 = vld [vmem:[%s218 + $0x3f8] sm:$0xff]
        %v374 = vld [vmem:[%s218 + $0x400] sm:$0xff]
        %v375 = vld [vmem:[%s218 + $0x408] sm:$0xff]
        %v376 = vld [vmem:[%s218 + $0x410] sm:$0xf]
        %v377 = vld [vmem:[%s218 + $0x414] sm:$0xff]
        %v378 = vld [vmem:[%s218 + $0x41c] sm:$0xff]
        %v379 = vld [vmem:[%s218 + $0x424] sm:$0xff]
        %v380 = vld [vmem:[%s218 + $0x42c] sm:$0xff]
        %v381 = vld [vmem:[%s218 + $0x434] sm:$0xf]
        %v382 = vld [vmem:[%s218 + $0x438] sm:$0xff]
        %v383 = vld [vmem:[%s218 + $0x440] sm:$0xff]
        %v384 = vld [vmem:[%s218 + $0x448] sm:$0xff]
        %v385 = vld [vmem:[%s218 + $0x450] sm:$0xff]
        %v386 = vld [vmem:[%s218 + $0x458] sm:$0xf]
        %v387 = vld [vmem:[%s218 + $0x45c] sm:$0xff]
        %v388 = vld [vmem:[%s218 + $0x464] sm:$0xff]
        %v389 = vld [vmem:[%s218 + $0x46c] sm:$0xff]
        %v390 = vld [vmem:[%s218 + $0x474] sm:$0xff]
        %v391 = vld [vmem:[%s218 + $0x47c] sm:$0xf]
        %v392 = vld [vmem:[%s222] sm:$0xf]
        %v393 = vld [vmem:[%s222 + $0x4] sm:$0xf]
        %v394 = vld [vmem:[%s222 + $0x8] sm:$0xf]
        %v395 = vld [vmem:[%s222 + $0xc] sm:$0xf]
        %v396 = vld [vmem:[%s222 + $0x10] sm:$0xf]
        %v397 = vld [vmem:[%s222 + $0x14] sm:$0xf]
        %v398 = vld [vmem:[%s222 + $0x18] sm:$0xf]
        %v399 = vld [vmem:[%s222 + $0x1c] sm:$0xf]
        %v400 = vld [vmem:[%s222 + $0x20] sm:$0xf]
        %v401 = vld [vmem:[%s222 + $0x24] sm:$0xf]
        %v402 = vld [vmem:[%s222 + $0x28] sm:$0xf]
        %v403 = vld [vmem:[%s222 + $0x2c] sm:$0xf]
        %v404 = vld [vmem:[%s222 + $0x30] sm:$0xf]
        %v405 = vld [vmem:[%s222 + $0x34] sm:$0xf]
        %v406 = vld [vmem:[%s222 + $0x38] sm:$0xf]
        %v407 = vld [vmem:[%s222 + $0x3c] sm:$0xf]
        %v408 = vld [vmem:[%s222 + $0x40] sm:$0xf]
        %v409 = vld [vmem:[%s222 + $0x44] sm:$0xf]
        %v410 = vld [vmem:[%s222 + $0x48] sm:$0xf]
        %v411 = vld [vmem:[%s222 + $0x4c] sm:$0xf]
        %v412 = vld [vmem:[%s222 + $0x50] sm:$0xf]
        %v413 = vld [vmem:[%s222 + $0x54] sm:$0xf]
        %v414 = vld [vmem:[%s222 + $0x58] sm:$0xf]
        %v415 = vld [vmem:[%s222 + $0x5c] sm:$0xf]
        %v416 = vld [vmem:[%s222 + $0x60] sm:$0xf]
        %v417 = vld [vmem:[%s222 + $0x64] sm:$0xf]
        %v418 = vld [vmem:[%s222 + $0x68] sm:$0xf]
        %v419 = vld [vmem:[%s222 + $0x6c] sm:$0xf]
        %v420 = vld [vmem:[%s222 + $0x70] sm:$0xf]
        %v421 = vld [vmem:[%s222 + $0x74] sm:$0xf]
        %v422 = vld [vmem:[%s222 + $0x78] sm:$0xf]
        %v423 = vld [vmem:[%s222 + $0x7c] sm:$0xf]
        %v424 = vld [vmem:[%s222 + $0x80] sm:$0xf]
        %v425 = vld [vmem:[%s222 + $0x84] sm:$0xf]
        %v426 = vld [vmem:[%s222 + $0x88] sm:$0xf]
        %v427 = vld [vmem:[%s222 + $0x8c] sm:$0xf]
        %v428 = vld [vmem:[%s222 + $0x90] sm:$0xf]
        %v429 = vld [vmem:[%s222 + $0x94] sm:$0xf]
        %v430 = vld [vmem:[%s222 + $0x98] sm:$0xf]
        %v431 = vld [vmem:[%s222 + $0x9c] sm:$0xf]
        %v432 = vld [vmem:[%s222 + $0xa0] sm:$0xf]
        %v433 = vld [vmem:[%s222 + $0xa4] sm:$0xf]
        %v434 = vld [vmem:[%s222 + $0xa8] sm:$0xf]
        %v435 = vld [vmem:[%s222 + $0xac] sm:$0xf]
        %v436 = vld [vmem:[%s222 + $0xb0] sm:$0xf]
        %v437 = vld [vmem:[%s222 + $0xb4] sm:$0xf]
        %v438 = vld [vmem:[%s222 + $0xb8] sm:$0xf]
        %v439 = vld [vmem:[%s222 + $0xbc] sm:$0xf]
        %v440 = vld [vmem:[%s222 + $0xc0] sm:$0xf]
        %v441 = vld [vmem:[%s222 + $0xc4] sm:$0xf]
        %v442 = vld [vmem:[%s222 + $0xc8] sm:$0xf]
        %v443 = vld [vmem:[%s222 + $0xcc] sm:$0xf]
        %v444 = vld [vmem:[%s222 + $0xd0] sm:$0xf]
        %v445 = vld [vmem:[%s222 + $0xd4] sm:$0xf]
        %v446 = vld [vmem:[%s222 + $0xd8] sm:$0xf]
        %v447 = vld [vmem:[%s222 + $0xdc] sm:$0xf]
        %v448 = vld [vmem:[%s222 + $0xe0] sm:$0xf]
        %v449 = vld [vmem:[%s222 + $0xe4] sm:$0xf]
        %v450 = vld [vmem:[%s222 + $0xe8] sm:$0xf]
        %v451 = vld [vmem:[%s222 + $0xec] sm:$0xf]
        %v452 = vld [vmem:[%s222 + $0xf0] sm:$0xf]
        %v453 = vld [vmem:[%s222 + $0xf4] sm:$0xf]
        %v454 = vld [vmem:[%s222 + $0xf8] sm:$0xf]
        %v455 = vld [vmem:[%s222 + $0xfc] sm:$0xf]
        %v456 = vld [vmem:[%s222 + $0x100] sm:$0xf]
        %v457 = vld [vmem:[%s222 + $0x104] sm:$0xf]
        %v458 = vld [vmem:[%s222 + $0x108] sm:$0xf]
        %v459 = vld [vmem:[%s222 + $0x10c] sm:$0xf]
        %v460 = vld [vmem:[%s222 + $0x110] sm:$0xf]
        %v461 = vld [vmem:[%s222 + $0x114] sm:$0xf]
        %v462 = vld [vmem:[%s222 + $0x118] sm:$0xf]
        %v463 = vld [vmem:[%s222 + $0x11c] sm:$0xf]
        %v464 = vld [vmem:[%s222 + $0x120] sm:$0xf]
        %v465 = vld [vmem:[%s222 + $0x124] sm:$0xf]
        %v466 = vld [vmem:[%s222 + $0x128] sm:$0xf]
        %v467 = vld [vmem:[%s222 + $0x12c] sm:$0xf]
        %v468 = vld [vmem:[%s222 + $0x130] sm:$0xf]
        %v469 = vld [vmem:[%s222 + $0x134] sm:$0xf]
        %v470 = vld [vmem:[%s222 + $0x138] sm:$0xf]
        %v471 = vld [vmem:[%s222 + $0x13c] sm:$0xf]
        %v472 = vld [vmem:[%s222 + $0x140] sm:$0xf]
        %v473 = vld [vmem:[%s222 + $0x144] sm:$0xf]
        %v474 = vld [vmem:[%s222 + $0x148] sm:$0xf]
        %v475 = vld [vmem:[%s222 + $0x14c] sm:$0xf]
        %v476 = vld [vmem:[%s222 + $0x150] sm:$0xf]
        %v477 = vld [vmem:[%s222 + $0x154] sm:$0xf]
        %v478 = vld [vmem:[%s222 + $0x158] sm:$0xf]
        %v479 = vld [vmem:[%s222 + $0x15c] sm:$0xf]
        %v480 = vld [vmem:[%s222 + $0x160] sm:$0xf]
        %v481 = vld [vmem:[%s222 + $0x164] sm:$0xf]
        %v482 = vld [vmem:[%s222 + $0x168] sm:$0xf]
        %v483 = vld [vmem:[%s222 + $0x16c] sm:$0xf]
        %v484 = vld [vmem:[%s222 + $0x170] sm:$0xf]
        %v485 = vld [vmem:[%s222 + $0x174] sm:$0xf]
        %v486 = vld [vmem:[%s222 + $0x178] sm:$0xf]
        %v487 = vld [vmem:[%s222 + $0x17c] sm:$0xf]
        %v488 = vld [vmem:[%s222 + $0x180] sm:$0xf]
        %v489 = vld [vmem:[%s222 + $0x184] sm:$0xf]
        %v490 = vld [vmem:[%s222 + $0x188] sm:$0xf]
        %v491 = vld [vmem:[%s222 + $0x18c] sm:$0xf]
        %v492 = vld [vmem:[%s222 + $0x190] sm:$0xf]
        %v493 = vld [vmem:[%s222 + $0x194] sm:$0xf]
        %v494 = vld [vmem:[%s222 + $0x198] sm:$0xf]
        %v495 = vld [vmem:[%s222 + $0x19c] sm:$0xf]
        %v496 = vld [vmem:[%s222 + $0x1a0] sm:$0xf]
        %v497 = vld [vmem:[%s222 + $0x1a4] sm:$0xf]
        %v498 = vld [vmem:[%s222 + $0x1a8] sm:$0xf]
        %v499 = vld [vmem:[%s222 + $0x1ac] sm:$0xf]
        %v500 = vld [vmem:[%s222 + $0x1b0] sm:$0xf]
        %v501 = vld [vmem:[%s222 + $0x1b4] sm:$0xf]
        %v502 = vld [vmem:[%s222 + $0x1b8] sm:$0xf]
        %v503 = vld [vmem:[%s222 + $0x1bc] sm:$0xf]
        %v504 = vld [vmem:[%s222 + $0x1c0] sm:$0xf]
        %v505 = vld [vmem:[%s222 + $0x1c4] sm:$0xf]
        %v506 = vld [vmem:[%s222 + $0x1c8] sm:$0xf]
        %v507 = vld [vmem:[%s222 + $0x1cc] sm:$0xf]
        %v508 = vld [vmem:[%s222 + $0x1d0] sm:$0xf]
        %v509 = vld [vmem:[%s222 + $0x1d4] sm:$0xf]
        %v510 = vld [vmem:[%s222 + $0x1d8] sm:$0xf]
        %v511 = vld [vmem:[%s222 + $0x1dc] sm:$0xf]
        %v512 = vld [vmem:[%s222 + $0x1e0] sm:$0xf]
        %v513 = vld [vmem:[%s222 + $0x1e4] sm:$0xf]
        %v514 = vld [vmem:[%s222 + $0x1e8] sm:$0xf]
        %v515 = vld [vmem:[%s222 + $0x1ec] sm:$0xf]
        %v516 = vld [vmem:[%s222 + $0x1f0] sm:$0xf]
        %v517 = vld [vmem:[%s222 + $0x1f4] sm:$0xf]
        %v518 = vld [vmem:[%s222 + $0x1f8] sm:$0xf]
        %v519 = vld [vmem:[%s222 + $0x1fc] sm:$0xf]
        %v520 = vld [vmem:[%s222 + $0x200] sm:$0xf]
        %v521 = vld [vmem:[%s222 + $0x204] sm:$0xf]
        %v522 = vld [vmem:[%s222 + $0x208] sm:$0xf]
        %v523 = vld [vmem:[%s222 + $0x20c] sm:$0xf]
        %v524 = vld [vmem:[%s222 + $0x210] sm:$0xf]
        %v525 = vld [vmem:[%s222 + $0x214] sm:$0xf]
        %v526 = vld [vmem:[%s222 + $0x218] sm:$0xf]
        %v527 = vld [vmem:[%s222 + $0x21c] sm:$0xf]
        %v528 = vld [vmem:[%s222 + $0x220] sm:$0xf]
        %v529 = vld [vmem:[%s222 + $0x224] sm:$0xf]
        %v530 = vld [vmem:[%s222 + $0x228] sm:$0xf]
        %v531 = vld [vmem:[%s222 + $0x22c] sm:$0xf]
        %v532 = vld [vmem:[%s222 + $0x230] sm:$0xf]
        %v533 = vld [vmem:[%s222 + $0x234] sm:$0xf]
        %v534 = vld [vmem:[%s222 + $0x238] sm:$0xf]
        %v535 = vld [vmem:[%s222 + $0x23c] sm:$0xf]
        %v696 = vunpack.c.l.b16 %v232
        %v697 = vunpack.c.h.b16 %v232
        %v698 = vunpack.c.l.b16 %v233
        %v699 = vunpack.c.h.b16 %v233
        %v700 = vunpack.c.l.b16 %v234
        %v701 = vunpack.c.h.b16 %v234
        %v702 = vunpack.c.l.b16 %v235
        %v703 = vunpack.c.h.b16 %v235
        %v704 = vunpack.c.l.b16 %v236
        %v705 = vunpack.c.l.b16 %v237
        %v706 = vunpack.c.h.b16 %v237
        %v707 = vunpack.c.l.b16 %v238
        %v708 = vunpack.c.h.b16 %v238
        %v709 = vunpack.c.l.b16 %v239
        %v710 = vunpack.c.h.b16 %v239
        %v711 = vunpack.c.l.b16 %v240
        %v712 = vunpack.c.h.b16 %v240
        %v713 = vunpack.c.l.b16 %v241
        %v714 = vunpack.c.l.b16 %v242
        %v715 = vunpack.c.h.b16 %v242
        %v716 = vunpack.c.l.b16 %v243
        %v717 = vunpack.c.h.b16 %v243
        %v718 = vunpack.c.l.b16 %v244
        %v719 = vunpack.c.h.b16 %v244
        %v720 = vunpack.c.l.b16 %v245
        %v721 = vunpack.c.h.b16 %v245
        %v722 = vunpack.c.l.b16 %v246
        %v723 = vunpack.c.l.b16 %v247
        %v724 = vunpack.c.h.b16 %v247
        %v725 = vunpack.c.l.b16 %v248
        %v726 = vunpack.c.h.b16 %v248
        %v727 = vunpack.c.l.b16 %v249
        %v728 = vunpack.c.h.b16 %v249
        %v729 = vunpack.c.l.b16 %v250
        %v730 = vunpack.c.h.b16 %v250
        %v731 = vunpack.c.l.b16 %v251
        %v732 = vunpack.c.l.b16 %v252
        %v733 = vunpack.c.h.b16 %v252
        %v734 = vunpack.c.l.b16 %v253
        %v735 = vunpack.c.h.b16 %v253
        %v736 = vunpack.c.l.b16 %v254
        %v737 = vunpack.c.h.b16 %v254
        %v738 = vunpack.c.l.b16 %v255
        %v739 = vunpack.c.h.b16 %v255
        %v740 = vunpack.c.l.b16 %v256
        %v741 = vunpack.c.l.b16 %v257
        %v742 = vunpack.c.h.b16 %v257
        %v743 = vunpack.c.l.b16 %v258
        %v744 = vunpack.c.h.b16 %v258
        %v745 = vunpack.c.l.b16 %v259
        %v746 = vunpack.c.h.b16 %v259
        %v747 = vunpack.c.l.b16 %v260
        %v748 = vunpack.c.h.b16 %v260
        %v749 = vunpack.c.l.b16 %v261
        %v750 = vunpack.c.l.b16 %v262
        %v751 = vunpack.c.h.b16 %v262
        %v752 = vunpack.c.l.b16 %v263
        %v753 = vunpack.c.h.b16 %v263
        %v754 = vunpack.c.l.b16 %v264
        %v755 = vunpack.c.h.b16 %v264
        %v756 = vunpack.c.l.b16 %v265
        %v757 = vunpack.c.h.b16 %v265
        %v758 = vunpack.c.l.b16 %v266
        %v759 = vunpack.c.l.b16 %v267
        %v760 = vunpack.c.h.b16 %v267
        %v761 = vunpack.c.l.b16 %v268
        %v762 = vunpack.c.h.b16 %v268
        %v763 = vunpack.c.l.b16 %v269
        %v764 = vunpack.c.h.b16 %v269
        %v765 = vunpack.c.l.b16 %v270
        %v766 = vunpack.c.h.b16 %v270
        %v767 = vunpack.c.l.b16 %v271
        %v768 = vunpack.c.l.b16 %v272
        %v769 = vunpack.c.h.b16 %v272
        %v770 = vunpack.c.l.b16 %v273
        %v771 = vunpack.c.h.b16 %v273
        %v772 = vunpack.c.l.b16 %v274
        %v773 = vunpack.c.h.b16 %v274
        %v774 = vunpack.c.l.b16 %v275
        %v775 = vunpack.c.h.b16 %v275
        %v776 = vunpack.c.l.b16 %v276
        %v777 = vunpack.c.l.b16 %v277
        %v778 = vunpack.c.h.b16 %v277
        %v779 = vunpack.c.l.b16 %v278
        %v780 = vunpack.c.h.b16 %v278
        %v781 = vunpack.c.l.b16 %v279
        %v782 = vunpack.c.h.b16 %v279
        %v783 = vunpack.c.l.b16 %v280
        %v784 = vunpack.c.h.b16 %v280
        %v785 = vunpack.c.l.b16 %v281
        %v786 = vunpack.c.l.b16 %v282
        %v787 = vunpack.c.h.b16 %v282
        %v788 = vunpack.c.l.b16 %v283
        %v789 = vunpack.c.h.b16 %v283
        %v790 = vunpack.c.l.b16 %v284
        %v791 = vunpack.c.h.b16 %v284
        %v792 = vunpack.c.l.b16 %v285
        %v793 = vunpack.c.h.b16 %v285
        %v794 = vunpack.c.l.b16 %v286
        %v795 = vunpack.c.l.b16 %v287
        %v796 = vunpack.c.h.b16 %v287
        %v797 = vunpack.c.l.b16 %v288
        %v798 = vunpack.c.h.b16 %v288
        %v799 = vunpack.c.l.b16 %v289
        %v800 = vunpack.c.h.b16 %v289
        %v801 = vunpack.c.l.b16 %v290
        %v802 = vunpack.c.h.b16 %v290
        %v803 = vunpack.c.l.b16 %v291
        %v804 = vunpack.c.l.b16 %v292
        %v805 = vunpack.c.h.b16 %v292
        %v806 = vunpack.c.l.b16 %v293
        %v807 = vunpack.c.h.b16 %v293
        %v808 = vunpack.c.l.b16 %v294
        %v809 = vunpack.c.h.b16 %v294
        %v810 = vunpack.c.l.b16 %v295
        %v811 = vunpack.c.h.b16 %v295
        %v812 = vunpack.c.l.b16 %v296
        %v813 = vunpack.c.l.b16 %v297
        %v814 = vunpack.c.h.b16 %v297
        %v815 = vunpack.c.l.b16 %v298
        %v816 = vunpack.c.h.b16 %v298
        %v817 = vunpack.c.l.b16 %v299
        %v818 = vunpack.c.h.b16 %v299
        %v819 = vunpack.c.l.b16 %v300
        %v820 = vunpack.c.h.b16 %v300
        %v821 = vunpack.c.l.b16 %v301
        %v822 = vunpack.c.l.b16 %v302
        %v823 = vunpack.c.h.b16 %v302
        %v824 = vunpack.c.l.b16 %v303
        %v825 = vunpack.c.h.b16 %v303
        %v826 = vunpack.c.l.b16 %v304
        %v827 = vunpack.c.h.b16 %v304
        %v828 = vunpack.c.l.b16 %v305
        %v829 = vunpack.c.h.b16 %v305
        %v830 = vunpack.c.l.b16 %v306
        %v831 = vunpack.c.l.b16 %v307
        %v832 = vunpack.c.h.b16 %v307
        %v833 = vunpack.c.l.b16 %v308
        %v834 = vunpack.c.h.b16 %v308
        %v835 = vunpack.c.l.b16 %v309
        %v836 = vunpack.c.h.b16 %v309
        %v837 = vunpack.c.l.b16 %v310
        %v838 = vunpack.c.h.b16 %v310
        %v839 = vunpack.c.l.b16 %v311
        %v840 = vunpack.c.l.b16 %v312
        %v841 = vunpack.c.h.b16 %v312
        %v842 = vunpack.c.l.b16 %v313
        %v843 = vunpack.c.h.b16 %v313
        %v844 = vunpack.c.l.b16 %v314
        %v845 = vunpack.c.h.b16 %v314
        %v846 = vunpack.c.l.b16 %v315
        %v847 = vunpack.c.h.b16 %v315
        %v848 = vunpack.c.l.b16 %v316
        %v849 = vunpack.c.l.b16 %v317
        %v850 = vunpack.c.h.b16 %v317
        %v851 = vunpack.c.l.b16 %v318
        %v852 = vunpack.c.h.b16 %v318
        %v853 = vunpack.c.l.b16 %v319
        %v854 = vunpack.c.h.b16 %v319
        %v855 = vunpack.c.l.b16 %v320
        %v856 = vunpack.c.h.b16 %v320
        %v857 = vunpack.c.l.b16 %v321
        %v858 = vunpack.c.l.b16 %v322
        %v859 = vunpack.c.h.b16 %v322
        %v860 = vunpack.c.l.b16 %v323
        %v861 = vunpack.c.h.b16 %v323
        %v862 = vunpack.c.l.b16 %v324
        %v863 = vunpack.c.h.b16 %v324
        %v864 = vunpack.c.l.b16 %v325
        %v865 = vunpack.c.h.b16 %v325
        %v866 = vunpack.c.l.b16 %v326
        %v867 = vunpack.c.l.b16 %v327
        %v868 = vunpack.c.h.b16 %v327
        %v869 = vunpack.c.l.b16 %v328
        %v870 = vunpack.c.h.b16 %v328
        %v871 = vunpack.c.l.b16 %v329
        %v872 = vunpack.c.h.b16 %v329
        %v873 = vunpack.c.l.b16 %v330
        %v874 = vunpack.c.h.b16 %v330
        %v875 = vunpack.c.l.b16 %v331
        %v876 = vunpack.c.l.b16 %v332
        %v877 = vunpack.c.h.b16 %v332
        %v878 = vunpack.c.l.b16 %v333
        %v879 = vunpack.c.h.b16 %v333
        %v880 = vunpack.c.l.b16 %v334
        %v881 = vunpack.c.h.b16 %v334
        %v882 = vunpack.c.l.b16 %v335
        %v883 = vunpack.c.h.b16 %v335
        %v884 = vunpack.c.l.b16 %v336
        %v885 = vunpack.c.l.b16 %v337
        %v886 = vunpack.c.h.b16 %v337
        %v887 = vunpack.c.l.b16 %v338
        %v888 = vunpack.c.h.b16 %v338
        %v889 = vunpack.c.l.b16 %v339
        %v890 = vunpack.c.h.b16 %v339
        %v891 = vunpack.c.l.b16 %v340
        %v892 = vunpack.c.h.b16 %v340
        %v893 = vunpack.c.l.b16 %v341
        %v894 = vunpack.c.l.b16 %v342
        %v895 = vunpack.c.h.b16 %v342
        %v896 = vunpack.c.l.b16 %v343
        %v897 = vunpack.c.h.b16 %v343
        %v898 = vunpack.c.l.b16 %v344
        %v899 = vunpack.c.h.b16 %v344
        %v900 = vunpack.c.l.b16 %v345
        %v901 = vunpack.c.h.b16 %v345
        %v902 = vunpack.c.l.b16 %v346
        %v903 = vunpack.c.l.b16 %v347
        %v904 = vunpack.c.h.b16 %v347
        %v905 = vunpack.c.l.b16 %v348
        %v906 = vunpack.c.h.b16 %v348
        %v907 = vunpack.c.l.b16 %v349
        %v908 = vunpack.c.h.b16 %v349
        %v909 = vunpack.c.l.b16 %v350
        %v910 = vunpack.c.h.b16 %v350
        %v911 = vunpack.c.l.b16 %v351
        %v912 = vunpack.c.l.b16 %v352
        %v913 = vunpack.c.h.b16 %v352
        %v914 = vunpack.c.l.b16 %v353
        %v915 = vunpack.c.h.b16 %v353
        %v916 = vunpack.c.l.b16 %v354
        %v917 = vunpack.c.h.b16 %v354
        %v918 = vunpack.c.l.b16 %v355
        %v919 = vunpack.c.h.b16 %v355
        %v920 = vunpack.c.l.b16 %v356
        %v921 = vunpack.c.l.b16 %v357
        %v922 = vunpack.c.h.b16 %v357
        %v923 = vunpack.c.l.b16 %v358
        %v924 = vunpack.c.h.b16 %v358
        %v925 = vunpack.c.l.b16 %v359
        %v926 = vunpack.c.h.b16 %v359
        %v927 = vunpack.c.l.b16 %v360
        %v928 = vunpack.c.h.b16 %v360
        %v929 = vunpack.c.l.b16 %v361
        %v930 = vunpack.c.l.b16 %v362
        %v931 = vunpack.c.h.b16 %v362
        %v932 = vunpack.c.l.b16 %v363
        %v933 = vunpack.c.h.b16 %v363
        %v934 = vunpack.c.l.b16 %v364
        %v935 = vunpack.c.h.b16 %v364
        %v936 = vunpack.c.l.b16 %v365
        %v937 = vunpack.c.h.b16 %v365
        %v938 = vunpack.c.l.b16 %v366
        %v939 = vunpack.c.l.b16 %v367
        %v940 = vunpack.c.h.b16 %v367
        %v941 = vunpack.c.l.b16 %v368
        %v942 = vunpack.c.h.b16 %v368
        %v943 = vunpack.c.l.b16 %v369
        %v944 = vunpack.c.h.b16 %v369
        %v945 = vunpack.c.l.b16 %v370
        %v946 = vunpack.c.h.b16 %v370
        %v947 = vunpack.c.l.b16 %v371
        %v948 = vunpack.c.l.b16 %v372
        %v949 = vunpack.c.h.b16 %v372
        %v950 = vunpack.c.l.b16 %v373
        %v951 = vunpack.c.h.b16 %v373
        %v952 = vunpack.c.l.b16 %v374
        %v953 = vunpack.c.h.b16 %v374
        %v954 = vunpack.c.l.b16 %v375
        %v955 = vunpack.c.h.b16 %v375
        %v956 = vunpack.c.l.b16 %v376
        %v957 = vunpack.c.l.b16 %v377
        %v958 = vunpack.c.h.b16 %v377
        %v959 = vunpack.c.l.b16 %v378
        %v960 = vunpack.c.h.b16 %v378
        %v961 = vunpack.c.l.b16 %v379
        %v962 = vunpack.c.h.b16 %v379
        %v963 = vunpack.c.l.b16 %v380
        %v964 = vunpack.c.h.b16 %v380
        %v965 = vunpack.c.l.b16 %v381
        %v966 = vunpack.c.l.b16 %v382
        %v967 = vunpack.c.h.b16 %v382
        %v968 = vunpack.c.l.b16 %v383
        %v969 = vunpack.c.h.b16 %v383
        %v970 = vunpack.c.l.b16 %v384
        %v971 = vunpack.c.h.b16 %v384
        %v972 = vunpack.c.l.b16 %v385
        %v973 = vunpack.c.h.b16 %v385
        %v974 = vunpack.c.l.b16 %v386
        %v975 = vunpack.c.l.b16 %v387
        %v976 = vunpack.c.h.b16 %v387
        %v977 = vunpack.c.l.b16 %v388
        %v978 = vunpack.c.h.b16 %v388
        %v979 = vunpack.c.l.b16 %v389
        %v980 = vunpack.c.h.b16 %v389
        %v981 = vunpack.c.l.b16 %v390
        %v982 = vunpack.c.h.b16 %v390
        %v983 = vunpack.c.l.b16 %v391
        %v984 = vpack.c.b16 %v705, %v696
        %v985 = vpack.c.b16 %v706, %v697
        %v986 = vpack.c.b16 %v707, %v698
        %v987 = vpack.c.b16 %v708, %v699
        %v988 = vpack.c.b16 %v709, %v700
        %v989 = vpack.c.b16 %v710, %v701
        %v990 = vpack.c.b16 %v711, %v702
        %v991 = vpack.c.b16 %v712, %v703
        %v992 = vpack.c.b16 %v713, %v704
        %v993 = vpack.c.b16 %v723, %v714
        %v994 = vpack.c.b16 %v724, %v715
        %v995 = vpack.c.b16 %v725, %v716
        %v996 = vpack.c.b16 %v726, %v717
        %v997 = vpack.c.b16 %v727, %v718
        %v998 = vpack.c.b16 %v728, %v719
        %v999 = vpack.c.b16 %v729, %v720
        %v1000 = vpack.c.b16 %v730, %v721
        %v1001 = vpack.c.b16 %v731, %v722
        %v1002 = vpack.c.b16 %v741, %v732
        %v1003 = vpack.c.b16 %v742, %v733
        %v1004 = vpack.c.b16 %v743, %v734
        %v1005 = vpack.c.b16 %v744, %v735
        %v1006 = vpack.c.b16 %v745, %v736
        %v1007 = vpack.c.b16 %v746, %v737
        %v1008 = vpack.c.b16 %v747, %v738
        %v1009 = vpack.c.b16 %v748, %v739
        %v1010 = vpack.c.b16 %v749, %v740
        %v1011 = vpack.c.b16 %v759, %v750
        %v1012 = vpack.c.b16 %v760, %v751
        %v1013 = vpack.c.b16 %v761, %v752
        %v1014 = vpack.c.b16 %v762, %v753
        %v1015 = vpack.c.b16 %v763, %v754
        %v1016 = vpack.c.b16 %v764, %v755
        %v1017 = vpack.c.b16 %v765, %v756
        %v1018 = vpack.c.b16 %v766, %v757
        %v1019 = vpack.c.b16 %v767, %v758
        %v1020 = vpack.c.b16 %v777, %v768
        %v1021 = vpack.c.b16 %v778, %v769
        %v1022 = vpack.c.b16 %v779, %v770
        %v1023 = vpack.c.b16 %v780, %v771
        %v1024 = vpack.c.b16 %v781, %v772
        %v1025 = vpack.c.b16 %v782, %v773
        %v1026 = vpack.c.b16 %v783, %v774
        %v1027 = vpack.c.b16 %v784, %v775
        %v1028 = vpack.c.b16 %v785, %v776
        %v1029 = vpack.c.b16 %v795, %v786
        %v1030 = vpack.c.b16 %v796, %v787
        %v1031 = vpack.c.b16 %v797, %v788
        %v1032 = vpack.c.b16 %v798, %v789
        %v1033 = vpack.c.b16 %v799, %v790
        %v1034 = vpack.c.b16 %v800, %v791
        %v1035 = vpack.c.b16 %v801, %v792
        %v1036 = vpack.c.b16 %v802, %v793
        %v1037 = vpack.c.b16 %v803, %v794
        %v1038 = vpack.c.b16 %v813, %v804
        %v1039 = vpack.c.b16 %v814, %v805
        %v1040 = vpack.c.b16 %v815, %v806
        %v1041 = vpack.c.b16 %v816, %v807
        %v1042 = vpack.c.b16 %v817, %v808
        %v1043 = vpack.c.b16 %v818, %v809
        %v1044 = vpack.c.b16 %v819, %v810
        %v1045 = vpack.c.b16 %v820, %v811
        %v1046 = vpack.c.b16 %v821, %v812
        %v1047 = vpack.c.b16 %v831, %v822
        %v1048 = vpack.c.b16 %v832, %v823
        %v1049 = vpack.c.b16 %v833, %v824
        %v1050 = vpack.c.b16 %v834, %v825
        %v1051 = vpack.c.b16 %v835, %v826
        %v1052 = vpack.c.b16 %v836, %v827
        %v1053 = vpack.c.b16 %v837, %v828
        %v1054 = vpack.c.b16 %v838, %v829
        %v1055 = vpack.c.b16 %v839, %v830
        %v1056 = vpack.c.b16 %v849, %v840
        %v1057 = vpack.c.b16 %v850, %v841
        %v1058 = vpack.c.b16 %v851, %v842
        %v1059 = vpack.c.b16 %v852, %v843
        %v1060 = vpack.c.b16 %v853, %v844
        %v1061 = vpack.c.b16 %v854, %v845
        %v1062 = vpack.c.b16 %v855, %v846
        %v1063 = vpack.c.b16 %v856, %v847
        %v1064 = vpack.c.b16 %v857, %v848
        %v1065 = vpack.c.b16 %v867, %v858
        %v1066 = vpack.c.b16 %v868, %v859
        %v1067 = vpack.c.b16 %v869, %v860
        %v1068 = vpack.c.b16 %v870, %v861
        %v1069 = vpack.c.b16 %v871, %v862
        %v1070 = vpack.c.b16 %v872, %v863
        %v1071 = vpack.c.b16 %v873, %v864
        %v1072 = vpack.c.b16 %v874, %v865
        %v1073 = vpack.c.b16 %v875, %v866
        %v1074 = vpack.c.b16 %v885, %v876
        %v1075 = vpack.c.b16 %v886, %v877
        %v1076 = vpack.c.b16 %v887, %v878
        %v1077 = vpack.c.b16 %v888, %v879
        %v1078 = vpack.c.b16 %v889, %v880
        %v1079 = vpack.c.b16 %v890, %v881
        %v1080 = vpack.c.b16 %v891, %v882
        %v1081 = vpack.c.b16 %v892, %v883
        %v1082 = vpack.c.b16 %v893, %v884
        %v1083 = vpack.c.b16 %v903, %v894
        %v1084 = vpack.c.b16 %v904, %v895
        %v1085 = vpack.c.b16 %v905, %v896
        %v1086 = vpack.c.b16 %v906, %v897
        %v1087 = vpack.c.b16 %v907, %v898
        %v1088 = vpack.c.b16 %v908, %v899
        %v1089 = vpack.c.b16 %v909, %v900
        %v1090 = vpack.c.b16 %v910, %v901
        %v1091 = vpack.c.b16 %v911, %v902
        %v1092 = vpack.c.b16 %v921, %v912
        %v1093 = vpack.c.b16 %v922, %v913
        %v1094 = vpack.c.b16 %v923, %v914
        %v1095 = vpack.c.b16 %v924, %v915
        %v1096 = vpack.c.b16 %v925, %v916
        %v1097 = vpack.c.b16 %v926, %v917
        %v1098 = vpack.c.b16 %v927, %v918
        %v1099 = vpack.c.b16 %v928, %v919
        %v1100 = vpack.c.b16 %v929, %v920
        %v1101 = vpack.c.b16 %v939, %v930
        %v1102 = vpack.c.b16 %v940, %v931
        %v1103 = vpack.c.b16 %v941, %v932
        %v1104 = vpack.c.b16 %v942, %v933
        %v1105 = vpack.c.b16 %v943, %v934
        %v1106 = vpack.c.b16 %v944, %v935
        %v1107 = vpack.c.b16 %v945, %v936
        %v1108 = vpack.c.b16 %v946, %v937
        %v1109 = vpack.c.b16 %v947, %v938
        %v1110 = vpack.c.b16 %v957, %v948
        %v1111 = vpack.c.b16 %v958, %v949
        %v1112 = vpack.c.b16 %v959, %v950
        %v1113 = vpack.c.b16 %v960, %v951
        %v1114 = vpack.c.b16 %v961, %v952
        %v1115 = vpack.c.b16 %v962, %v953
        %v1116 = vpack.c.b16 %v963, %v954
        %v1117 = vpack.c.b16 %v964, %v955
        %v1118 = vpack.c.b16 %v965, %v956
        %v1119 = vpack.c.b16 %v975, %v966
        %v1120 = vpack.c.b16 %v976, %v967
        %v1121 = vpack.c.b16 %v977, %v968
        %v1122 = vpack.c.b16 %v978, %v969
        %v1123 = vpack.c.b16 %v979, %v970
        %v1124 = vpack.c.b16 %v980, %v971
        %v1125 = vpack.c.b16 %v981, %v972
        %v1126 = vpack.c.b16 %v982, %v973
        %v1127 = vpack.c.b16 %v983, %v974
        %v1416 = vunpack.c.l.b16 %v392
        %v1417 = vunpack.c.l.b16 %v393
        %v1418 = vunpack.c.l.b16 %v394
        %v1419 = vunpack.c.l.b16 %v395
        %v1420 = vunpack.c.l.b16 %v396
        %v1421 = vunpack.c.l.b16 %v397
        %v1422 = vunpack.c.l.b16 %v398
        %v1423 = vunpack.c.l.b16 %v399
        %v1424 = vunpack.c.l.b16 %v400
        %v1425 = vunpack.c.l.b16 %v401
        %v1426 = vunpack.c.l.b16 %v402
        %v1427 = vunpack.c.l.b16 %v403
        %v1428 = vunpack.c.l.b16 %v404
        %v1429 = vunpack.c.l.b16 %v405
        %v1430 = vunpack.c.l.b16 %v406
        %v1431 = vunpack.c.l.b16 %v407
        %v1432 = vunpack.c.l.b16 %v408
        %v1433 = vunpack.c.l.b16 %v409
        %v1434 = vunpack.c.l.b16 %v410
        %v1435 = vunpack.c.l.b16 %v411
        %v1436 = vunpack.c.l.b16 %v412
        %v1437 = vunpack.c.l.b16 %v413
        %v1438 = vunpack.c.l.b16 %v414
        %v1439 = vunpack.c.l.b16 %v415
        %v1440 = vunpack.c.l.b16 %v416
        %v1441 = vunpack.c.l.b16 %v417
        %v1442 = vunpack.c.l.b16 %v418
        %v1443 = vunpack.c.l.b16 %v419
        %v1444 = vunpack.c.l.b16 %v420
        %v1445 = vunpack.c.l.b16 %v421
        %v1446 = vunpack.c.l.b16 %v422
        %v1447 = vunpack.c.l.b16 %v423
        %v1448 = vunpack.c.l.b16 %v424
        %v1449 = vunpack.c.l.b16 %v425
        %v1450 = vunpack.c.l.b16 %v426
        %v1451 = vunpack.c.l.b16 %v427
        %v1452 = vunpack.c.l.b16 %v428
        %v1453 = vunpack.c.l.b16 %v429
        %v1454 = vunpack.c.l.b16 %v430
        %v1455 = vunpack.c.l.b16 %v431
        %v1456 = vunpack.c.l.b16 %v432
        %v1457 = vunpack.c.l.b16 %v433
        %v1458 = vunpack.c.l.b16 %v434
        %v1459 = vunpack.c.l.b16 %v435
        %v1460 = vunpack.c.l.b16 %v436
        %v1461 = vunpack.c.l.b16 %v437
        %v1462 = vunpack.c.l.b16 %v438
        %v1463 = vunpack.c.l.b16 %v439
        %v1464 = vunpack.c.l.b16 %v440
        %v1465 = vunpack.c.l.b16 %v441
        %v1466 = vunpack.c.l.b16 %v442
        %v1467 = vunpack.c.l.b16 %v443
        %v1468 = vunpack.c.l.b16 %v444
        %v1469 = vunpack.c.l.b16 %v445
        %v1470 = vunpack.c.l.b16 %v446
        %v1471 = vunpack.c.l.b16 %v447
        %v1472 = vunpack.c.l.b16 %v448
        %v1473 = vunpack.c.l.b16 %v449
        %v1474 = vunpack.c.l.b16 %v450
        %v1475 = vunpack.c.l.b16 %v451
        %v1476 = vunpack.c.l.b16 %v452
        %v1477 = vunpack.c.l.b16 %v453
        %v1478 = vunpack.c.l.b16 %v454
        %v1479 = vunpack.c.l.b16 %v455
        %v1480 = vunpack.c.l.b16 %v456
        %v1481 = vunpack.c.l.b16 %v457
        %v1482 = vunpack.c.l.b16 %v458
        %v1483 = vunpack.c.l.b16 %v459
        %v1484 = vunpack.c.l.b16 %v460
        %v1485 = vunpack.c.l.b16 %v461
        %v1486 = vunpack.c.l.b16 %v462
        %v1487 = vunpack.c.l.b16 %v463
        %v1488 = vunpack.c.l.b16 %v464
        %v1489 = vunpack.c.l.b16 %v465
        %v1490 = vunpack.c.l.b16 %v466
        %v1491 = vunpack.c.l.b16 %v467
        %v1492 = vunpack.c.l.b16 %v468
        %v1493 = vunpack.c.l.b16 %v469
        %v1494 = vunpack.c.l.b16 %v470
        %v1495 = vunpack.c.l.b16 %v471
        %v1496 = vunpack.c.l.b16 %v472
        %v1497 = vunpack.c.l.b16 %v473
        %v1498 = vunpack.c.l.b16 %v474
        %v1499 = vunpack.c.l.b16 %v475
        %v1500 = vunpack.c.l.b16 %v476
        %v1501 = vunpack.c.l.b16 %v477
        %v1502 = vunpack.c.l.b16 %v478
        %v1503 = vunpack.c.l.b16 %v479
        %v1504 = vunpack.c.l.b16 %v480
        %v1505 = vunpack.c.l.b16 %v481
        %v1506 = vunpack.c.l.b16 %v482
        %v1507 = vunpack.c.l.b16 %v483
        %v1508 = vunpack.c.l.b16 %v484
        %v1509 = vunpack.c.l.b16 %v485
        %v1510 = vunpack.c.l.b16 %v486
        %v1511 = vunpack.c.l.b16 %v487
        %v1512 = vunpack.c.l.b16 %v488
        %v1513 = vunpack.c.l.b16 %v489
        %v1514 = vunpack.c.l.b16 %v490
        %v1515 = vunpack.c.l.b16 %v491
        %v1516 = vunpack.c.l.b16 %v492
        %v1517 = vunpack.c.l.b16 %v493
        %v1518 = vunpack.c.l.b16 %v494
        %v1519 = vunpack.c.l.b16 %v495
        %v1520 = vunpack.c.l.b16 %v496
        %v1521 = vunpack.c.l.b16 %v497
        %v1522 = vunpack.c.l.b16 %v498
        %v1523 = vunpack.c.l.b16 %v499
        %v1524 = vunpack.c.l.b16 %v500
        %v1525 = vunpack.c.l.b16 %v501
        %v1526 = vunpack.c.l.b16 %v502
        %v1527 = vunpack.c.l.b16 %v503
        %v1528 = vunpack.c.l.b16 %v504
        %v1529 = vunpack.c.l.b16 %v505
        %v1530 = vunpack.c.l.b16 %v506
        %v1531 = vunpack.c.l.b16 %v507
        %v1532 = vunpack.c.l.b16 %v508
        %v1533 = vunpack.c.l.b16 %v509
        %v1534 = vunpack.c.l.b16 %v510
        %v1535 = vunpack.c.l.b16 %v511
        %v1536 = vunpack.c.l.b16 %v512
        %v1537 = vunpack.c.l.b16 %v513
        %v1538 = vunpack.c.l.b16 %v514
        %v1539 = vunpack.c.l.b16 %v515
        %v1540 = vunpack.c.l.b16 %v516
        %v1541 = vunpack.c.l.b16 %v517
        %v1542 = vunpack.c.l.b16 %v518
        %v1543 = vunpack.c.l.b16 %v519
        %v1544 = vunpack.c.l.b16 %v520
        %v1545 = vunpack.c.l.b16 %v521
        %v1546 = vunpack.c.l.b16 %v522
        %v1547 = vunpack.c.l.b16 %v523
        %v1548 = vunpack.c.l.b16 %v524
        %v1549 = vunpack.c.l.b16 %v525
        %v1550 = vunpack.c.l.b16 %v526
        %v1551 = vunpack.c.l.b16 %v527
        %v1552 = vunpack.c.l.b16 %v528
        %v1553 = vunpack.c.l.b16 %v529
        %v1554 = vunpack.c.l.b16 %v530
        %v1555 = vunpack.c.l.b16 %v531
        %v1556 = vunpack.c.l.b16 %v532
        %v1557 = vunpack.c.l.b16 %v533
        %v1558 = vunpack.c.l.b16 %v534
        %v1559 = vunpack.c.l.b16 %v535
        %v1560 = vpack.c.b16 %v1417, %v1416
        %v1561 = vpack.c.b16 %v1419, %v1418
        %v1562 = vpack.c.b16 %v1421, %v1420
        %v1563 = vpack.c.b16 %v1423, %v1422
        %v1564 = vpack.c.b16 %v1425, %v1424
        %v1565 = vpack.c.b16 %v1427, %v1426
        %v1566 = vpack.c.b16 %v1429, %v1428
        %v1567 = vpack.c.b16 %v1431, %v1430
        %v1568 = vpack.c.b16 %v1433, %v1432
        %v1569 = vpack.c.b16 %v1435, %v1434
        %v1570 = vpack.c.b16 %v1437, %v1436
        %v1571 = vpack.c.b16 %v1439, %v1438
        %v1572 = vpack.c.b16 %v1441, %v1440
        %v1573 = vpack.c.b16 %v1443, %v1442
        %v1574 = vpack.c.b16 %v1445, %v1444
        %v1575 = vpack.c.b16 %v1447, %v1446
        %v1576 = vpack.c.b16 %v1449, %v1448
        %v1577 = vpack.c.b16 %v1451, %v1450
        %v1578 = vpack.c.b16 %v1453, %v1452
        %v1579 = vpack.c.b16 %v1455, %v1454
        %v1580 = vpack.c.b16 %v1457, %v1456
        %v1581 = vpack.c.b16 %v1459, %v1458
        %v1582 = vpack.c.b16 %v1461, %v1460
        %v1583 = vpack.c.b16 %v1463, %v1462
        %v1584 = vpack.c.b16 %v1465, %v1464
        %v1585 = vpack.c.b16 %v1467, %v1466
        %v1586 = vpack.c.b16 %v1469, %v1468
        %v1587 = vpack.c.b16 %v1471, %v1470
        %v1588 = vpack.c.b16 %v1473, %v1472
        %v1589 = vpack.c.b16 %v1475, %v1474
        %v1590 = vpack.c.b16 %v1477, %v1476
        %v1591 = vpack.c.b16 %v1479, %v1478
        %v1592 = vpack.c.b16 %v1481, %v1480
        %v1593 = vpack.c.b16 %v1483, %v1482
        %v1594 = vpack.c.b16 %v1485, %v1484
        %v1595 = vpack.c.b16 %v1487, %v1486
        %v1596 = vpack.c.b16 %v1489, %v1488
        %v1597 = vpack.c.b16 %v1491, %v1490
        %v1598 = vpack.c.b16 %v1493, %v1492
        %v1599 = vpack.c.b16 %v1495, %v1494
        %v1600 = vpack.c.b16 %v1497, %v1496
        %v1601 = vpack.c.b16 %v1499, %v1498
        %v1602 = vpack.c.b16 %v1501, %v1500
        %v1603 = vpack.c.b16 %v1503, %v1502
        %v1604 = vpack.c.b16 %v1505, %v1504
        %v1605 = vpack.c.b16 %v1507, %v1506
        %v1606 = vpack.c.b16 %v1509, %v1508
        %v1607 = vpack.c.b16 %v1511, %v1510
        %v1608 = vpack.c.b16 %v1513, %v1512
        %v1609 = vpack.c.b16 %v1515, %v1514
        %v1610 = vpack.c.b16 %v1517, %v1516
        %v1611 = vpack.c.b16 %v1519, %v1518
        %v1612 = vpack.c.b16 %v1521, %v1520
        %v1613 = vpack.c.b16 %v1523, %v1522
        %v1614 = vpack.c.b16 %v1525, %v1524
        %v1615 = vpack.c.b16 %v1527, %v1526
        %v1616 = vpack.c.b16 %v1529, %v1528
        %v1617 = vpack.c.b16 %v1531, %v1530
        %v1618 = vpack.c.b16 %v1533, %v1532
        %v1619 = vpack.c.b16 %v1535, %v1534
        %v1620 = vpack.c.b16 %v1537, %v1536
        %v1621 = vpack.c.b16 %v1539, %v1538
        %v1622 = vpack.c.b16 %v1541, %v1540
        %v1623 = vpack.c.b16 %v1543, %v1542
        %v1624 = vpack.c.b16 %v1545, %v1544
        %v1625 = vpack.c.b16 %v1547, %v1546
        %v1626 = vpack.c.b16 %v1549, %v1548
        %v1627 = vpack.c.b16 %v1551, %v1550
        %v1628 = vpack.c.b16 %v1553, %v1552
        %v1629 = vpack.c.b16 %v1555, %v1554
        %v1630 = vpack.c.b16 %v1557, %v1556
        %v1631 = vpack.c.b16 %v1559, %v1558
        %1704 = vmatprep.subr.bf16.mxu0 0
        %1705 = vmatpush1.bf16.msra.mxu0 %v1560
        %1706 = vmatprep.subr.bf16.mxu0 0
        %1707 = vmatpush1.bf16.msra.mxu0 %v1561
        %1708 = vmatprep.subr.bf16.mxu0 0
        %1709 = vmatpush1.bf16.msra.mxu0 %v1562
        %1710 = vmatprep.subr.bf16.mxu0 0
        %1711 = vmatpush1.bf16.msra.mxu0 %v1563
        %1712 = vmatprep.subr.bf16.mxu0 0
        %1713 = vmatpush1.bf16.msra.mxu0 %v1564
        %1714 = vmatprep.subr.bf16.mxu0 0
        %1715 = vmatpush1.bf16.msra.mxu0 %v1565
        %1716 = vmatprep.subr.bf16.mxu0 0
        %1717 = vmatpush1.bf16.msra.mxu0 %v1566
        %1718 = vmatprep.subr.bf16.mxu0 0
        %1719 = vmatpush1.bf16.msra.mxu0 %v1567
        %1720 = vmatprep.subr.bf16.mxu0 0
        %1721 = vmatpush1.bf16.msra.mxu0 %v1568
        %1722 = vmatprep.subr.bf16.mxu0 0
        %1723 = vmatpush1.bf16.msra.mxu0 %v1569
        %1724 = vmatprep.subr.bf16.mxu0 0
        %1725 = vmatpush1.bf16.msra.mxu0 %v1570
        %1726 = vmatprep.subr.bf16.mxu0 0
        %1727 = vmatpush1.bf16.msra.mxu0 %v1571
        %1728 = vmatprep.subr.bf16.mxu0 0
        %1729 = vmatpush1.bf16.msra.mxu0 %v1572
        %1730 = vmatprep.subr.bf16.mxu0 0
        %1731 = vmatpush1.bf16.msra.mxu0 %v1573
        %1732 = vmatprep.subr.bf16.mxu0 0
        %1733 = vmatpush1.bf16.msra.mxu0 %v1574
        %1734 = vmatprep.subr.bf16.mxu0 0
        %1735 = vmatpush1.bf16.msra.mxu0 %v1575
        %1736 = vmatprep.mubr.bf16.mxu0 %v985
        %1737 = vmatmul.mubr.bf16.gmra.mrb[0].mxu0 %v984
        %v1738 = vpop.f32.mrb[0].mxu0
        %v1739 = vadd.f32 0.0, %v1738
        %v1740 = vpop.f32.mrb[0].mxu0
        %v1741 = vpop.f32.mrb[0].mxu0
        %v1742 = vadd.f32 0.0, %v1741
        %v1743 = vpop.f32.mrb[0].mxu0
        %1744 = vmatprep.mubr.bf16.mxu0 %v994
        %1745 = vmatmul.mubr.bf16.gmra.mrb[0].mxu0 %v993
        %v1746 = vpop.f32.mrb[0].mxu0
        %v1747 = vadd.f32 0.0, %v1746
        %v1748 = vpop.f32.mrb[0].mxu0
        %v1749 = vpop.f32.mrb[0].mxu0
        %v1750 = vadd.f32 0.0, %v1749
        %v1751 = vpop.f32.mrb[0].mxu0
        %1752 = vmatprep.mubr.bf16.mxu0 %v1003
        %1753 = vmatmul.mubr.bf16.gmra.mrb[0].mxu0 %v1002
        %v1754 = vpop.f32.mrb[0].mxu0
        %v1755 = vadd.f32 0.0, %v1754
        %v1756 = vpop.f32.mrb[0].mxu0
        %v1757 = vpop.f32.mrb[0].mxu0
        %v1758 = vadd.f32 0.0, %v1757
        %v1759 = vpop.f32.mrb[0].mxu0
        %1760 = vmatprep.mubr.bf16.mxu0 %v1012
        %1761 = vmatmul.mubr.bf16.gmra.mrb[0].mxu0 %v1011
        %v1762 = vpop.f32.mrb[0].mxu0
        %v1763 = vadd.f32 0.0, %v1762
        %v1764 = vpop.f32.mrb[0].mxu0
        %v1765 = vpop.f32.mrb[0].mxu0
        %v1766 = vadd.f32 0.0, %v1765
        %v1767 = vpop.f32.mrb[0].mxu0
        %1768 = vmatprep.mubr.bf16.mxu0 %v1021
        %1769 = vmatmul.mubr.bf16.gmra.mrb[0].mxu0 %v1020
        %v1770 = vpop.f32.mrb[0].mxu0
        %v1771 = vadd.f32 0.0, %v1770
        %v1772 = vpop.f32.mrb[0].mxu0
        %v1773 = vpop.f32.mrb[0].mxu0
        %v1774 = vadd.f32 0.0, %v1773
        %v1775 = vpop.f32.mrb[0].mxu0
        %1776 = vmatprep.mubr.bf16.mxu0 %v1030
        %1777 = vmatmul.mubr.bf16.gmra.mrb[0].mxu0 %v1029
        %v1778 = vpop.f32.mrb[0].mxu0
        %v1779 = vadd.f32 0.0, %v1778
        %v1780 = vpop.f32.mrb[0].mxu0
        %v1781 = vpop.f32.mrb[0].mxu0
        %v1782 = vadd.f32 0.0, %v1781
        %v1783 = vpop.f32.mrb[0].mxu0
        %1784 = vmatprep.mubr.bf16.mxu0 %v1039
        %1785 = vmatmul.mubr.bf16.gmra.mrb[0].mxu0 %v1038
        %v1786 = vpop.f32.mrb[0].mxu0
        %v1787 = vadd.f32 0.0, %v1786
        %v1788 = vpop.f32.mrb[0].mxu0
        %v1789 = vpop.f32.mrb[0].mxu0
        %v1790 = vadd.f32 0.0, %v1789
        %v1791 = vpop.f32.mrb[0].mxu0
        %1792 = vmatprep.mubr.bf16.mxu0 %v1048
        %1793 = vmatmul.mubr.bf16.gmra.mrb[0].mxu0 %v1047
        %v1794 = vpop.f32.mrb[0].mxu0
        %v1795 = vadd.f32 0.0, %v1794
        %v1796 = vpop.f32.mrb[0].mxu0
        %v1797 = vpop.f32.mrb[0].mxu0
        %v1798 = vadd.f32 0.0, %v1797
        %v1799 = vpop.f32.mrb[0].mxu0
        %1800 = vmatprep.mubr.bf16.mxu0 %v1057
        %1801 = vmatmul.mubr.bf16.gmra.mrb[0].mxu0 %v1056
        %v1802 = vpop.f32.mrb[0].mxu0
        %v1803 = vadd.f32 0.0, %v1802
        %v1804 = vpop.f32.mrb[0].mxu0
        %v1805 = vpop.f32.mrb[0].mxu0
        %v1806 = vadd.f32 0.0, %v1805
        %v1807 = vpop.f32.mrb[0].mxu0
        %1808 = vmatprep.mubr.bf16.mxu0 %v1066
        %1809 = vmatmul.mubr.bf16.gmra.mrb[0].mxu0 %v1065
        %v1810 = vpop.f32.mrb[0].mxu0
        %v1811 = vadd.f32 0.0, %v1810
        %v1812 = vpop.f32.mrb[0].mxu0
        %v1813 = vpop.f32.mrb[0].mxu0
        %v1814 = vadd.f32 0.0, %v1813
        %v1815 = vpop.f32.mrb[0].mxu0
        %1816 = vmatprep.mubr.bf16.mxu0 %v1075
        %1817 = vmatmul.mubr.bf16.gmra.mrb[0].mxu0 %v1074
        %v1818 = vpop.f32.mrb[0].mxu0
        %v1819 = vadd.f32 0.0, %v1818
        %v1820 = vpop.f32.mrb[0].mxu0
        %v1821 = vpop.f32.mrb[0].mxu0
        %v1822 = vadd.f32 0.0, %v1821
        %v1823 = vpop.f32.mrb[0].mxu0
        %1824 = vmatprep.mubr.bf16.mxu0 %v1084
        %1825 = vmatmul.mubr.bf16.gmra.mrb[0].mxu0 %v1083
        %v1826 = vpop.f32.mrb[0].mxu0
        %v1827 = vadd.f32 0.0, %v1826
        %v1828 = vpop.f32.mrb[0].mxu0
        %v1829 = vpop.f32.mrb[0].mxu0
        %v1830 = vadd.f32 0.0, %v1829
        %v1831 = vpop.f32.mrb[0].mxu0
        %1832 = vmatprep.mubr.bf16.mxu0 %v1093
        %1833 = vmatmul.mubr.bf16.gmra.mrb[0].mxu0 %v1092
        %v1834 = vpop.f32.mrb[0].mxu0
        %v1835 = vadd.f32 0.0, %v1834
        %v1836 = vpop.f32.mrb[0].mxu0
        %v1837 = vpop.f32.mrb[0].mxu0
        %v1838 = vadd.f32 0.0, %v1837
        %v1839 = vpop.f32.mrb[0].mxu0
        %1840 = vmatprep.mubr.bf16.mxu0 %v1102
        %1841 = vmatmul.mubr.bf16.gmra.mrb[0].mxu0 %v1101
        %v1842 = vpop.f32.mrb[0].mxu0
        %v1843 = vadd.f32 0.0, %v1842
        %v1844 = vpop.f32.mrb[0].mxu0
        %v1845 = vpop.f32.mrb[0].mxu0
        %v1846 = vadd.f32 0.0, %v1845
        %v1847 = vpop.f32.mrb[0].mxu0
        %1848 = vmatprep.mubr.bf16.mxu0 %v1111
        %1849 = vmatmul.mubr.bf16.gmra.mrb[0].mxu0 %v1110
        %v1850 = vpop.f32.mrb[0].mxu0
        %v1851 = vadd.f32 0.0, %v1850
        %v1852 = vpop.f32.mrb[0].mxu0
        %v1853 = vpop.f32.mrb[0].mxu0
        %v1854 = vadd.f32 0.0, %v1853
        %v1855 = vpop.f32.mrb[0].mxu0
        %1856 = vmatprep.mubr.bf16.mxu0 %v1120
        %1857 = vmatmul.mubr.bf16.gmra.mrb[0].mxu0 %v1119
        %v1858 = vpop.f32.mrb[0].mxu0
        %v1859 = vadd.f32 0.0, %v1858
        %v1860 = vpop.f32.mrb[0].mxu0
        %v1861 = vpop.f32.mrb[0].mxu0
        %v1862 = vadd.f32 0.0, %v1861
        %v1863 = vpop.f32.mrb[0].mxu0
        %1864 = vdwg.mxu0
        %1865 = vmatprep.subr.bf16.mxu0 0
        %1866 = vmatpush1.bf16.msra.mxu0 %v1576
        %1867 = vmatprep.subr.bf16.mxu0 0
        %1868 = vmatpush1.bf16.msra.mxu0 %v1577
        %1869 = vmatprep.subr.bf16.mxu0 0
        %1870 = vmatpush1.bf16.msra.mxu0 %v1578
        %1871 = vmatprep.subr.bf16.mxu0 0
        %1872 = vmatpush1.bf16.msra.mxu0 %v1579
        %1873 = vmatprep.subr.bf16.mxu0 0
        %1874 = vmatpush1.bf16.msra.mxu0 %v1580
        %1875 = vmatprep.subr.bf16.mxu0 0
        %1876 = vmatpush1.bf16.msra.mxu0 %v1581
        %1877 = vmatprep.subr.bf16.mxu0 0
        %1878 = vmatpush1.bf16.msra.mxu0 %v1582
        %1879 = vmatprep.subr.bf16.mxu0 0
        %1880 = vmatpush1.bf16.msra.mxu0 %v1583
        %1881 = vmatprep.subr.bf16.mxu0 0
        %1882 = vmatpush1.bf16.msra.mxu0 %v1584
        %1883 = vmatprep.subr.bf16.mxu0 0
        %1884 = vmatpush1.bf16.msra.mxu0 %v1585
        %1885 = vmatprep.subr.bf16.mxu0 0
        %1886 = vmatpush1.bf16.msra.mxu0 %v1586
        %1887 = vmatprep.subr.bf16.mxu0 0
        %1888 = vmatpush1.bf16.msra.mxu0 %v1587
        %1889 = vmatprep.subr.bf16.mxu0 0
        %1890 = vmatpush1.bf16.msra.mxu0 %v1588
        %1891 = vmatprep.subr.bf16.mxu0 0
        %1892 = vmatpush1.bf16.msra.mxu0 %v1589
        %1893 = vmatprep.subr.bf16.mxu0 0
        %1894 = vmatpush1.bf16.msra.mxu0 %v1590
        %1895 = vmatprep.subr.bf16.mxu0 0
        %1896 = vmatpush1.bf16.msra.mxu0 %v1591
        %1897 = vmatprep.mubr.bf16.mxu0 %v987
        %1898 = vmatmul.mubr.bf16.gmra.mrb[0].mxu0 %v986
        %v1899 = vpop.f32.mrb[0].mxu0
        %v1900 = vadd.f32 %v1739, %v1899
        %v1901 = vpop.f32.mrb[0].mxu0
        %v1902 = vpop.f32.mrb[0].mxu0
        %v1903 = vadd.f32 %v1742, %v1902
        %v1904 = vpop.f32.mrb[0].mxu0
        %1905 = vmatprep.mubr.bf16.mxu0 %v996
        %1906 = vmatmul.mubr.bf16.gmra.mrb[0].mxu0 %v995
        %v1907 = vpop.f32.mrb[0].mxu0
        %v1908 = vadd.f32 %v1747, %v1907
        %v1909 = vpop.f32.mrb[0].mxu0
        %v1910 = vpop.f32.mrb[0].mxu0
        %v1911 = vadd.f32 %v1750, %v1910
        %v1912 = vpop.f32.mrb[0].mxu0
        %1913 = vmatprep.mubr.bf16.mxu0 %v1005
        %1914 = vmatmul.mubr.bf16.gmra.mrb[0].mxu0 %v1004
        %v1915 = vpop.f32.mrb[0].mxu0
        %v1916 = vadd.f32 %v1755, %v1915
        %v1917 = vpop.f32.mrb[0].mxu0
        %v1918 = vpop.f32.mrb[0].mxu0
        %v1919 = vadd.f32 %v1758, %v1918
        %v1920 = vpop.f32.mrb[0].mxu0
        %1921 = vmatprep.mubr.bf16.mxu0 %v1014
        %1922 = vmatmul.mubr.bf16.gmra.mrb[0].mxu0 %v1013
        %v1923 = vpop.f32.mrb[0].mxu0
        %v1924 = vadd.f32 %v1763, %v1923
        %v1925 = vpop.f32.mrb[0].mxu0
        %v1926 = vpop.f32.mrb[0].mxu0
        %v1927 = vadd.f32 %v1766, %v1926
        %v1928 = vpop.f32.mrb[0].mxu0
        %1929 = vmatprep.mubr.bf16.mxu0 %v1023
        %1930 = vmatmul.mubr.bf16.gmra.mrb[0].mxu0 %v1022
        %v1931 = vpop.f32.mrb[0].mxu0
        %v1932 = vadd.f32 %v1771, %v1931
        %v1933 = vpop.f32.mrb[0].mxu0
        %v1934 = vpop.f32.mrb[0].mxu0
        %v1935 = vadd.f32 %v1774, %v1934
        %v1936 = vpop.f32.mrb[0].mxu0
        %1937 = vmatprep.mubr.bf16.mxu0 %v1032
        %1938 = vmatmul.mubr.bf16.gmra.mrb[0].mxu0 %v1031
        %v1939 = vpop.f32.mrb[0].mxu0
        %v1940 = vadd.f32 %v1779, %v1939
        %v1941 = vpop.f32.mrb[0].mxu0
        %v1942 = vpop.f32.mrb[0].mxu0
        %v1943 = vadd.f32 %v1782, %v1942
        %v1944 = vpop.f32.mrb[0].mxu0
        %1945 = vmatprep.mubr.bf16.mxu0 %v1041
        %1946 = vmatmul.mubr.bf16.gmra.mrb[0].mxu0 %v1040
        %v1947 = vpop.f32.mrb[0].mxu0
        %v1948 = vadd.f32 %v1787, %v1947
        %v1949 = vpop.f32.mrb[0].mxu0
        %v1950 = vpop.f32.mrb[0].mxu0
        %v1951 = vadd.f32 %v1790, %v1950
        %v1952 = vpop.f32.mrb[0].mxu0
        %1953 = vmatprep.mubr.bf16.mxu0 %v1050
        %1954 = vmatmul.mubr.bf16.gmra.mrb[0].mxu0 %v1049
        %v1955 = vpop.f32.mrb[0].mxu0
        %v1956 = vadd.f32 %v1795, %v1955
        %v1957 = vpop.f32.mrb[0].mxu0
        %v1958 = vpop.f32.mrb[0].mxu0
        %v1959 = vadd.f32 %v1798, %v1958
        %v1960 = vpop.f32.mrb[0].mxu0
        %1961 = vmatprep.mubr.bf16.mxu0 %v1059
        %1962 = vmatmul.mubr.bf16.gmra.mrb[0].mxu0 %v1058
        %v1963 = vpop.f32.mrb[0].mxu0
        %v1964 = vadd.f32 %v1803, %v1963
        %v1965 = vpop.f32.mrb[0].mxu0
        %v1966 = vpop.f32.mrb[0].mxu0
        %v1967 = vadd.f32 %v1806, %v1966
        %v1968 = vpop.f32.mrb[0].mxu0
        %1969 = vmatprep.mubr.bf16.mxu0 %v1068
        %1970 = vmatmul.mubr.bf16.gmra.mrb[0].mxu0 %v1067
        %v1971 = vpop.f32.mrb[0].mxu0
        %v1972 = vadd.f32 %v1811, %v1971
        %v1973 = vpop.f32.mrb[0].mxu0
        %v1974 = vpop.f32.mrb[0].mxu0
        %v1975 = vadd.f32 %v1814, %v1974
        %v1976 = vpop.f32.mrb[0].mxu0
        %1977 = vmatprep.mubr.bf16.mxu0 %v1077
        %1978 = vmatmul.mubr.bf16.gmra.mrb[0].mxu0 %v1076
        %v1979 = vpop.f32.mrb[0].mxu0
        %v1980 = vadd.f32 %v1819, %v1979
        %v1981 = vpop.f32.mrb[0].mxu0
        %v1982 = vpop.f32.mrb[0].mxu0
        %v1983 = vadd.f32 %v1822, %v1982
        %v1984 = vpop.f32.mrb[0].mxu0
        %1985 = vmatprep.mubr.bf16.mxu0 %v1086
        %1986 = vmatmul.mubr.bf16.gmra.mrb[0].mxu0 %v1085
        %v1987 = vpop.f32.mrb[0].mxu0
        %v1988 = vadd.f32 %v1827, %v1987
        %v1989 = vpop.f32.mrb[0].mxu0
        %v1990 = vpop.f32.mrb[0].mxu0
        %v1991 = vadd.f32 %v1830, %v1990
        %v1992 = vpop.f32.mrb[0].mxu0
        %1993 = vmatprep.mubr.bf16.mxu0 %v1095
        %1994 = vmatmul.mubr.bf16.gmra.mrb[0].mxu0 %v1094
        %v1995 = vpop.f32.mrb[0].mxu0
        %v1996 = vadd.f32 %v1835, %v1995
        %v1997 = vpop.f32.mrb[0].mxu0
        %v1998 = vpop.f32.mrb[0].mxu0
        %v1999 = vadd.f32 %v1838, %v1998
        %v2000 = vpop.f32.mrb[0].mxu0
        %2001 = vmatprep.mubr.bf16.mxu0 %v1104
        %2002 = vmatmul.mubr.bf16.gmra.mrb[0].mxu0 %v1103
        %v2003 = vpop.f32.mrb[0].mxu0
        %v2004 = vadd.f32 %v1843, %v2003
        %v2005 = vpop.f32.mrb[0].mxu0
        %v2006 = vpop.f32.mrb[0].mxu0
        %v2007 = vadd.f32 %v1846, %v2006
        %v2008 = vpop.f32.mrb[0].mxu0
        %2009 = vmatprep.mubr.bf16.mxu0 %v1113
        %2010 = vmatmul.mubr.bf16.gmra.mrb[0].mxu0 %v1112
        %v2011 = vpop.f32.mrb[0].mxu0
        %v2012 = vadd.f32 %v1851, %v2011
        %v2013 = vpop.f32.mrb[0].mxu0
        %v2014 = vpop.f32.mrb[0].mxu0
        %v2015 = vadd.f32 %v1854, %v2014
        %v2016 = vpop.f32.mrb[0].mxu0
        %2017 = vmatprep.mubr.bf16.mxu0 %v1122
        %2018 = vmatmul.mubr.bf16.gmra.mrb[0].mxu0 %v1121
        %v2019 = vpop.f32.mrb[0].mxu0
        %v2020 = vadd.f32 %v1859, %v2019
        %v2021 = vpop.f32.mrb[0].mxu0
        %v2022 = vpop.f32.mrb[0].mxu0
        %v2023 = vadd.f32 %v1862, %v2022
        %v2024 = vpop.f32.mrb[0].mxu0
        %2025 = vdwg.mxu0
        %2026 = vmatprep.subr.bf16.mxu0 0
        %2027 = vmatpush1.bf16.msra.mxu0 %v1592
        %2028 = vmatprep.subr.bf16.mxu0 0
        %2029 = vmatpush1.bf16.msra.mxu0 %v1593
        %2030 = vmatprep.subr.bf16.mxu0 0
        %2031 = vmatpush1.bf16.msra.mxu0 %v1594
        %2032 = vmatprep.subr.bf16.mxu0 0
        %2033 = vmatpush1.bf16.msra.mxu0 %v1595
        %2034 = vmatprep.subr.bf16.mxu0 0
        %2035 = vmatpush1.bf16.msra.mxu0 %v1596
        %2036 = vmatprep.subr.bf16.mxu0 0
        %2037 = vmatpush1.bf16.msra.mxu0 %v1597
        %2038 = vmatprep.subr.bf16.mxu0 0
        %2039 = vmatpush1.bf16.msra.mxu0 %v1598
        %2040 = vmatprep.subr.bf16.mxu0 0
        %2041 = vmatpush1.bf16.msra.mxu0 %v1599
        %2042 = vmatprep.subr.bf16.mxu0 0
        %2043 = vmatpush1.bf16.msra.mxu0 %v1600
        %2044 = vmatprep.subr.bf16.mxu0 0
        %2045 = vmatpush1.bf16.msra.mxu0 %v1601
        %2046 = vmatprep.subr.bf16.mxu0 0
        %2047 = vmatpush1.bf16.msra.mxu0 %v1602
        %2048 = vmatprep.subr.bf16.mxu0 0
        %2049 = vmatpush1.bf16.msra.mxu0 %v1603
        %2050 = vmatprep.subr.bf16.mxu0 0
        %2051 = vmatpush1.bf16.msra.mxu0 %v1604
        %2052 = vmatprep.subr.bf16.mxu0 0
        %2053 = vmatpush1.bf16.msra.mxu0 %v1605
        %2054 = vmatprep.subr.bf16.mxu0 0
        %2055 = vmatpush1.bf16.msra.mxu0 %v1606
        %2056 = vmatprep.subr.bf16.mxu0 0
        %2057 = vmatpush1.bf16.msra.mxu0 %v1607
        %2058 = vmatprep.mubr.bf16.mxu0 %v989
        %2059 = vmatmul.mubr.bf16.gmra.mrb[0].mxu0 %v988
        %v2060 = vpop.f32.mrb[0].mxu0
        %v2061 = vadd.f32 %v1900, %v2060
        %v2062 = vpop.f32.mrb[0].mxu0
        %v2063 = vpop.f32.mrb[0].mxu0
        %v2064 = vadd.f32 %v1903, %v2063
        %v2065 = vpop.f32.mrb[0].mxu0
        %2066 = vmatprep.mubr.bf16.mxu0 %v998
        %2067 = vmatmul.mubr.bf16.gmra.mrb[0].mxu0 %v997
        %v2068 = vpop.f32.mrb[0].mxu0
        %v2069 = vadd.f32 %v1908, %v2068
        %v2070 = vpop.f32.mrb[0].mxu0
        %v2071 = vpop.f32.mrb[0].mxu0
        %v2072 = vadd.f32 %v1911, %v2071
        %v2073 = vpop.f32.mrb[0].mxu0
        %2074 = vmatprep.mubr.bf16.mxu0 %v1007
        %2075 = vmatmul.mubr.bf16.gmra.mrb[0].mxu0 %v1006
        %v2076 = vpop.f32.mrb[0].mxu0
        %v2077 = vadd.f32 %v1916, %v2076
        %v2078 = vpop.f32.mrb[0].mxu0
        %v2079 = vpop.f32.mrb[0].mxu0
        %v2080 = vadd.f32 %v1919, %v2079
        %v2081 = vpop.f32.mrb[0].mxu0
        %2082 = vmatprep.mubr.bf16.mxu0 %v1016
        %2083 = vmatmul.mubr.bf16.gmra.mrb[0].mxu0 %v1015
        %v2084 = vpop.f32.mrb[0].mxu0
        %v2085 = vadd.f32 %v1924, %v2084
        %v2086 = vpop.f32.mrb[0].mxu0
        %v2087 = vpop.f32.mrb[0].mxu0
        %v2088 = vadd.f32 %v1927, %v2087
        %v2089 = vpop.f32.mrb[0].mxu0
        %2090 = vmatprep.mubr.bf16.mxu0 %v1025
        %2091 = vmatmul.mubr.bf16.gmra.mrb[0].mxu0 %v1024
        %v2092 = vpop.f32.mrb[0].mxu0
        %v2093 = vadd.f32 %v1932, %v2092
        %v2094 = vpop.f32.mrb[0].mxu0
        %v2095 = vpop.f32.mrb[0].mxu0
        %v2096 = vadd.f32 %v1935, %v2095
        %v2097 = vpop.f32.mrb[0].mxu0
        %2098 = vmatprep.mubr.bf16.mxu0 %v1034
        %2099 = vmatmul.mubr.bf16.gmra.mrb[0].mxu0 %v1033
        %v2100 = vpop.f32.mrb[0].mxu0
        %v2101 = vadd.f32 %v1940, %v2100
        %v2102 = vpop.f32.mrb[0].mxu0
        %v2103 = vpop.f32.mrb[0].mxu0
        %v2104 = vadd.f32 %v1943, %v2103
        %v2105 = vpop.f32.mrb[0].mxu0
        %2106 = vmatprep.mubr.bf16.mxu0 %v1043
        %2107 = vmatmul.mubr.bf16.gmra.mrb[0].mxu0 %v1042
        %v2108 = vpop.f32.mrb[0].mxu0
        %v2109 = vadd.f32 %v1948, %v2108
        %v2110 = vpop.f32.mrb[0].mxu0
        %v2111 = vpop.f32.mrb[0].mxu0
        %v2112 = vadd.f32 %v1951, %v2111
        %v2113 = vpop.f32.mrb[0].mxu0
        %2114 = vmatprep.mubr.bf16.mxu0 %v1052
        %2115 = vmatmul.mubr.bf16.gmra.mrb[0].mxu0 %v1051
        %v2116 = vpop.f32.mrb[0].mxu0
        %v2117 = vadd.f32 %v1956, %v2116
        %v2118 = vpop.f32.mrb[0].mxu0
        %v2119 = vpop.f32.mrb[0].mxu0
        %v2120 = vadd.f32 %v1959, %v2119
        %v2121 = vpop.f32.mrb[0].mxu0
        %2122 = vmatprep.mubr.bf16.mxu0 %v1061
        %2123 = vmatmul.mubr.bf16.gmra.mrb[0].mxu0 %v1060
        %v2124 = vpop.f32.mrb[0].mxu0
        %v2125 = vadd.f32 %v1964, %v2124
        %v2126 = vpop.f32.mrb[0].mxu0
        %v2127 = vpop.f32.mrb[0].mxu0
        %v2128 = vadd.f32 %v1967, %v2127
        %v2129 = vpop.f32.mrb[0].mxu0
        %2130 = vmatprep.mubr.bf16.mxu0 %v1070
        %2131 = vmatmul.mubr.bf16.gmra.mrb[0].mxu0 %v1069
        %v2132 = vpop.f32.mrb[0].mxu0
        %v2133 = vadd.f32 %v1972, %v2132
        %v2134 = vpop.f32.mrb[0].mxu0
        %v2135 = vpop.f32.mrb[0].mxu0
        %v2136 = vadd.f32 %v1975, %v2135
        %v2137 = vpop.f32.mrb[0].mxu0
        %2138 = vmatprep.mubr.bf16.mxu0 %v1079
        %2139 = vmatmul.mubr.bf16.gmra.mrb[0].mxu0 %v1078
        %v2140 = vpop.f32.mrb[0].mxu0
        %v2141 = vadd.f32 %v1980, %v2140
        %v2142 = vpop.f32.mrb[0].mxu0
        %v2143 = vpop.f32.mrb[0].mxu0
        %v2144 = vadd.f32 %v1983, %v2143
        %v2145 = vpop.f32.mrb[0].mxu0
        %2146 = vmatprep.mubr.bf16.mxu0 %v1088
        %2147 = vmatmul.mubr.bf16.gmra.mrb[0].mxu0 %v1087
        %v2148 = vpop.f32.mrb[0].mxu0
        %v2149 = vadd.f32 %v1988, %v2148
        %v2150 = vpop.f32.mrb[0].mxu0
        %v2151 = vpop.f32.mrb[0].mxu0
        %v2152 = vadd.f32 %v1991, %v2151
        %v2153 = vpop.f32.mrb[0].mxu0
        %2154 = vmatprep.mubr.bf16.mxu0 %v1097
        %2155 = vmatmul.mubr.bf16.gmra.mrb[0].mxu0 %v1096
        %v2156 = vpop.f32.mrb[0].mxu0
        %v2157 = vadd.f32 %v1996, %v2156
        %v2158 = vpop.f32.mrb[0].mxu0
        %v2159 = vpop.f32.mrb[0].mxu0
        %v2160 = vadd.f32 %v1999, %v2159
        %v2161 = vpop.f32.mrb[0].mxu0
        %2162 = vmatprep.mubr.bf16.mxu0 %v1106
        %2163 = vmatmul.mubr.bf16.gmra.mrb[0].mxu0 %v1105
        %v2164 = vpop.f32.mrb[0].mxu0
        %v2165 = vadd.f32 %v2004, %v2164
        %v2166 = vpop.f32.mrb[0].mxu0
        %v2167 = vpop.f32.mrb[0].mxu0
        %v2168 = vadd.f32 %v2007, %v2167
        %v2169 = vpop.f32.mrb[0].mxu0
        %2170 = vmatprep.mubr.bf16.mxu0 %v1115
        %2171 = vmatmul.mubr.bf16.gmra.mrb[0].mxu0 %v1114
        %v2172 = vpop.f32.mrb[0].mxu0
        %v2173 = vadd.f32 %v2012, %v2172
        %v2174 = vpop.f32.mrb[0].mxu0
        %v2175 = vpop.f32.mrb[0].mxu0
        %v2176 = vadd.f32 %v2015, %v2175
        %v2177 = vpop.f32.mrb[0].mxu0
        %2178 = vmatprep.mubr.bf16.mxu0 %v1124
        %2179 = vmatmul.mubr.bf16.gmra.mrb[0].mxu0 %v1123
        %v2180 = vpop.f32.mrb[0].mxu0
        %v2181 = vadd.f32 %v2020, %v2180
        %v2182 = vpop.f32.mrb[0].mxu0
        %v2183 = vpop.f32.mrb[0].mxu0
        %v2184 = vadd.f32 %v2023, %v2183
        %v2185 = vpop.f32.mrb[0].mxu0
        %2186 = vdwg.mxu0
        %2187 = vmatprep.subr.bf16.mxu0 0
        %2188 = vmatpush1.bf16.msra.mxu0 %v1608
        %2189 = vmatprep.subr.bf16.mxu0 0
        %2190 = vmatpush1.bf16.msra.mxu0 %v1609
        %2191 = vmatprep.subr.bf16.mxu0 0
        %2192 = vmatpush1.bf16.msra.mxu0 %v1610
        %2193 = vmatprep.subr.bf16.mxu0 0
        %2194 = vmatpush1.bf16.msra.mxu0 %v1611
        %2195 = vmatprep.subr.bf16.mxu0 0
        %2196 = vmatpush1.bf16.msra.mxu0 %v1612
        %2197 = vmatprep.subr.bf16.mxu0 0
        %2198 = vmatpush1.bf16.msra.mxu0 %v1613
        %2199 = vmatprep.subr.bf16.mxu0 0
        %2200 = vmatpush1.bf16.msra.mxu0 %v1614
        %2201 = vmatprep.subr.bf16.mxu0 0
        %2202 = vmatpush1.bf16.msra.mxu0 %v1615
        %2203 = vmatprep.subr.bf16.mxu0 0
        %2204 = vmatpush1.bf16.msra.mxu0 %v1616
        %2205 = vmatprep.subr.bf16.mxu0 0
        %2206 = vmatpush1.bf16.msra.mxu0 %v1617
        %2207 = vmatprep.subr.bf16.mxu0 0
        %2208 = vmatpush1.bf16.msra.mxu0 %v1618
        %2209 = vmatprep.subr.bf16.mxu0 0
        %2210 = vmatpush1.bf16.msra.mxu0 %v1619
        %2211 = vmatprep.subr.bf16.mxu0 0
        %2212 = vmatpush1.bf16.msra.mxu0 %v1620
        %2213 = vmatprep.subr.bf16.mxu0 0
        %2214 = vmatpush1.bf16.msra.mxu0 %v1621
        %2215 = vmatprep.subr.bf16.mxu0 0
        %2216 = vmatpush1.bf16.msra.mxu0 %v1622
        %2217 = vmatprep.subr.bf16.mxu0 0
        %2218 = vmatpush1.bf16.msra.mxu0 %v1623
        %2219 = vmatprep.mubr.bf16.mxu0 %v991
        %2220 = vmatmul.mubr.bf16.gmra.mrb[0].mxu0 %v990
        %v2221 = vpop.f32.mrb[0].mxu0
        %v2222 = vadd.f32 %v2061, %v2221
        %v2223 = vpop.f32.mrb[0].mxu0
        %v2224 = vpop.f32.mrb[0].mxu0
        %v2225 = vadd.f32 %v2064, %v2224
        %v2226 = vpop.f32.mrb[0].mxu0
        %2227 = vmatprep.mubr.bf16.mxu0 %v1000
        %2228 = vmatmul.mubr.bf16.gmra.mrb[0].mxu0 %v999
        %v2229 = vpop.f32.mrb[0].mxu0
        %v2230 = vadd.f32 %v2069, %v2229
        %v2231 = vpop.f32.mrb[0].mxu0
        %v2232 = vpop.f32.mrb[0].mxu0
        %v2233 = vadd.f32 %v2072, %v2232
        %v2234 = vpop.f32.mrb[0].mxu0
        %2235 = vmatprep.mubr.bf16.mxu0 %v1009
        %2236 = vmatmul.mubr.bf16.gmra.mrb[0].mxu0 %v1008
        %v2237 = vpop.f32.mrb[0].mxu0
        %v2238 = vadd.f32 %v2077, %v2237
        %v2239 = vpop.f32.mrb[0].mxu0
        %v2240 = vpop.f32.mrb[0].mxu0
        %v2241 = vadd.f32 %v2080, %v2240
        %v2242 = vpop.f32.mrb[0].mxu0
        %2243 = vmatprep.mubr.bf16.mxu0 %v1018
        %2244 = vmatmul.mubr.bf16.gmra.mrb[0].mxu0 %v1017
        %v2245 = vpop.f32.mrb[0].mxu0
        %v2246 = vadd.f32 %v2085, %v2245
        %v2247 = vpop.f32.mrb[0].mxu0
        %v2248 = vpop.f32.mrb[0].mxu0
        %v2249 = vadd.f32 %v2088, %v2248
        %v2250 = vpop.f32.mrb[0].mxu0
        %2251 = vmatprep.mubr.bf16.mxu0 %v1027
        %2252 = vmatmul.mubr.bf16.gmra.mrb[0].mxu0 %v1026
        %v2253 = vpop.f32.mrb[0].mxu0
        %v2254 = vadd.f32 %v2093, %v2253
        %v2255 = vpop.f32.mrb[0].mxu0
        %v2256 = vpop.f32.mrb[0].mxu0
        %v2257 = vadd.f32 %v2096, %v2256
        %v2258 = vpop.f32.mrb[0].mxu0
        %2259 = vmatprep.mubr.bf16.mxu0 %v1036
        %2260 = vmatmul.mubr.bf16.gmra.mrb[0].mxu0 %v1035
        %v2261 = vpop.f32.mrb[0].mxu0
        %v2262 = vadd.f32 %v2101, %v2261
        %v2263 = vpop.f32.mrb[0].mxu0
        %v2264 = vpop.f32.mrb[0].mxu0
        %v2265 = vadd.f32 %v2104, %v2264
        %v2266 = vpop.f32.mrb[0].mxu0
        %2267 = vmatprep.mubr.bf16.mxu0 %v1045
        %2268 = vmatmul.mubr.bf16.gmra.mrb[0].mxu0 %v1044
        %v2269 = vpop.f32.mrb[0].mxu0
        %v2270 = vadd.f32 %v2109, %v2269
        %v2271 = vpop.f32.mrb[0].mxu0
        %v2272 = vpop.f32.mrb[0].mxu0
        %v2273 = vadd.f32 %v2112, %v2272
        %v2274 = vpop.f32.mrb[0].mxu0
        %2275 = vmatprep.mubr.bf16.mxu0 %v1054
        %2276 = vmatmul.mubr.bf16.gmra.mrb[0].mxu0 %v1053
        %v2277 = vpop.f32.mrb[0].mxu0
        %v2278 = vadd.f32 %v2117, %v2277
        %v2279 = vpop.f32.mrb[0].mxu0
        %v2280 = vpop.f32.mrb[0].mxu0
        %v2281 = vadd.f32 %v2120, %v2280
        %v2282 = vpop.f32.mrb[0].mxu0
        %2283 = vmatprep.mubr.bf16.mxu0 %v1063
        %2284 = vmatmul.mubr.bf16.gmra.mrb[0].mxu0 %v1062
        %v2285 = vpop.f32.mrb[0].mxu0
        %v2286 = vadd.f32 %v2125, %v2285
        %v2287 = vpop.f32.mrb[0].mxu0
        %v2288 = vpop.f32.mrb[0].mxu0
        %v2289 = vadd.f32 %v2128, %v2288
        %v2290 = vpop.f32.mrb[0].mxu0
        %2291 = vmatprep.mubr.bf16.mxu0 %v1072
        %2292 = vmatmul.mubr.bf16.gmra.mrb[0].mxu0 %v1071
        %v2293 = vpop.f32.mrb[0].mxu0
        %v2294 = vadd.f32 %v2133, %v2293
        %v2295 = vpop.f32.mrb[0].mxu0
        %v2296 = vpop.f32.mrb[0].mxu0
        %v2297 = vadd.f32 %v2136, %v2296
        %v2298 = vpop.f32.mrb[0].mxu0
        %2299 = vmatprep.mubr.bf16.mxu0 %v1081
        %2300 = vmatmul.mubr.bf16.gmra.mrb[0].mxu0 %v1080
        %v2301 = vpop.f32.mrb[0].mxu0
        %v2302 = vadd.f32 %v2141, %v2301
        %v2303 = vpop.f32.mrb[0].mxu0
        %v2304 = vpop.f32.mrb[0].mxu0
        %v2305 = vadd.f32 %v2144, %v2304
        %v2306 = vpop.f32.mrb[0].mxu0
        %2307 = vmatprep.mubr.bf16.mxu0 %v1090
        %2308 = vmatmul.mubr.bf16.gmra.mrb[0].mxu0 %v1089
        %v2309 = vpop.f32.mrb[0].mxu0
        %v2310 = vadd.f32 %v2149, %v2309
        %v2311 = vpop.f32.mrb[0].mxu0
        %v2312 = vpop.f32.mrb[0].mxu0
        %v2313 = vadd.f32 %v2152, %v2312
        %v2314 = vpop.f32.mrb[0].mxu0
        %2315 = vmatprep.mubr.bf16.mxu0 %v1099
        %2316 = vmatmul.mubr.bf16.gmra.mrb[0].mxu0 %v1098
        %v2317 = vpop.f32.mrb[0].mxu0
        %v2318 = vadd.f32 %v2157, %v2317
        %v2319 = vpop.f32.mrb[0].mxu0
        %v2320 = vpop.f32.mrb[0].mxu0
        %v2321 = vadd.f32 %v2160, %v2320
        %v2322 = vpop.f32.mrb[0].mxu0
        %2323 = vmatprep.mubr.bf16.mxu0 %v1108
        %2324 = vmatmul.mubr.bf16.gmra.mrb[0].mxu0 %v1107
        %v2325 = vpop.f32.mrb[0].mxu0
        %v2326 = vadd.f32 %v2165, %v2325
        %v2327 = vpop.f32.mrb[0].mxu0
        %v2328 = vpop.f32.mrb[0].mxu0
        %v2329 = vadd.f32 %v2168, %v2328
        %v2330 = vpop.f32.mrb[0].mxu0
        %2331 = vmatprep.mubr.bf16.mxu0 %v1117
        %2332 = vmatmul.mubr.bf16.gmra.mrb[0].mxu0 %v1116
        %v2333 = vpop.f32.mrb[0].mxu0
        %v2334 = vadd.f32 %v2173, %v2333
        %v2335 = vpop.f32.mrb[0].mxu0
        %v2336 = vpop.f32.mrb[0].mxu0
        %v2337 = vadd.f32 %v2176, %v2336
        %v2338 = vpop.f32.mrb[0].mxu0
        %2339 = vmatprep.mubr.bf16.mxu0 %v1126
        %2340 = vmatmul.mubr.bf16.gmra.mrb[0].mxu0 %v1125
        %v2341 = vpop.f32.mrb[0].mxu0
        %v2342 = vadd.f32 %v2181, %v2341
        %v2343 = vpop.f32.mrb[0].mxu0
        %v2344 = vpop.f32.mrb[0].mxu0
        %v2345 = vadd.f32 %v2184, %v2344
        %v2346 = vpop.f32.mrb[0].mxu0
        %2347 = vdwg.mxu0
        %2348 = vmatprep.subr.bf16.mxu0 0
        %2349 = vmatpush1.bf16.msra.mxu0 %v1624
        %2350 = vmatprep.subr.bf16.mxu0 0
        %2351 = vmatpush1.bf16.msra.mxu0 %v1625
        %2352 = vmatprep.subr.bf16.mxu0 0
        %2353 = vmatpush1.bf16.msra.mxu0 %v1626
        %2354 = vmatprep.subr.bf16.mxu0 0
        %2355 = vmatpush1.bf16.msra.mxu0 %v1627
        %2356 = vmatprep.subr.bf16.mxu0 0
        %2357 = vmatpush1.bf16.msra.mxu0 %v1628
        %2358 = vmatprep.subr.bf16.mxu0 0
        %2359 = vmatpush1.bf16.msra.mxu0 %v1629
        %2360 = vmatprep.subr.bf16.mxu0 0
        %2361 = vmatpush1.bf16.msra.mxu0 %v1630
        %2362 = vmatprep.subr.bf16.mxu0 0
        %2363 = vmatpush1.bf16.msra.mxu0 %v1631
        %2364 = vmatprep.subr.bf16.mxu0 0
        %2365 = vmatpush1.bf16.msra.mxu0 0
        %2366 = vmatprep.subr.bf16.mxu0 0
        %2367 = vmatpush1.bf16.msra.mxu0 0
        %2368 = vmatprep.subr.bf16.mxu0 0
        %2369 = vmatpush1.bf16.msra.mxu0 0
        %2370 = vmatprep.subr.bf16.mxu0 0
        %2371 = vmatpush1.bf16.msra.mxu0 0
        %2372 = vmatprep.subr.bf16.mxu0 0
        %2373 = vmatpush1.bf16.msra.mxu0 0
        %2374 = vmatprep.subr.bf16.mxu0 0
        %2375 = vmatpush1.bf16.msra.mxu0 0
        %2376 = vmatprep.subr.bf16.mxu0 0
        %2377 = vmatpush1.bf16.msra.mxu0 0
        %2378 = vmatprep.subr.bf16.mxu0 0
        %2379 = vmatpush1.bf16.msra.mxu0 0
        %2380 = vmatprep.mubr.bf16.mxu0 0
        %2381 = vmatmul.mubr.bf16.gmra.mrb[0].mxu0 %v992
        %v2382 = vpop.f32.mrb[0].mxu0
        %v2383 = vadd.f32 %v2222, %v2382
        %v2384 = vpop.f32.mrb[0].mxu0
        %v2385 = vpop.f32.mrb[0].mxu0
        %v2386 = vadd.f32 %v2225, %v2385
        %v2387 = vpop.f32.mrb[0].mxu0
        %2388 = vmatprep.mubr.bf16.mxu0 0
        %2389 = vmatmul.mubr.bf16.gmra.mrb[0].mxu0 %v1001
        %v2390 = vpop.f32.mrb[0].mxu0
        %v2391 = vadd.f32 %v2230, %v2390
        %v2392 = vpop.f32.mrb[0].mxu0
        %v2393 = vpop.f32.mrb[0].mxu0
        %v2394 = vadd.f32 %v2233, %v2393
        %v2395 = vpop.f32.mrb[0].mxu0
        %2396 = vmatprep.mubr.bf16.mxu0 0
        %2397 = vmatmul.mubr.bf16.gmra.mrb[0].mxu0 %v1010
        %v2398 = vpop.f32.mrb[0].mxu0
        %v2399 = vadd.f32 %v2238, %v2398
        %v2400 = vpop.f32.mrb[0].mxu0
        %v2401 = vpop.f32.mrb[0].mxu0
        %v2402 = vadd.f32 %v2241, %v2401
        %v2403 = vpop.f32.mrb[0].mxu0
        %2404 = vmatprep.mubr.bf16.mxu0 0
        %2405 = vmatmul.mubr.bf16.gmra.mrb[0].mxu0 %v1019
        %v2406 = vpop.f32.mrb[0].mxu0
        %v2407 = vadd.f32 %v2246, %v2406
        %v2408 = vpop.f32.mrb[0].mxu0
        %v2409 = vpop.f32.mrb[0].mxu0
        %v2410 = vadd.f32 %v2249, %v2409
        %v2411 = vpop.f32.mrb[0].mxu0
        %2412 = vmatprep.mubr.bf16.mxu0 0
        %2413 = vmatmul.mubr.bf16.gmra.mrb[0].mxu0 %v1028
        %v2414 = vpop.f32.mrb[0].mxu0
        %v2415 = vadd.f32 %v2254, %v2414
        %v2416 = vpop.f32.mrb[0].mxu0
        %v2417 = vpop.f32.mrb[0].mxu0
        %v2418 = vadd.f32 %v2257, %v2417
        %v2419 = vpop.f32.mrb[0].mxu0
        %2420 = vmatprep.mubr.bf16.mxu0 0
        %2421 = vmatmul.mubr.bf16.gmra.mrb[0].mxu0 %v1037
        %v2422 = vpop.f32.mrb[0].mxu0
        %v2423 = vadd.f32 %v2262, %v2422
        %v2424 = vpop.f32.mrb[0].mxu0
        %v2425 = vpop.f32.mrb[0].mxu0
        %v2426 = vadd.f32 %v2265, %v2425
        %v2427 = vpop.f32.mrb[0].mxu0
        %2428 = vmatprep.mubr.bf16.mxu0 0
        %2429 = vmatmul.mubr.bf16.gmra.mrb[0].mxu0 %v1046
        %v2430 = vpop.f32.mrb[0].mxu0
        %v2431 = vadd.f32 %v2270, %v2430
        %v2432 = vpop.f32.mrb[0].mxu0
        %v2433 = vpop.f32.mrb[0].mxu0
        %v2434 = vadd.f32 %v2273, %v2433
        %v2435 = vpop.f32.mrb[0].mxu0
        %2436 = vmatprep.mubr.bf16.mxu0 0
        %2437 = vmatmul.mubr.bf16.gmra.mrb[0].mxu0 %v1055
        %v2438 = vpop.f32.mrb[0].mxu0
        %v2439 = vadd.f32 %v2278, %v2438
        %v2440 = vpop.f32.mrb[0].mxu0
        %v2441 = vpop.f32.mrb[0].mxu0
        %v2442 = vadd.f32 %v2281, %v2441
        %v2443 = vpop.f32.mrb[0].mxu0
        %2444 = vmatprep.mubr.bf16.mxu0 0
        %2445 = vmatmul.mubr.bf16.gmra.mrb[0].mxu0 %v1064
        %v2446 = vpop.f32.mrb[0].mxu0
        %v2447 = vadd.f32 %v2286, %v2446
        %v2448 = vpop.f32.mrb[0].mxu0
        %v2449 = vpop.f32.mrb[0].mxu0
        %v2450 = vadd.f32 %v2289, %v2449
        %v2451 = vpop.f32.mrb[0].mxu0
        %2452 = vmatprep.mubr.bf16.mxu0 0
        %2453 = vmatmul.mubr.bf16.gmra.mrb[0].mxu0 %v1073
        %v2454 = vpop.f32.mrb[0].mxu0
        %v2455 = vadd.f32 %v2294, %v2454
        %v2456 = vpop.f32.mrb[0].mxu0
        %v2457 = vpop.f32.mrb[0].mxu0
        %v2458 = vadd.f32 %v2297, %v2457
        %v2459 = vpop.f32.mrb[0].mxu0
        %2460 = vmatprep.mubr.bf16.mxu0 0
        %2461 = vmatmul.mubr.bf16.gmra.mrb[0].mxu0 %v1082
        %v2462 = vpop.f32.mrb[0].mxu0
        %v2463 = vadd.f32 %v2302, %v2462
        %v2464 = vpop.f32.mrb[0].mxu0
        %v2465 = vpop.f32.mrb[0].mxu0
        %v2466 = vadd.f32 %v2305, %v2465
        %v2467 = vpop.f32.mrb[0].mxu0
        %2468 = vmatprep.mubr.bf16.mxu0 0
        %2469 = vmatmul.mubr.bf16.gmra.mrb[0].mxu0 %v1091
        %v2470 = vpop.f32.mrb[0].mxu0
        %v2471 = vadd.f32 %v2310, %v2470
        %v2472 = vpop.f32.mrb[0].mxu0
        %v2473 = vpop.f32.mrb[0].mxu0
        %v2474 = vadd.f32 %v2313, %v2473
        %v2475 = vpop.f32.mrb[0].mxu0
        %2476 = vmatprep.mubr.bf16.mxu0 0
        %2477 = vmatmul.mubr.bf16.gmra.mrb[0].mxu0 %v1100
        %v2478 = vpop.f32.mrb[0].mxu0
        %v2479 = vadd.f32 %v2318, %v2478
        %v2480 = vpop.f32.mrb[0].mxu0
        %v2481 = vpop.f32.mrb[0].mxu0
        %v2482 = vadd.f32 %v2321, %v2481
        %v2483 = vpop.f32.mrb[0].mxu0
        %2484 = vmatprep.mubr.bf16.mxu0 0
        %2485 = vmatmul.mubr.bf16.gmra.mrb[0].mxu0 %v1109
        %v2486 = vpop.f32.mrb[0].mxu0
        %v2487 = vadd.f32 %v2326, %v2486
        %v2488 = vpop.f32.mrb[0].mxu0
        %v2489 = vpop.f32.mrb[0].mxu0
        %v2490 = vadd.f32 %v2329, %v2489
        %v2491 = vpop.f32.mrb[0].mxu0
        %2492 = vmatprep.mubr.bf16.mxu0 0
        %2493 = vmatmul.mubr.bf16.gmra.mrb[0].mxu0 %v1118
        %v2494 = vpop.f32.mrb[0].mxu0
        %v2495 = vadd.f32 %v2334, %v2494
        %v2496 = vpop.f32.mrb[0].mxu0
        %v2497 = vpop.f32.mrb[0].mxu0
        %v2498 = vadd.f32 %v2337, %v2497
        %v2499 = vpop.f32.mrb[0].mxu0
        %2500 = vmatprep.mubr.bf16.mxu0 0
        %2501 = vmatmul.mubr.bf16.gmra.mrb[0].mxu0 %v1127
        %v2502 = vpop.f32.mrb[0].mxu0
        %v2503 = vadd.f32 %v2342, %v2502
        %v2504 = vpop.f32.mrb[0].mxu0
        %v2505 = vpop.f32.mrb[0].mxu0
        %v2506 = vadd.f32 %v2345, %v2505
        %v2507 = vpop.f32.mrb[0].mxu0
        %2508 = vdwg.mxu0
        %v2509 = vadd.f32 %v2383, %v2386
        %v2510 = vadd.f32 %v2509, %v2391
        %v2511 = vadd.f32 %v2510, %v2394
        %v2512 = vadd.f32 %v2511, %v2399
        %v2513 = vadd.f32 %v2512, %v2402
        %v2514 = vadd.f32 %v2513, %v2407
        %v2515 = vadd.f32 %v2514, %v2410
        %v2516 = vadd.f32 %v2515, %v2415
        %v2517 = vadd.f32 %v2516, %v2418
        %v2518 = vadd.f32 %v2517, %v2423
        %v2519 = vadd.f32 %v2518, %v2426
        %v2520 = vadd.f32 %v2519, %v2431
        %v2521 = vadd.f32 %v2520, %v2434
        %v2522 = vadd.f32 %v2521, %v2439
        %v2523 = vadd.f32 %v2522, %v2442
        %v2524 = vadd.f32 %v2523, %v2447
        %v2525 = vadd.f32 %v2524, %v2450
        %v2526 = vadd.f32 %v2525, %v2455
        %v2527 = vadd.f32 %v2526, %v2458
        %v2528 = vadd.f32 %v2527, %v2463
        %v2529 = vadd.f32 %v2528, %v2466
        %v2530 = vadd.f32 %v2529, %v2471
        %v2531 = vadd.f32 %v2530, %v2474
        %v2532 = vadd.f32 %v2531, %v2479
        %v2533 = vadd.f32 %v2532, %v2482
        %v2534 = vadd.f32 %v2533, %v2487
        %v2535 = vadd.f32 %v2534, %v2490
        %v2536 = vadd.f32 %v2535, %v2495
        %v2537 = vadd.f32 %v2536, %v2498
        %v2538 = vadd.f32 %v2537, %v2503
        %v2539 = vadd.f32 %v2538, %v2506
        %v2540 = vrot.slane %v2539, 4
        %v2541 = vadd.f32 %v2539, %v2540
        %v2542 = vrot.slane %v2541, 2
        %v2543 = vadd.f32 %v2541, %v2542
        %v2544 = vrot.slane %v2543, 1
        %v2545 = vadd.f32 %v2543, %v2544
        %v2546 = vmul.f32 %v2545, 0.00390625
        %v2547 = vmul.f32 %v2383, %v2383
        %v2548 = vmul.f32 %v2386, %v2386
        %v2549 = vmul.f32 %v2391, %v2391
        %v2550 = vmul.f32 %v2394, %v2394
        %v2551 = vmul.f32 %v2399, %v2399
        %v2552 = vmul.f32 %v2402, %v2402
        %v2553 = vmul.f32 %v2407, %v2407
        %v2554 = vmul.f32 %v2410, %v2410
        %v2555 = vmul.f32 %v2415, %v2415
        %v2556 = vmul.f32 %v2418, %v2418
        %v2557 = vmul.f32 %v2423, %v2423
        %v2558 = vmul.f32 %v2426, %v2426
        %v2559 = vmul.f32 %v2431, %v2431
        %v2560 = vmul.f32 %v2434, %v2434
        %v2561 = vmul.f32 %v2439, %v2439
        %v2562 = vmul.f32 %v2442, %v2442
        %v2563 = vmul.f32 %v2447, %v2447
        %v2564 = vmul.f32 %v2450, %v2450
        %v2565 = vmul.f32 %v2455, %v2455
        %v2566 = vmul.f32 %v2458, %v2458
        %v2567 = vmul.f32 %v2463, %v2463
        %v2568 = vmul.f32 %v2466, %v2466
        %v2569 = vmul.f32 %v2471, %v2471
        %v2570 = vmul.f32 %v2474, %v2474
        %v2571 = vmul.f32 %v2479, %v2479
        %v2572 = vmul.f32 %v2482, %v2482
        %v2573 = vmul.f32 %v2487, %v2487
        %v2574 = vmul.f32 %v2490, %v2490
        %v2575 = vmul.f32 %v2495, %v2495
        %v2576 = vmul.f32 %v2498, %v2498
        %v2577 = vmul.f32 %v2503, %v2503
        %v2578 = vmul.f32 %v2506, %v2506
        %v2579 = vadd.f32 %v2547, %v2548
        %v2580 = vadd.f32 %v2579, %v2549
        %v2581 = vadd.f32 %v2580, %v2550
        %v2582 = vadd.f32 %v2581, %v2551
        %v2583 = vadd.f32 %v2582, %v2552
        %v2584 = vadd.f32 %v2583, %v2553
        %v2585 = vadd.f32 %v2584, %v2554
        %v2586 = vadd.f32 %v2585, %v2555
        %v2587 = vadd.f32 %v2586, %v2556
        %v2588 = vadd.f32 %v2587, %v2557
        %v2589 = vadd.f32 %v2588, %v2558
        %v2590 = vadd.f32 %v2589, %v2559
        %v2591 = vadd.f32 %v2590, %v2560
        %v2592 = vadd.f32 %v2591, %v2561
        %v2593 = vadd.f32 %v2592, %v2562
        %v2594 = vadd.f32 %v2593, %v2563
        %v2595 = vadd.f32 %v2594, %v2564
        %v2596 = vadd.f32 %v2595, %v2565
        %v2597 = vadd.f32 %v2596, %v2566
        %v2598 = vadd.f32 %v2597, %v2567
        %v2599 = vadd.f32 %v2598, %v2568
        %v2600 = vadd.f32 %v2599, %v2569
        %v2601 = vadd.f32 %v2600, %v2570
        %v2602 = vadd.f32 %v2601, %v2571
        %v2603 = vadd.f32 %v2602, %v2572
        %v2604 = vadd.f32 %v2603, %v2573
        %v2605 = vadd.f32 %v2604, %v2574
        %v2606 = vadd.f32 %v2605, %v2575
        %v2607 = vadd.f32 %v2606, %v2576
        %v2608 = vadd.f32 %v2607, %v2577
        %v2609 = vadd.f32 %v2608, %v2578
        %v2610 = vrot.slane %v2609, 4
        %v2611 = vadd.f32 %v2609, %v2610
        %v2612 = vrot.slane %v2611, 2
        %v2613 = vadd.f32 %v2611, %v2612
        %v2614 = vrot.slane %v2613, 1
        %v2615 = vadd.f32 %v2613, %v2614
        %v2616 = vmul.f32 %v2615, 0.00390625
        %v2617 = vmul.f32 %v2546, %v2546
        %v2618 = vsub.f32 %v2616, %v2617
        %v2619 = vmax.f32 %v2618, 0.0
        %v2620 = vsub.f32 %v2383, %v2546
        %v2621 = vsub.f32 %v2386, %v2546
        %v2622 = vsub.f32 %v2391, %v2546
        %v2623 = vsub.f32 %v2394, %v2546
        %v2624 = vsub.f32 %v2399, %v2546
        %v2625 = vsub.f32 %v2402, %v2546
        %v2626 = vsub.f32 %v2407, %v2546
        %v2627 = vsub.f32 %v2410, %v2546
        %v2628 = vsub.f32 %v2415, %v2546
        %v2629 = vsub.f32 %v2418, %v2546
        %v2630 = vsub.f32 %v2423, %v2546
        %v2631 = vsub.f32 %v2426, %v2546
        %v2632 = vsub.f32 %v2431, %v2546
        %v2633 = vsub.f32 %v2434, %v2546
        %v2634 = vsub.f32 %v2439, %v2546
        %v2635 = vsub.f32 %v2442, %v2546
        %v2636 = vsub.f32 %v2447, %v2546
        %v2637 = vsub.f32 %v2450, %v2546
        %v2638 = vsub.f32 %v2455, %v2546
        %v2639 = vsub.f32 %v2458, %v2546
        %v2640 = vsub.f32 %v2463, %v2546
        %v2641 = vsub.f32 %v2466, %v2546
        %v2642 = vsub.f32 %v2471, %v2546
        %v2643 = vsub.f32 %v2474, %v2546
        %v2644 = vsub.f32 %v2479, %v2546
        %v2645 = vsub.f32 %v2482, %v2546
        %v2646 = vsub.f32 %v2487, %v2546
        %v2647 = vsub.f32 %v2490, %v2546
        %v2648 = vsub.f32 %v2495, %v2546
        %v2649 = vsub.f32 %v2498, %v2546
        %v2650 = vsub.f32 %v2503, %v2546
        %v2651 = vsub.f32 %v2506, %v2546
        %v2652 = vadd.f32 %v2619, 1e-05
        %v2653 = vrsqrt.pop %v2652
        %v2654 = vmul.f32 %v2620, %v2653
        %v2655 = vmul.f32 %v2621, %v2653
        %v2656 = vmul.f32 %v2622, %v2653
        %v2657 = vmul.f32 %v2623, %v2653
        %v2658 = vmul.f32 %v2624, %v2653
        %v2659 = vmul.f32 %v2625, %v2653
        %v2660 = vmul.f32 %v2626, %v2653
        %v2661 = vmul.f32 %v2627, %v2653
        %v2662 = vmul.f32 %v2628, %v2653
        %v2663 = vmul.f32 %v2629, %v2653
        %v2664 = vmul.f32 %v2630, %v2653
        %v2665 = vmul.f32 %v2631, %v2653
        %v2666 = vmul.f32 %v2632, %v2653
        %v2667 = vmul.f32 %v2633, %v2653
        %v2668 = vmul.f32 %v2634, %v2653
        %v2669 = vmul.f32 %v2635, %v2653
        %v2670 = vmul.f32 %v2636, %v2653
        %v2671 = vmul.f32 %v2637, %v2653
        %v2672 = vmul.f32 %v2638, %v2653
        %v2673 = vmul.f32 %v2639, %v2653
        %v2674 = vmul.f32 %v2640, %v2653
        %v2675 = vmul.f32 %v2641, %v2653
        %v2676 = vmul.f32 %v2642, %v2653
        %v2677 = vmul.f32 %v2643, %v2653
        %v2678 = vmul.f32 %v2644, %v2653
        %v2679 = vmul.f32 %v2645, %v2653
        %v2680 = vmul.f32 %v2646, %v2653
        %v2681 = vmul.f32 %v2647, %v2653
        %v2682 = vmul.f32 %v2648, %v2653
        %v2683 = vmul.f32 %v2649, %v2653
        %v2684 = vmul.f32 %v2650, %v2653
        %v2685 = vmul.f32 %v2651, %v2653
        %v2686 = vld [vmem:[%s230] sm:$0xff]
        %v2687 = vld [vmem:[%s230 + $0x8] sm:$0xff]
        %v2688 = vld [vmem:[%s230 + $0x10] sm:$0xff]
        %v2689 = vld [vmem:[%s230 + $0x18] sm:$0xff]
        %v2690 = vld [vmem:[%s230 + $0x20] sm:$0xff]
        %v2691 = vld [vmem:[%s230 + $0x28] sm:$0xff]
        %v2692 = vld [vmem:[%s230 + $0x30] sm:$0xff]
        %v2693 = vld [vmem:[%s230 + $0x38] sm:$0xff]
        %v2694 = vld [vmem:[%s230 + $0x40] sm:$0xff]
        %v2695 = vld [vmem:[%s230 + $0x48] sm:$0xff]
        %v2696 = vld [vmem:[%s230 + $0x50] sm:$0xff]
        %v2697 = vld [vmem:[%s230 + $0x58] sm:$0xff]
        %v2698 = vld [vmem:[%s230 + $0x60] sm:$0xff]
        %v2699 = vld [vmem:[%s230 + $0x68] sm:$0xff]
        %v2700 = vld [vmem:[%s230 + $0x70] sm:$0xff]
        %v2701 = vld [vmem:[%s230 + $0x78] sm:$0xff]
        %v2702 = vld [vmem:[%s230 + $0x80] sm:$0xff]
        %v2703 = vld [vmem:[%s230 + $0x88] sm:$0xff]
        %v2704 = vld [vmem:[%s230 + $0x90] sm:$0xff]
        %v2705 = vld [vmem:[%s230 + $0x98] sm:$0xff]
        %v2706 = vld [vmem:[%s230 + $0xa0] sm:$0xff]
        %v2707 = vld [vmem:[%s230 + $0xa8] sm:$0xff]
        %v2708 = vld [vmem:[%s230 + $0xb0] sm:$0xff]
        %v2709 = vld [vmem:[%s230 + $0xb8] sm:$0xff]
        %v2710 = vld [vmem:[%s230 + $0xc0] sm:$0xff]
        %v2711 = vld [vmem:[%s230 + $0xc8] sm:$0xff]
        %v2712 = vld [vmem:[%s230 + $0xd0] sm:$0xff]
        %v2713 = vld [vmem:[%s230 + $0xd8] sm:$0xff]
        %v2714 = vld [vmem:[%s230 + $0xe0] sm:$0xff]
        %v2715 = vld [vmem:[%s230 + $0xe8] sm:$0xff]
        %v2716 = vld [vmem:[%s230 + $0xf0] sm:$0xff]
        %v2717 = vld [vmem:[%s230 + $0xf8] sm:$0xff]
        %v2718 = vadd.f32 %v2654, %v2686
        %v2719 = vadd.f32 %v2655, %v2687
        %v2720 = vadd.f32 %v2656, %v2688
        %v2721 = vadd.f32 %v2657, %v2689
        %v2722 = vadd.f32 %v2658, %v2690
        %v2723 = vadd.f32 %v2659, %v2691
        %v2724 = vadd.f32 %v2660, %v2692
        %v2725 = vadd.f32 %v2661, %v2693
        %v2726 = vadd.f32 %v2662, %v2694
        %v2727 = vadd.f32 %v2663, %v2695
        %v2728 = vadd.f32 %v2664, %v2696
        %v2729 = vadd.f32 %v2665, %v2697
        %v2730 = vadd.f32 %v2666, %v2698
        %v2731 = vadd.f32 %v2667, %v2699
        %v2732 = vadd.f32 %v2668, %v2700
        %v2733 = vadd.f32 %v2669, %v2701
        %v2734 = vadd.f32 %v2670, %v2702
        %v2735 = vadd.f32 %v2671, %v2703
        %v2736 = vadd.f32 %v2672, %v2704
        %v2737 = vadd.f32 %v2673, %v2705
        %v2738 = vadd.f32 %v2674, %v2706
        %v2739 = vadd.f32 %v2675, %v2707
        %v2740 = vadd.f32 %v2676, %v2708
        %v2741 = vadd.f32 %v2677, %v2709
        %v2742 = vadd.f32 %v2678, %v2710
        %v2743 = vadd.f32 %v2679, %v2711
        %v2744 = vadd.f32 %v2680, %v2712
        %v2745 = vadd.f32 %v2681, %v2713
        %v2746 = vadd.f32 %v2682, %v2714
        %v2747 = vadd.f32 %v2683, %v2715
        %v2748 = vadd.f32 %v2684, %v2716
        %v2749 = vadd.f32 %v2685, %v2717
        %2750 = vst [vmem:[%s213] sm:$0xff] %v2718
        %2751 = vst [vmem:[%s213 + $0x8] sm:$0xff] %v2719
        %2752 = vst [vmem:[%s213 + $0x10] sm:$0xff] %v2720
        %2753 = vst [vmem:[%s213 + $0x18] sm:$0xff] %v2721
        %2754 = vst [vmem:[%s213 + $0x20] sm:$0xff] %v2722
        %2755 = vst [vmem:[%s213 + $0x28] sm:$0xff] %v2723
        %2756 = vst [vmem:[%s213 + $0x30] sm:$0xff] %v2724
        %2757 = vst [vmem:[%s213 + $0x38] sm:$0xff] %v2725
        %2758 = vst [vmem:[%s213 + $0x40] sm:$0xff] %v2726
        %2759 = vst [vmem:[%s213 + $0x48] sm:$0xff] %v2727
        %2760 = vst [vmem:[%s213 + $0x50] sm:$0xff] %v2728
        %2761 = vst [vmem:[%s213 + $0x58] sm:$0xff] %v2729
        %2762 = vst [vmem:[%s213 + $0x60] sm:$0xff] %v2730
        %2763 = vst [vmem:[%s213 + $0x68] sm:$0xff] %v2731
        %2764 = vst [vmem:[%s213 + $0x70] sm:$0xff] %v2732
        %2765 = vst [vmem:[%s213 + $0x78] sm:$0xff] %v2733
        %2766 = vst [vmem:[%s213 + $0x80] sm:$0xff] %v2734
        %2767 = vst [vmem:[%s213 + $0x88] sm:$0xff] %v2735
        %2768 = vst [vmem:[%s213 + $0x90] sm:$0xff] %v2736
        %2769 = vst [vmem:[%s213 + $0x98] sm:$0xff] %v2737
        %2770 = vst [vmem:[%s213 + $0xa0] sm:$0xff] %v2738
        %2771 = vst [vmem:[%s213 + $0xa8] sm:$0xff] %v2739
        %2772 = vst [vmem:[%s213 + $0xb0] sm:$0xff] %v2740
        %2773 = vst [vmem:[%s213 + $0xb8] sm:$0xff] %v2741
        %2774 = vst [vmem:[%s213 + $0xc0] sm:$0xff] %v2742
        %2775 = vst [vmem:[%s213 + $0xc8] sm:$0xff] %v2743
        %2776 = vst [vmem:[%s213 + $0xd0] sm:$0xff] %v2744
        %2777 = vst [vmem:[%s213 + $0xd8] sm:$0xff] %v2745
        %2778 = vst [vmem:[%s213 + $0xe0] sm:$0xff] %v2746
        %2779 = vst [vmem:[%s213 + $0xe8] sm:$0xff] %v2747
        %2780 = vst [vmem:[%s213 + $0xf0] sm:$0xff] %v2748
        %2781 = vst [vmem:[%s213 + $0xf8] sm:$0xff] %v2749
        %s2782 = sand.u32 %s119, 1
        %s2783 = scalar_lea.sflag [#allocation3], %s2782
        %s2784 = sand.u32 %s119, 1
        %s2785 = smul.addr %s2784, 256
        %s2786 = scalar_lea.vmem [#allocation2], %s2785
        // Predicated region
        $region33: #{residual_block.3} parent=31 // pred_check
          %p2787 = pneg %p129
        $region34: #{residual_block.3} parent=31 // pred_check_branch
          %2789 = sbr.rel (%p2787) target = $region36
        $region35: #{residual_block.3} parent=31 // pred_region
          %s2791 = ssub.s32 4096, 4096
          %2792 = vsyncadd %s2783, %s2791
          %s2793 = smul.addr %s21, 32
          %s2794 = sadd.s32 %s22, %s2793
          %s2795 = smul.addr %s2794, 128
          %s2796 = scalar_lea.hbm %s3, %s2795
          %s2797 = sshll.u32 %s2786, 4
          %s2798 = int_to_ptr.vmem [resolvable:$true] %s2797
          %2803 = dma.vmem_to_hbm [thread:$0]  %s2798, 4096, %s2796, %s2783, 128, 128, 8
        $region36: #{residual_block.3} parent=31 // pred_fallthru
          _
      $region32: #{residual_block.3} parent=5 // pred_fallthru
        _
      %p2804 = scmp.le.s32.totalorder 2, %s12
      // Predicated region
      $region37: #{residual_block.3} parent=5 // pred_check
        %p2805 = pneg %p2804
      $region38: #{residual_block.3} parent=5 // pred_check_branch
        %2807 = sbr.rel (%p2805) target = $region40
      $region39: #{residual_block.3} parent=5 // pred_region
        %s2808 = ssub.s32 %s12, 2
        // Predicated region
        $region41: #{residual_block.3} parent=39 // pred_check
          %p2809 = pneg %p135
        $region42: #{residual_block.3} parent=39 // pred_check_branch
          %2811 = sbr.rel (%p2809) target = $region44
        $region43: #{residual_block.3} parent=39 // pred_region
          %s2812 = sand.u32 %s120, 1
          %s2813 = scalar_lea.sflag [#allocation3], %s2812
          %s2814 = sand.u32 %s120, 1
          %s2815 = smul.addr %s2814, 256
          %s2816 = scalar_lea.vmem [#allocation2], %s2815
          %2817 = dma.done %s2813, 4096
        $region44: #{residual_block.3} parent=39 // pred_fallthru
          _
      $region40: #{residual_block.3} parent=5 // pred_fallthru
        _
    $region6: #{residual_block.3} parent=1 // loop_footer
      %s16 = sadd.s32 1, %s12
    $region7: #{residual_block.3} parent=1 // loop_footer_branch
      %11 = sbr.rel target = $region3
    $region8: #{residual_block.3} parent=1 // loop_exit
      _
    %2818 = vsyncpa [#allocation3], 1
    %s2819 = scalar_lea.sflag [#allocation3], 1
    %2820 = vsyncpa %s2819, 1

</llo_original>
